<compile_context>
chip_gen: v7x
topology: tpu7x:2x2x1
jax: 0.10.0
libtpu: 0.0.40
codegen_flags: <defaults>
</compile_context>

<pallas_src>
import functools
import math

import jax
import jax.numpy as jnp
from jax.experimental import pallas as pl
from jax.experimental.pallas import tpu as pltpu


# ------------------------------------------------------------------
# Fused Pallas kernel: stacked BiLSTM encoder + MLP decoder
# ------------------------------------------------------------------

def _lstm_cell(gates, c_prev, H):
    """One LSTM cell update from pre-activation gates [Bp, 4H] (i,f,g,o)."""
    sig = jax.nn.sigmoid(gates)      # full-width EUP pass -> i, f, o
    tnh = jnp.tanh(gates)            # full-width EUP pass -> g
    i_g = sig[:, 0 * H:1 * H]
    f_g = sig[:, 1 * H:2 * H]
    g_g = tnh[:, 2 * H:3 * H]
    o_g = sig[:, 3 * H:4 * H]
    c = f_g * c_prev + i_g * g_g
    h = o_g * jnp.tanh(c)
    return h, c


def _make_fused_kernel(T, Bp, H, num_layers):
    N = T * Bp           # time-major rows (t, b_padded)

    def kernel(*refs):
        n_lyr = 3 * num_layers
        x_ref = refs[0]                                   # [N, hidden] bf16
        lyr = refs[1:1 + n_lyr]                           # (wih, whh, b) per layer
        w1_ref, b1_ref, w2_ref, b2_ref = refs[1 + n_lyr:5 + n_lyr]
        o_ref = refs[5 + n_lyr]                           # [N, mel] f32
        slab_ref = refs[6 + n_lyr]                        # [N, 2H] f32 scratch

        for layer in range(num_layers):
            wih_ref, whh_ref, b_ref = lyr[3 * layer:3 * layer + 3]

            # ---- Batched input projection (off the serial path) ----
            # ONE [N, D] x [D, 4H] MXU matmul per direction, bias added once.
            if layer == 0:
                x_all = x_ref[...]                                    # bf16
            else:
                x_all = slab_ref[...].astype(jnp.bfloat16)            # prev concat(fwd,bwd)
            g_f = jnp.dot(x_all, wih_ref[0],
                          preferred_element_type=jnp.float32) + b_ref[0]
            g_b = jnp.dot(x_all, wih_ref[1],
                          preferred_element_type=jnp.float32) + b_ref[1]

            whh_f = whh_ref[0]                                        # [H, 4H] bf16
            whh_b = whh_ref[1]

            # ---- Interleaved fwd/bwd recurrence: single time loop ----
            h_f = jnp.zeros((Bp, H), jnp.float32)
            c_f = jnp.zeros((Bp, H), jnp.float32)
            h_b = jnp.zeros((Bp, H), jnp.float32)
            c_b = jnp.zeros((Bp, H), jnp.float32)
            for step in range(T):
                tf = step
                tb = T - 1 - step
                gates_f = g_f[tf * Bp:(tf + 1) * Bp] + jnp.dot(
                    h_f.astype(jnp.bfloat16), whh_f,
                    preferred_element_type=jnp.float32)
                gates_b = g_b[tb * Bp:(tb + 1) * Bp] + jnp.dot(
                    h_b.astype(jnp.bfloat16), whh_b,
                    preferred_element_type=jnp.float32)
                h_f, c_f = _lstm_cell(gates_f, c_f, H)
                h_b, c_b = _lstm_cell(gates_b, c_b, H)
                # Store concat(fwd, bwd) layout directly into the slab.
                slab_ref[tf * Bp:(tf + 1) * Bp, 0:H] = h_f
                slab_ref[tb * Bp:(tb + 1) * Bp, H:2 * H] = h_b

        # ---- Decoder, batched across all T*Bp rows: 2 MXU matmuls total ----
        hdec = slab_ref[...].astype(jnp.bfloat16)                     # [N, 2H]
        hid = jnp.dot(hdec, w1_ref[...],
                      preferred_element_type=jnp.float32) + b1_ref[...]
        hid = jnp.maximum(hid, 0.0).astype(jnp.bfloat16)              # ReLU
        o_ref[...] = (jnp.dot(hid, w2_ref[...],
                              preferred_element_type=jnp.float32)
                      + b2_ref[...]).astype(o_ref.dtype)

    return kernel


# ------------------------------------------------------------------
# Wrapper (plain-JAX glue: pad + one transpose in, one transpose out)
# ------------------------------------------------------------------

_VMEM = pl.BlockSpec(memory_space=pltpu.MemorySpace.VMEM)


def twi_tts_forward(embeddings, lstm_params, dec_params):
    """embeddings: [B, T, hidden] (AfroLM last_hidden_state stand-in)."""
    B, T, F = embeddings.shape
    H = lstm_params[0][1].shape[1]          # whh: [2, H, 4H]
    M = dec_params[2].shape[1]              # w2:  [Dd, mel]
    Bp = ((B + 7) // 8) * 8                 # pad batch to the 8-row sublane tile

    # Layout fix-up at the boundary: batch-first -> time-major rows (t, b),
    # batch padded to Bp, activations cast to bf16 for the MXU.  Everything
    # else happens inside one fused Pallas kernel.
    x = jnp.transpose(embeddings, (1, 0, 2))                   # [T, B, F]
    x = jnp.pad(x, ((0, 0), (0, Bp - B), (0, 0)))              # [T, Bp, F]
    x = x.reshape(T * Bp, F).astype(jnp.bfloat16)

    flat_params = []
    for (wih, whh, b) in lstm_params:
        flat_params += [wih, whh, b]
    flat_params += list(dec_params)

    kernel = _make_fused_kernel(T, Bp, H, len(lstm_params))
    out_tm = pl.pallas_call(
        kernel,
        out_shape=jax.ShapeDtypeStruct((T * Bp, M), jnp.float32),
        in_specs=[_VMEM] * (1 + len(flat_params)),
        out_specs=_VMEM,
        scratch_shapes=[pltpu.VMEM((T * Bp, 2 * H), jnp.float32)],
        compiler_params=pltpu.CompilerParams(
            vmem_limit_bytes=32 * 1024 * 1024),
    )(x, *flat_params)

    out = out_tm.reshape(T, Bp, M)[:, :B, :]                   # drop batch padding
    return jnp.transpose(out, (1, 0, 2))                       # [B, T, mel_bins]


# ------------------------------------------------------------------
# Deterministic parameter construction (PyTorch-style uniform init),
# laid out directly in the kernel's direction-stacked format.
# ------------------------------------------------------------------

def make_params(key, hidden_size, encoder_dim, encoder_layers, decoder_dim, mel_bins):
    H = encoder_dim
    G = 4 * H

    def uniform(key, shape, bound, dtype=jnp.float32):
        return jax.random.uniform(key, shape, jnp.float32, -bound, bound).astype(dtype)

    keys = iter(jax.random.split(key, 4 * encoder_layers + 4))
    k_lstm = 1.0 / math.sqrt(H)

    lstm_params = []
    in_dim = hidden_size
    for _ in range(encoder_layers):
        # weight_ih^T / weight_hh^T, stacked over direction; bias pre-summed.
        wih = uniform(next(keys), (2, in_dim, G), k_lstm, jnp.bfloat16)
        whh = uniform(next(keys), (2, H, G), k_lstm, jnp.bfloat16)
        b_ih = uniform(next(keys), (2, 1, G), k_lstm)
        b_hh = uniform(next(keys), (2, 1, G), k_lstm)
        lstm_params.append((wih, whh, b_ih + b_hh))
        in_dim = 2 * H                      # next layer input: concat(fwd, bwd)

    k1 = 1.0 / math.sqrt(2 * H)
    k2 = 1.0 / math.sqrt(decoder_dim)
    w1 = uniform(next(keys), (2 * H, decoder_dim), k1, jnp.bfloat16)
    b1 = uniform(next(keys), (1, decoder_dim), k1)
    w2 = uniform(next(keys), (decoder_dim, mel_bins), k2, jnp.bfloat16)
    b2 = uniform(next(keys), (1, mel_bins), k2)
    return lstm_params, (w1, b1, w2, b2)


# ------------------------------------------------------------------
# Pure-JAX f32 reference (same weights) for a tolerance check
# ------------------------------------------------------------------

def reference_forward(embeddings, lstm_params, dec_params):
    B, T, _ = embeddings.shape
    x = embeddings.astype(jnp.float32)                  # [B, T, F]
    for (wih, whh, b) in lstm_params:
        H = whh.shape[1]
        outs = []
        for d in range(2):
            w_i = wih[d].astype(jnp.float32)
            w_h = whh[d].astype(jnp.float32)
            bias = b[d].astype(jnp.float32)
            h = jnp.zeros((B, H), jnp.float32)
            c = jnp.zeros((B, H), jnp.float32)
            hs = [None] * T
            steps = range(T) if d == 0 else range(T - 1, -1, -1)
            for t in steps:
                gates = x[:, t, :] @ w_i + h @ w_h + bias
                i_g = jax.nn.sigmoid(gates[:, 0 * H:1 * H])
                f_g = jax.nn.sigmoid(gates[:, 1 * H:2 * H])
                g_g = jnp.tanh(gates[:, 2 * H:3 * H])
                o_g = jax.nn.sigmoid(gates[:, 3 * H:4 * H])
                c = f_g * c + i_g * g_g
                h = o_g * jnp.tanh(c)
                hs[t] = h
            outs.append(jnp.stack(hs, axis=1))          # [B, T, H]
        x = jnp.concatenate(outs, axis=-1)              # [B, T, 2H]
    w1, b1, w2, b2 = dec_params
    hid = jnp.maximum(x @ w1.astype(jnp.float32) + b1, 0.0)
    return hid @ w2.astype(jnp.float32) + b2


# ------------------------------------------------------------------
# Main
# ------------------------------------------------------------------

if __name__ == "__main__":
    config = dict(encoder_dim=32, encoder_layers=2, decoder_dim=32, mel_bins=16)
    hidden_size = 32   # stand-in for afrolm.config.hidden_size
    B, T = 2, 8

    root = jax.random.PRNGKey(0)
    k_emb, k_par = jax.random.split(root)

    # Stand-in for afrolm(**tokenizer(text)).last_hidden_state
    embeddings = jax.random.normal(k_emb, (B, T, hidden_size), jnp.float32)

    lstm_params, dec_params = make_params(
        k_par, hidden_size, config["encoder_dim"], config["encoder_layers"],
        config["decoder_dim"], config["mel_bins"],
    )

    mel = jax.jit(functools.partial(
        twi_tts_forward, lstm_params=lstm_params, dec_params=dec_params
    ))(embeddings)
    jax.block_until_ready(mel)

    assert mel.shape == (B, T, config["mel_bins"]), mel.shape
    assert mel.dtype == jnp.float32
    assert bool(jnp.all(jnp.isfinite(mel)))

    # Tolerance check vs a pure-JAX f32 reference (expected bf16 MXU drift only).
    ref = jax.jit(functools.partial(
        reference_forward, lstm_params=lstm_params, dec_params=dec_params
    ))(embeddings)
    jax.block_until_ready(ref)
    max_err = float(jnp.max(jnp.abs(mel - ref)))
    assert max_err < 5e-2, f"max abs error vs reference: {max_err}"

    print("KERNEL_OK")
</pallas_src>

<mosaic_0001>
module attributes {stable_mosaic.version = 11 : i64} {
  func.func @kernel(%arg0: memref<64x32xbf16, #tpu.memory_space<vmem>>, %arg1: memref<2x32x128xbf16, #tpu.memory_space<vmem>>, %arg2: memref<2x32x128xbf16, #tpu.memory_space<vmem>>, %arg3: memref<2x1x128xf32, #tpu.memory_space<vmem>>, %arg4: memref<2x64x128xbf16, #tpu.memory_space<vmem>>, %arg5: memref<2x32x128xbf16, #tpu.memory_space<vmem>>, %arg6: memref<2x1x128xf32, #tpu.memory_space<vmem>>, %arg7: memref<64x32xbf16, #tpu.memory_space<vmem>>, %arg8: memref<1x32xf32, #tpu.memory_space<vmem>>, %arg9: memref<32x16xbf16, #tpu.memory_space<vmem>>, %arg10: memref<1x16xf32, #tpu.memory_space<vmem>>, %arg11: memref<64x16xf32, #tpu.memory_space<vmem>>, %arg12: memref<64x64xf32, #tpu.memory_space<vmem>>) attributes {dimension_semantics = [], scalar_prefetch = 0 : i64, scratch_operands = 1 : i64, tpu.core_type = #tpu.core_type<tc>} {
    %c0 = arith.constant 0 : index
    %c0_0 = arith.constant 0 : index
    %0 = vector.load %arg0[%c0, %c0_0] : memref<64x32xbf16, #tpu.memory_space<vmem>>, vector<64x32xbf16>
    %c0_1 = arith.constant 0 : index
    %c0_2 = arith.constant 0 : index
    %c0_3 = arith.constant 0 : index
    %1 = vector.load %arg1[%c0_1, %c0_2, %c0_3] : memref<2x32x128xbf16, #tpu.memory_space<vmem>>, vector<1x32x128xbf16>
    %2 = vector.shape_cast %1 : vector<1x32x128xbf16> to vector<32x128xbf16>
    %cst = arith.constant dense<0.000000e+00> : vector<64x128xf32>
    %3 = tpu.matmul %0, %2, %cst {dimension_numbers = #tpu.dot_dimension_numbers<[1], [0], [0], [1], [0, 0, 1, 1], [], []>} : vector<64x32xbf16>, vector<32x128xbf16>, vector<64x128xf32> -> vector<64x128xf32>
    %c0_4 = arith.constant 0 : index
    %c0_5 = arith.constant 0 : index
    %c0_6 = arith.constant 0 : index
    %4 = vector.load %arg3[%c0_4, %c0_5, %c0_6] : memref<2x1x128xf32, #tpu.memory_space<vmem>>, vector<1x1x128xf32>
    %5 = vector.shape_cast %4 : vector<1x1x128xf32> to vector<1x128xf32>
    %6 = vector.broadcast %5 : vector<1x128xf32> to vector<64x128xf32>
    %7 = arith.addf %3, %6 : vector<64x128xf32>
    %c1 = arith.constant 1 : index
    %c0_7 = arith.constant 0 : index
    %c0_8 = arith.constant 0 : index
    %8 = vector.load %arg1[%c1, %c0_7, %c0_8] : memref<2x32x128xbf16, #tpu.memory_space<vmem>>, vector<1x32x128xbf16>
    %9 = vector.shape_cast %8 : vector<1x32x128xbf16> to vector<32x128xbf16>
    %cst_9 = arith.constant dense<0.000000e+00> : vector<64x128xf32>
    %10 = tpu.matmul %0, %9, %cst_9 {dimension_numbers = #tpu.dot_dimension_numbers<[1], [0], [0], [1], [0, 0, 1, 1], [], []>} : vector<64x32xbf16>, vector<32x128xbf16>, vector<64x128xf32> -> vector<64x128xf32>
    %c1_10 = arith.constant 1 : index
    %c0_11 = arith.constant 0 : index
    %c0_12 = arith.constant 0 : index
    %11 = vector.load %arg3[%c1_10, %c0_11, %c0_12] : memref<2x1x128xf32, #tpu.memory_space<vmem>>, vector<1x1x128xf32>
    %12 = vector.shape_cast %11 : vector<1x1x128xf32> to vector<1x128xf32>
    %13 = vector.broadcast %12 : vector<1x128xf32> to vector<64x128xf32>
    %14 = arith.addf %10, %13 : vector<64x128xf32>
    %c0_13 = arith.constant 0 : index
    %c0_14 = arith.constant 0 : index
    %c0_15 = arith.constant 0 : index
    %15 = vector.load %arg2[%c0_13, %c0_14, %c0_15] : memref<2x32x128xbf16, #tpu.memory_space<vmem>>, vector<1x32x128xbf16>
    %16 = vector.shape_cast %15 : vector<1x32x128xbf16> to vector<32x128xbf16>
    %c1_16 = arith.constant 1 : index
    %c0_17 = arith.constant 0 : index
    %c0_18 = arith.constant 0 : index
    %17 = vector.load %arg2[%c1_16, %c0_17, %c0_18] : memref<2x32x128xbf16, #tpu.memory_space<vmem>>, vector<1x32x128xbf16>
    %18 = vector.shape_cast %17 : vector<1x32x128xbf16> to vector<32x128xbf16>
    %cst_19 = arith.constant 0.000000e+00 : f32
    %19 = vector.broadcast %cst_19 : f32 to vector<8x32xf32>
    %cst_20 = arith.constant 0.000000e+00 : f32
    %20 = vector.broadcast %cst_20 : f32 to vector<8x32xf32>
    %cst_21 = arith.constant 0.000000e+00 : f32
    %21 = vector.broadcast %cst_21 : f32 to vector<8x32xf32>
    %cst_22 = arith.constant 0.000000e+00 : f32
    %22 = vector.broadcast %cst_22 : f32 to vector<8x32xf32>
    %23 = vector.extract_strided_slice %7 {offsets = [0, 0], sizes = [8, 128], strides = [1, 1]} : vector<64x128xf32> to vector<8x128xf32>
    %24 = arith.truncf %19 : vector<8x32xf32> to vector<8x32xbf16>
    %cst_23 = arith.constant dense<0.000000e+00> : vector<8x128xf32>
    %25 = tpu.matmul %24, %16, %cst_23 {dimension_numbers = #tpu.dot_dimension_numbers<[1], [0], [0], [1], [0, 0, 1, 1], [], []>} : vector<8x32xbf16>, vector<32x128xbf16>, vector<8x128xf32> -> vector<8x128xf32>
    %26 = arith.addf %23, %25 : vector<8x128xf32>
    %27 = vector.extract_strided_slice %14 {offsets = [56, 0], sizes = [8, 128], strides = [1, 1]} : vector<64x128xf32> to vector<8x128xf32>
    %28 = arith.truncf %21 : vector<8x32xf32> to vector<8x32xbf16>
    %cst_24 = arith.constant dense<0.000000e+00> : vector<8x128xf32>
    %29 = tpu.matmul %28, %18, %cst_24 {dimension_numbers = #tpu.dot_dimension_numbers<[1], [0], [0], [1], [0, 0, 1, 1], [], []>} : vector<8x32xbf16>, vector<32x128xbf16>, vector<8x128xf32> -> vector<8x128xf32>
    %30 = arith.addf %27, %29 : vector<8x128xf32>
    %31 = arith.negf %26 : vector<8x128xf32>
    %32 = math.exp %31 : vector<8x128xf32>
    %cst_25 = arith.constant 1.000000e+00 : f32
    %33 = vector.broadcast %cst_25 : f32 to vector<8x128xf32>
    %34 = arith.addf %33, %32 : vector<8x128xf32>
    %35 = arith.divf %33, %34 : vector<8x128xf32>
    %36 = math.tanh %26 : vector<8x128xf32>
    %37 = vector.extract_strided_slice %35 {offsets = [0, 0], sizes = [8, 32], strides = [1, 1]} : vector<8x128xf32> to vector<8x32xf32>
    %38 = vector.extract_strided_slice %35 {offsets = [0, 32], sizes = [8, 32], strides = [1, 1]} : vector<8x128xf32> to vector<8x32xf32>
    %39 = vector.extract_strided_slice %36 {offsets = [0, 64], sizes = [8, 32], strides = [1, 1]} : vector<8x128xf32> to vector<8x32xf32>
    %40 = vector.extract_strided_slice %35 {offsets = [0, 96], sizes = [8, 32], strides = [1, 1]} : vector<8x128xf32> to vector<8x32xf32>
    %41 = arith.mulf %38, %20 : vector<8x32xf32>
    %42 = arith.mulf %37, %39 : vector<8x32xf32>
    %43 = arith.addf %41, %42 : vector<8x32xf32>
    %44 = math.tanh %43 : vector<8x32xf32>
    %45 = arith.mulf %40, %44 : vector<8x32xf32>
    %46 = arith.negf %30 : vector<8x128xf32>
    %47 = math.exp %46 : vector<8x128xf32>
    %cst_26 = arith.constant 1.000000e+00 : f32
    %48 = vector.broadcast %cst_26 : f32 to vector<8x128xf32>
    %49 = arith.addf %48, %47 : vector<8x128xf32>
    %50 = arith.divf %48, %49 : vector<8x128xf32>
    %51 = math.tanh %30 : vector<8x128xf32>
    %52 = vector.extract_strided_slice %50 {offsets = [0, 0], sizes = [8, 32], strides = [1, 1]} : vector<8x128xf32> to vector<8x32xf32>
    %53 = vector.extract_strided_slice %50 {offsets = [0, 32], sizes = [8, 32], strides = [1, 1]} : vector<8x128xf32> to vector<8x32xf32>
    %54 = vector.extract_strided_slice %51 {offsets = [0, 64], sizes = [8, 32], strides = [1, 1]} : vector<8x128xf32> to vector<8x32xf32>
    %55 = vector.extract_strided_slice %50 {offsets = [0, 96], sizes = [8, 32], strides = [1, 1]} : vector<8x128xf32> to vector<8x32xf32>
    %56 = arith.mulf %53, %22 : vector<8x32xf32>
    %57 = arith.mulf %52, %54 : vector<8x32xf32>
    %58 = arith.addf %56, %57 : vector<8x32xf32>
    %59 = math.tanh %58 : vector<8x32xf32>
    %60 = arith.mulf %55, %59 : vector<8x32xf32>
    %c0_27 = arith.constant 0 : index
    %c0_28 = arith.constant 0 : index
    %61 = vector.load %arg12[%c0_27, %c0_28] : memref<64x64xf32, #tpu.memory_space<vmem>>, vector<8x32xf32>
    tpu.vector_store %arg12[%c0_27, %c0_28], %45 {strides = array<i32>} : memref<64x64xf32, #tpu.memory_space<vmem>>, vector<8x32xf32>,
    %c56 = arith.constant 56 : index
    %c32 = arith.constant 32 : index
    %62 = vector.load %arg12[%c56, %c32] : memref<64x64xf32, #tpu.memory_space<vmem>>, vector<8x32xf32>
    tpu.vector_store %arg12[%c56, %c32], %60 {strides = array<i32>} : memref<64x64xf32, #tpu.memory_space<vmem>>, vector<8x32xf32>,
    %63 = vector.extract_strided_slice %7 {offsets = [8, 0], sizes = [8, 128], strides = [1, 1]} : vector<64x128xf32> to vector<8x128xf32>
    %64 = arith.truncf %45 : vector<8x32xf32> to vector<8x32xbf16>
    %cst_29 = arith.constant dense<0.000000e+00> : vector<8x128xf32>
    %65 = tpu.matmul %64, %16, %cst_29 {dimension_numbers = #tpu.dot_dimension_numbers<[1], [0], [0], [1], [0, 0, 1, 1], [], []>} : vector<8x32xbf16>, vector<32x128xbf16>, vector<8x128xf32> -> vector<8x128xf32>
    %66 = arith.addf %63, %65 : vector<8x128xf32>
    %67 = vector.extract_strided_slice %14 {offsets = [48, 0], sizes = [8, 128], strides = [1, 1]} : vector<64x128xf32> to vector<8x128xf32>
    %68 = arith.truncf %60 : vector<8x32xf32> to vector<8x32xbf16>
    %cst_30 = arith.constant dense<0.000000e+00> : vector<8x128xf32>
    %69 = tpu.matmul %68, %18, %cst_30 {dimension_numbers = #tpu.dot_dimension_numbers<[1], [0], [0], [1], [0, 0, 1, 1], [], []>} : vector<8x32xbf16>, vector<32x128xbf16>, vector<8x128xf32> -> vector<8x128xf32>
    %70 = arith.addf %67, %69 : vector<8x128xf32>
    %71 = arith.negf %66 : vector<8x128xf32>
    %72 = math.exp %71 : vector<8x128xf32>
    %cst_31 = arith.constant 1.000000e+00 : f32
    %73 = vector.broadcast %cst_31 : f32 to vector<8x128xf32>
    %74 = arith.addf %73, %72 : vector<8x128xf32>
    %75 = arith.divf %73, %74 : vector<8x128xf32>
    %76 = math.tanh %66 : vector<8x128xf32>
    %77 = vector.extract_strided_slice %75 {offsets = [0, 0], sizes = [8, 32], strides = [1, 1]} : vector<8x128xf32> to vector<8x32xf32>
    %78 = vector.extract_strided_slice %75 {offsets = [0, 32], sizes = [8, 32], strides = [1, 1]} : vector<8x128xf32> to vector<8x32xf32>
    %79 = vector.extract_strided_slice %76 {offsets = [0, 64], sizes = [8, 32], strides = [1, 1]} : vector<8x128xf32> to vector<8x32xf32>
    %80 = vector.extract_strided_slice %75 {offsets = [0, 96], sizes = [8, 32], strides = [1, 1]} : vector<8x128xf32> to vector<8x32xf32>
    %81 = arith.mulf %78, %43 : vector<8x32xf32>
    %82 = arith.mulf %77, %79 : vector<8x32xf32>
    %83 = arith.addf %81, %82 : vector<8x32xf32>
    %84 = math.tanh %83 : vector<8x32xf32>
    %85 = arith.mulf %80, %84 : vector<8x32xf32>
    %86 = arith.negf %70 : vector<8x128xf32>
    %87 = math.exp %86 : vector<8x128xf32>
    %cst_32 = arith.constant 1.000000e+00 : f32
    %88 = vector.broadcast %cst_32 : f32 to vector<8x128xf32>
    %89 = arith.addf %88, %87 : vector<8x128xf32>
    %90 = arith.divf %88, %89 : vector<8x128xf32>
    %91 = math.tanh %70 : vector<8x128xf32>
    %92 = vector.extract_strided_slice %90 {offsets = [0, 0], sizes = [8, 32], strides = [1, 1]} : vector<8x128xf32> to vector<8x32xf32>
    %93 = vector.extract_strided_slice %90 {offsets = [0, 32], sizes = [8, 32], strides = [1, 1]} : vector<8x128xf32> to vector<8x32xf32>
    %94 = vector.extract_strided_slice %91 {offsets = [0, 64], sizes = [8, 32], strides = [1, 1]} : vector<8x128xf32> to vector<8x32xf32>
    %95 = vector.extract_strided_slice %90 {offsets = [0, 96], sizes = [8, 32], strides = [1, 1]} : vector<8x128xf32> to vector<8x32xf32>
    %96 = arith.mulf %93, %58 : vector<8x32xf32>
    %97 = arith.mulf %92, %94 : vector<8x32xf32>
    %98 = arith.addf %96, %97 : vector<8x32xf32>
    %99 = math.tanh %98 : vector<8x32xf32>
    %100 = arith.mulf %95, %99 : vector<8x32xf32>
    %c8 = arith.constant 8 : index
    %c0_33 = arith.constant 0 : index
    %101 = vector.load %arg12[%c8, %c0_33] : memref<64x64xf32, #tpu.memory_space<vmem>>, vector<8x32xf32>
    tpu.vector_store %arg12[%c8, %c0_33], %85 {strides = array<i32>} : memref<64x64xf32, #tpu.memory_space<vmem>>, vector<8x32xf32>,
    %c48 = arith.constant 48 : index
    %c32_34 = arith.constant 32 : index
    %102 = vector.load %arg12[%c48, %c32_34] : memref<64x64xf32, #tpu.memory_space<vmem>>, vector<8x32xf32>
    tpu.vector_store %arg12[%c48, %c32_34], %100 {strides = array<i32>} : memref<64x64xf32, #tpu.memory_space<vmem>>, vector<8x32xf32>,
    %103 = vector.extract_strided_slice %7 {offsets = [16, 0], sizes = [8, 128], strides = [1, 1]} : vector<64x128xf32> to vector<8x128xf32>
    %104 = arith.truncf %85 : vector<8x32xf32> to vector<8x32xbf16>
    %cst_35 = arith.constant dense<0.000000e+00> : vector<8x128xf32>
    %105 = tpu.matmul %104, %16, %cst_35 {dimension_numbers = #tpu.dot_dimension_numbers<[1], [0], [0], [1], [0, 0, 1, 1], [], []>} : vector<8x32xbf16>, vector<32x128xbf16>, vector<8x128xf32> -> vector<8x128xf32>
    %106 = arith.addf %103, %105 : vector<8x128xf32>
    %107 = vector.extract_strided_slice %14 {offsets = [40, 0], sizes = [8, 128], strides = [1, 1]} : vector<64x128xf32> to vector<8x128xf32>
    %108 = arith.truncf %100 : vector<8x32xf32> to vector<8x32xbf16>
    %cst_36 = arith.constant dense<0.000000e+00> : vector<8x128xf32>
    %109 = tpu.matmul %108, %18, %cst_36 {dimension_numbers = #tpu.dot_dimension_numbers<[1], [0], [0], [1], [0, 0, 1, 1], [], []>} : vector<8x32xbf16>, vector<32x128xbf16>, vector<8x128xf32> -> vector<8x128xf32>
    %110 = arith.addf %107, %109 : vector<8x128xf32>
    %111 = arith.negf %106 : vector<8x128xf32>
    %112 = math.exp %111 : vector<8x128xf32>
    %cst_37 = arith.constant 1.000000e+00 : f32
    %113 = vector.broadcast %cst_37 : f32 to vector<8x128xf32>
    %114 = arith.addf %113, %112 : vector<8x128xf32>
    %115 = arith.divf %113, %114 : vector<8x128xf32>
    %116 = math.tanh %106 : vector<8x128xf32>
    %117 = vector.extract_strided_slice %115 {offsets = [0, 0], sizes = [8, 32], strides = [1, 1]} : vector<8x128xf32> to vector<8x32xf32>
    %118 = vector.extract_strided_slice %115 {offsets = [0, 32], sizes = [8, 32], strides = [1, 1]} : vector<8x128xf32> to vector<8x32xf32>
    %119 = vector.extract_strided_slice %116 {offsets = [0, 64], sizes = [8, 32], strides = [1, 1]} : vector<8x128xf32> to vector<8x32xf32>
    %120 = vector.extract_strided_slice %115 {offsets = [0, 96], sizes = [8, 32], strides = [1, 1]} : vector<8x128xf32> to vector<8x32xf32>
    %121 = arith.mulf %118, %83 : vector<8x32xf32>
    %122 = arith.mulf %117, %119 : vector<8x32xf32>
    %123 = arith.addf %121, %122 : vector<8x32xf32>
    %124 = math.tanh %123 : vector<8x32xf32>
    %125 = arith.mulf %120, %124 : vector<8x32xf32>
    %126 = arith.negf %110 : vector<8x128xf32>
    %127 = math.exp %126 : vector<8x128xf32>
    %cst_38 = arith.constant 1.000000e+00 : f32
    %128 = vector.broadcast %cst_38 : f32 to vector<8x128xf32>
    %129 = arith.addf %128, %127 : vector<8x128xf32>
    %130 = arith.divf %128, %129 : vector<8x128xf32>
    %131 = math.tanh %110 : vector<8x128xf32>
    %132 = vector.extract_strided_slice %130 {offsets = [0, 0], sizes = [8, 32], strides = [1, 1]} : vector<8x128xf32> to vector<8x32xf32>
    %133 = vector.extract_strided_slice %130 {offsets = [0, 32], sizes = [8, 32], strides = [1, 1]} : vector<8x128xf32> to vector<8x32xf32>
    %134 = vector.extract_strided_slice %131 {offsets = [0, 64], sizes = [8, 32], strides = [1, 1]} : vector<8x128xf32> to vector<8x32xf32>
    %135 = vector.extract_strided_slice %130 {offsets = [0, 96], sizes = [8, 32], strides = [1, 1]} : vector<8x128xf32> to vector<8x32xf32>
    %136 = arith.mulf %133, %98 : vector<8x32xf32>
    %137 = arith.mulf %132, %134 : vector<8x32xf32>
    %138 = arith.addf %136, %137 : vector<8x32xf32>
    %139 = math.tanh %138 : vector<8x32xf32>
    %140 = arith.mulf %135, %139 : vector<8x32xf32>
    %c16 = arith.constant 16 : index
    %c0_39 = arith.constant 0 : index
    %141 = vector.load %arg12[%c16, %c0_39] : memref<64x64xf32, #tpu.memory_space<vmem>>, vector<8x32xf32>
    tpu.vector_store %arg12[%c16, %c0_39], %125 {strides = array<i32>} : memref<64x64xf32, #tpu.memory_space<vmem>>, vector<8x32xf32>,
    %c40 = arith.constant 40 : index
    %c32_40 = arith.constant 32 : index
    %142 = vector.load %arg12[%c40, %c32_40] : memref<64x64xf32, #tpu.memory_space<vmem>>, vector<8x32xf32>
    tpu.vector_store %arg12[%c40, %c32_40], %140 {strides = array<i32>} : memref<64x64xf32, #tpu.memory_space<vmem>>, vector<8x32xf32>,
    %143 = vector.extract_strided_slice %7 {offsets = [24, 0], sizes = [8, 128], strides = [1, 1]} : vector<64x128xf32> to vector<8x128xf32>
    %144 = arith.truncf %125 : vector<8x32xf32> to vector<8x32xbf16>
    %cst_41 = arith.constant dense<0.000000e+00> : vector<8x128xf32>
    %145 = tpu.matmul %144, %16, %cst_41 {dimension_numbers = #tpu.dot_dimension_numbers<[1], [0], [0], [1], [0, 0, 1, 1], [], []>} : vector<8x32xbf16>, vector<32x128xbf16>, vector<8x128xf32> -> vector<8x128xf32>
    %146 = arith.addf %143, %145 : vector<8x128xf32>
    %147 = vector.extract_strided_slice %14 {offsets = [32, 0], sizes = [8, 128], strides = [1, 1]} : vector<64x128xf32> to vector<8x128xf32>
    %148 = arith.truncf %140 : vector<8x32xf32> to vector<8x32xbf16>
    %cst_42 = arith.constant dense<0.000000e+00> : vector<8x128xf32>
    %149 = tpu.matmul %148, %18, %cst_42 {dimension_numbers = #tpu.dot_dimension_numbers<[1], [0], [0], [1], [0, 0, 1, 1], [], []>} : vector<8x32xbf16>, vector<32x128xbf16>, vector<8x128xf32> -> vector<8x128xf32>
    %150 = arith.addf %147, %149 : vector<8x128xf32>
    %151 = arith.negf %146 : vector<8x128xf32>
    %152 = math.exp %151 : vector<8x128xf32>
    %cst_43 = arith.constant 1.000000e+00 : f32
    %153 = vector.broadcast %cst_43 : f32 to vector<8x128xf32>
    %154 = arith.addf %153, %152 : vector<8x128xf32>
    %155 = arith.divf %153, %154 : vector<8x128xf32>
    %156 = math.tanh %146 : vector<8x128xf32>
    %157 = vector.extract_strided_slice %155 {offsets = [0, 0], sizes = [8, 32], strides = [1, 1]} : vector<8x128xf32> to vector<8x32xf32>
    %158 = vector.extract_strided_slice %155 {offsets = [0, 32], sizes = [8, 32], strides = [1, 1]} : vector<8x128xf32> to vector<8x32xf32>
    %159 = vector.extract_strided_slice %156 {offsets = [0, 64], sizes = [8, 32], strides = [1, 1]} : vector<8x128xf32> to vector<8x32xf32>
    %160 = vector.extract_strided_slice %155 {offsets = [0, 96], sizes = [8, 32], strides = [1, 1]} : vector<8x128xf32> to vector<8x32xf32>
    %161 = arith.mulf %158, %123 : vector<8x32xf32>
    %162 = arith.mulf %157, %159 : vector<8x32xf32>
    %163 = arith.addf %161, %162 : vector<8x32xf32>
    %164 = math.tanh %163 : vector<8x32xf32>
    %165 = arith.mulf %160, %164 : vector<8x32xf32>
    %166 = arith.negf %150 : vector<8x128xf32>
    %167 = math.exp %166 : vector<8x128xf32>
    %cst_44 = arith.constant 1.000000e+00 : f32
    %168 = vector.broadcast %cst_44 : f32 to vector<8x128xf32>
    %169 = arith.addf %168, %167 : vector<8x128xf32>
    %170 = arith.divf %168, %169 : vector<8x128xf32>
    %171 = math.tanh %150 : vector<8x128xf32>
    %172 = vector.extract_strided_slice %170 {offsets = [0, 0], sizes = [8, 32], strides = [1, 1]} : vector<8x128xf32> to vector<8x32xf32>
    %173 = vector.extract_strided_slice %170 {offsets = [0, 32], sizes = [8, 32], strides = [1, 1]} : vector<8x128xf32> to vector<8x32xf32>
    %174 = vector.extract_strided_slice %171 {offsets = [0, 64], sizes = [8, 32], strides = [1, 1]} : vector<8x128xf32> to vector<8x32xf32>
    %175 = vector.extract_strided_slice %170 {offsets = [0, 96], sizes = [8, 32], strides = [1, 1]} : vector<8x128xf32> to vector<8x32xf32>
    %176 = arith.mulf %173, %138 : vector<8x32xf32>
    %177 = arith.mulf %172, %174 : vector<8x32xf32>
    %178 = arith.addf %176, %177 : vector<8x32xf32>
    %179 = math.tanh %178 : vector<8x32xf32>
    %180 = arith.mulf %175, %179 : vector<8x32xf32>
    %c24 = arith.constant 24 : index
    %c0_45 = arith.constant 0 : index
    %181 = vector.load %arg12[%c24, %c0_45] : memref<64x64xf32, #tpu.memory_space<vmem>>, vector<8x32xf32>
    tpu.vector_store %arg12[%c24, %c0_45], %165 {strides = array<i32>} : memref<64x64xf32, #tpu.memory_space<vmem>>, vector<8x32xf32>,
    %c32_46 = arith.constant 32 : index
    %c32_47 = arith.constant 32 : index
    %182 = vector.load %arg12[%c32_46, %c32_47] : memref<64x64xf32, #tpu.memory_space<vmem>>, vector<8x32xf32>
    tpu.vector_store %arg12[%c32_46, %c32_47], %180 {strides = array<i32>} : memref<64x64xf32, #tpu.memory_space<vmem>>, vector<8x32xf32>,
    %183 = vector.extract_strided_slice %7 {offsets = [32, 0], sizes = [8, 128], strides = [1, 1]} : vector<64x128xf32> to vector<8x128xf32>
    %184 = arith.truncf %165 : vector<8x32xf32> to vector<8x32xbf16>
    %cst_48 = arith.constant dense<0.000000e+00> : vector<8x128xf32>
    %185 = tpu.matmul %184, %16, %cst_48 {dimension_numbers = #tpu.dot_dimension_numbers<[1], [0], [0], [1], [0, 0, 1, 1], [], []>} : vector<8x32xbf16>, vector<32x128xbf16>, vector<8x128xf32> -> vector<8x128xf32>
    %186 = arith.addf %183, %185 : vector<8x128xf32>
    %187 = vector.extract_strided_slice %14 {offsets = [24, 0], sizes = [8, 128], strides = [1, 1]} : vector<64x128xf32> to vector<8x128xf32>
    %188 = arith.truncf %180 : vector<8x32xf32> to vector<8x32xbf16>
    %cst_49 = arith.constant dense<0.000000e+00> : vector<8x128xf32>
    %189 = tpu.matmul %188, %18, %cst_49 {dimension_numbers = #tpu.dot_dimension_numbers<[1], [0], [0], [1], [0, 0, 1, 1], [], []>} : vector<8x32xbf16>, vector<32x128xbf16>, vector<8x128xf32> -> vector<8x128xf32>
    %190 = arith.addf %187, %189 : vector<8x128xf32>
    %191 = arith.negf %186 : vector<8x128xf32>
    %192 = math.exp %191 : vector<8x128xf32>
    %cst_50 = arith.constant 1.000000e+00 : f32
    %193 = vector.broadcast %cst_50 : f32 to vector<8x128xf32>
    %194 = arith.addf %193, %192 : vector<8x128xf32>
    %195 = arith.divf %193, %194 : vector<8x128xf32>
    %196 = math.tanh %186 : vector<8x128xf32>
    %197 = vector.extract_strided_slice %195 {offsets = [0, 0], sizes = [8, 32], strides = [1, 1]} : vector<8x128xf32> to vector<8x32xf32>
    %198 = vector.extract_strided_slice %195 {offsets = [0, 32], sizes = [8, 32], strides = [1, 1]} : vector<8x128xf32> to vector<8x32xf32>
    %199 = vector.extract_strided_slice %196 {offsets = [0, 64], sizes = [8, 32], strides = [1, 1]} : vector<8x128xf32> to vector<8x32xf32>
    %200 = vector.extract_strided_slice %195 {offsets = [0, 96], sizes = [8, 32], strides = [1, 1]} : vector<8x128xf32> to vector<8x32xf32>
    %201 = arith.mulf %198, %163 : vector<8x32xf32>
    %202 = arith.mulf %197, %199 : vector<8x32xf32>
    %203 = arith.addf %201, %202 : vector<8x32xf32>
    %204 = math.tanh %203 : vector<8x32xf32>
    %205 = arith.mulf %200, %204 : vector<8x32xf32>
    %206 = arith.negf %190 : vector<8x128xf32>
    %207 = math.exp %206 : vector<8x128xf32>
    %cst_51 = arith.constant 1.000000e+00 : f32
    %208 = vector.broadcast %cst_51 : f32 to vector<8x128xf32>
    %209 = arith.addf %208, %207 : vector<8x128xf32>
    %210 = arith.divf %208, %209 : vector<8x128xf32>
    %211 = math.tanh %190 : vector<8x128xf32>
    %212 = vector.extract_strided_slice %210 {offsets = [0, 0], sizes = [8, 32], strides = [1, 1]} : vector<8x128xf32> to vector<8x32xf32>
    %213 = vector.extract_strided_slice %210 {offsets = [0, 32], sizes = [8, 32], strides = [1, 1]} : vector<8x128xf32> to vector<8x32xf32>
    %214 = vector.extract_strided_slice %211 {offsets = [0, 64], sizes = [8, 32], strides = [1, 1]} : vector<8x128xf32> to vector<8x32xf32>
    %215 = vector.extract_strided_slice %210 {offsets = [0, 96], sizes = [8, 32], strides = [1, 1]} : vector<8x128xf32> to vector<8x32xf32>
    %216 = arith.mulf %213, %178 : vector<8x32xf32>
    %217 = arith.mulf %212, %214 : vector<8x32xf32>
    %218 = arith.addf %216, %217 : vector<8x32xf32>
    %219 = math.tanh %218 : vector<8x32xf32>
    %220 = arith.mulf %215, %219 : vector<8x32xf32>
    %c32_52 = arith.constant 32 : index
    %c0_53 = arith.constant 0 : index
    %221 = vector.load %arg12[%c32_52, %c0_53] : memref<64x64xf32, #tpu.memory_space<vmem>>, vector<8x32xf32>
    tpu.vector_store %arg12[%c32_52, %c0_53], %205 {strides = array<i32>} : memref<64x64xf32, #tpu.memory_space<vmem>>, vector<8x32xf32>,
    %c24_54 = arith.constant 24 : index
    %c32_55 = arith.constant 32 : index
    %222 = vector.load %arg12[%c24_54, %c32_55] : memref<64x64xf32, #tpu.memory_space<vmem>>, vector<8x32xf32>
    tpu.vector_store %arg12[%c24_54, %c32_55], %220 {strides = array<i32>} : memref<64x64xf32, #tpu.memory_space<vmem>>, vector<8x32xf32>,
    %223 = vector.extract_strided_slice %7 {offsets = [40, 0], sizes = [8, 128], strides = [1, 1]} : vector<64x128xf32> to vector<8x128xf32>
    %224 = arith.truncf %205 : vector<8x32xf32> to vector<8x32xbf16>
    %cst_56 = arith.constant dense<0.000000e+00> : vector<8x128xf32>
    %225 = tpu.matmul %224, %16, %cst_56 {dimension_numbers = #tpu.dot_dimension_numbers<[1], [0], [0], [1], [0, 0, 1, 1], [], []>} : vector<8x32xbf16>, vector<32x128xbf16>, vector<8x128xf32> -> vector<8x128xf32>
    %226 = arith.addf %223, %225 : vector<8x128xf32>
    %227 = vector.extract_strided_slice %14 {offsets = [16, 0], sizes = [8, 128], strides = [1, 1]} : vector<64x128xf32> to vector<8x128xf32>
    %228 = arith.truncf %220 : vector<8x32xf32> to vector<8x32xbf16>
    %cst_57 = arith.constant dense<0.000000e+00> : vector<8x128xf32>
    %229 = tpu.matmul %228, %18, %cst_57 {dimension_numbers = #tpu.dot_dimension_numbers<[1], [0], [0], [1], [0, 0, 1, 1], [], []>} : vector<8x32xbf16>, vector<32x128xbf16>, vector<8x128xf32> -> vector<8x128xf32>
    %230 = arith.addf %227, %229 : vector<8x128xf32>
    %231 = arith.negf %226 : vector<8x128xf32>
    %232 = math.exp %231 : vector<8x128xf32>
    %cst_58 = arith.constant 1.000000e+00 : f32
    %233 = vector.broadcast %cst_58 : f32 to vector<8x128xf32>
    %234 = arith.addf %233, %232 : vector<8x128xf32>
    %235 = arith.divf %233, %234 : vector<8x128xf32>
    %236 = math.tanh %226 : vector<8x128xf32>
    %237 = vector.extract_strided_slice %235 {offsets = [0, 0], sizes = [8, 32], strides = [1, 1]} : vector<8x128xf32> to vector<8x32xf32>
    %238 = vector.extract_strided_slice %235 {offsets = [0, 32], sizes = [8, 32], strides = [1, 1]} : vector<8x128xf32> to vector<8x32xf32>
    %239 = vector.extract_strided_slice %236 {offsets = [0, 64], sizes = [8, 32], strides = [1, 1]} : vector<8x128xf32> to vector<8x32xf32>
    %240 = vector.extract_strided_slice %235 {offsets = [0, 96], sizes = [8, 32], strides = [1, 1]} : vector<8x128xf32> to vector<8x32xf32>
    %241 = arith.mulf %238, %203 : vector<8x32xf32>
    %242 = arith.mulf %237, %239 : vector<8x32xf32>
    %243 = arith.addf %241, %242 : vector<8x32xf32>
    %244 = math.tanh %243 : vector<8x32xf32>
    %245 = arith.mulf %240, %244 : vector<8x32xf32>
    %246 = arith.negf %230 : vector<8x128xf32>
    %247 = math.exp %246 : vector<8x128xf32>
    %cst_59 = arith.constant 1.000000e+00 : f32
    %248 = vector.broadcast %cst_59 : f32 to vector<8x128xf32>
    %249 = arith.addf %248, %247 : vector<8x128xf32>
    %250 = arith.divf %248, %249 : vector<8x128xf32>
    %251 = math.tanh %230 : vector<8x128xf32>
    %252 = vector.extract_strided_slice %250 {offsets = [0, 0], sizes = [8, 32], strides = [1, 1]} : vector<8x128xf32> to vector<8x32xf32>
    %253 = vector.extract_strided_slice %250 {offsets = [0, 32], sizes = [8, 32], strides = [1, 1]} : vector<8x128xf32> to vector<8x32xf32>
    %254 = vector.extract_strided_slice %251 {offsets = [0, 64], sizes = [8, 32], strides = [1, 1]} : vector<8x128xf32> to vector<8x32xf32>
    %255 = vector.extract_strided_slice %250 {offsets = [0, 96], sizes = [8, 32], strides = [1, 1]} : vector<8x128xf32> to vector<8x32xf32>
    %256 = arith.mulf %253, %218 : vector<8x32xf32>
    %257 = arith.mulf %252, %254 : vector<8x32xf32>
    %258 = arith.addf %256, %257 : vector<8x32xf32>
    %259 = math.tanh %258 : vector<8x32xf32>
    %260 = arith.mulf %255, %259 : vector<8x32xf32>
    %c40_60 = arith.constant 40 : index
    %c0_61 = arith.constant 0 : index
    %261 = vector.load %arg12[%c40_60, %c0_61] : memref<64x64xf32, #tpu.memory_space<vmem>>, vector<8x32xf32>
    tpu.vector_store %arg12[%c40_60, %c0_61], %245 {strides = array<i32>} : memref<64x64xf32, #tpu.memory_space<vmem>>, vector<8x32xf32>,
    %c16_62 = arith.constant 16 : index
    %c32_63 = arith.constant 32 : index
    %262 = vector.load %arg12[%c16_62, %c32_63] : memref<64x64xf32, #tpu.memory_space<vmem>>, vector<8x32xf32>
    tpu.vector_store %arg12[%c16_62, %c32_63], %260 {strides = array<i32>} : memref<64x64xf32, #tpu.memory_space<vmem>>, vector<8x32xf32>,
    %263 = vector.extract_strided_slice %7 {offsets = [48, 0], sizes = [8, 128], strides = [1, 1]} : vector<64x128xf32> to vector<8x128xf32>
    %264 = arith.truncf %245 : vector<8x32xf32> to vector<8x32xbf16>
    %cst_64 = arith.constant dense<0.000000e+00> : vector<8x128xf32>
    %265 = tpu.matmul %264, %16, %cst_64 {dimension_numbers = #tpu.dot_dimension_numbers<[1], [0], [0], [1], [0, 0, 1, 1], [], []>} : vector<8x32xbf16>, vector<32x128xbf16>, vector<8x128xf32> -> vector<8x128xf32>
    %266 = arith.addf %263, %265 : vector<8x128xf32>
    %267 = vector.extract_strided_slice %14 {offsets = [8, 0], sizes = [8, 128], strides = [1, 1]} : vector<64x128xf32> to vector<8x128xf32>
    %268 = arith.truncf %260 : vector<8x32xf32> to vector<8x32xbf16>
    %cst_65 = arith.constant dense<0.000000e+00> : vector<8x128xf32>
    %269 = tpu.matmul %268, %18, %cst_65 {dimension_numbers = #tpu.dot_dimension_numbers<[1], [0], [0], [1], [0, 0, 1, 1], [], []>} : vector<8x32xbf16>, vector<32x128xbf16>, vector<8x128xf32> -> vector<8x128xf32>
    %270 = arith.addf %267, %269 : vector<8x128xf32>
    %271 = arith.negf %266 : vector<8x128xf32>
    %272 = math.exp %271 : vector<8x128xf32>
    %cst_66 = arith.constant 1.000000e+00 : f32
    %273 = vector.broadcast %cst_66 : f32 to vector<8x128xf32>
    %274 = arith.addf %273, %272 : vector<8x128xf32>
    %275 = arith.divf %273, %274 : vector<8x128xf32>
    %276 = math.tanh %266 : vector<8x128xf32>
    %277 = vector.extract_strided_slice %275 {offsets = [0, 0], sizes = [8, 32], strides = [1, 1]} : vector<8x128xf32> to vector<8x32xf32>
    %278 = vector.extract_strided_slice %275 {offsets = [0, 32], sizes = [8, 32], strides = [1, 1]} : vector<8x128xf32> to vector<8x32xf32>
    %279 = vector.extract_strided_slice %276 {offsets = [0, 64], sizes = [8, 32], strides = [1, 1]} : vector<8x128xf32> to vector<8x32xf32>
    %280 = vector.extract_strided_slice %275 {offsets = [0, 96], sizes = [8, 32], strides = [1, 1]} : vector<8x128xf32> to vector<8x32xf32>
    %281 = arith.mulf %278, %243 : vector<8x32xf32>
    %282 = arith.mulf %277, %279 : vector<8x32xf32>
    %283 = arith.addf %281, %282 : vector<8x32xf32>
    %284 = math.tanh %283 : vector<8x32xf32>
    %285 = arith.mulf %280, %284 : vector<8x32xf32>
    %286 = arith.negf %270 : vector<8x128xf32>
    %287 = math.exp %286 : vector<8x128xf32>
    %cst_67 = arith.constant 1.000000e+00 : f32
    %288 = vector.broadcast %cst_67 : f32 to vector<8x128xf32>
    %289 = arith.addf %288, %287 : vector<8x128xf32>
    %290 = arith.divf %288, %289 : vector<8x128xf32>
    %291 = math.tanh %270 : vector<8x128xf32>
    %292 = vector.extract_strided_slice %290 {offsets = [0, 0], sizes = [8, 32], strides = [1, 1]} : vector<8x128xf32> to vector<8x32xf32>
    %293 = vector.extract_strided_slice %290 {offsets = [0, 32], sizes = [8, 32], strides = [1, 1]} : vector<8x128xf32> to vector<8x32xf32>
    %294 = vector.extract_strided_slice %291 {offsets = [0, 64], sizes = [8, 32], strides = [1, 1]} : vector<8x128xf32> to vector<8x32xf32>
    %295 = vector.extract_strided_slice %290 {offsets = [0, 96], sizes = [8, 32], strides = [1, 1]} : vector<8x128xf32> to vector<8x32xf32>
    %296 = arith.mulf %293, %258 : vector<8x32xf32>
    %297 = arith.mulf %292, %294 : vector<8x32xf32>
    %298 = arith.addf %296, %297 : vector<8x32xf32>
    %299 = math.tanh %298 : vector<8x32xf32>
    %300 = arith.mulf %295, %299 : vector<8x32xf32>
    %c48_68 = arith.constant 48 : index
    %c0_69 = arith.constant 0 : index
    %301 = vector.load %arg12[%c48_68, %c0_69] : memref<64x64xf32, #tpu.memory_space<vmem>>, vector<8x32xf32>
    tpu.vector_store %arg12[%c48_68, %c0_69], %285 {strides = array<i32>} : memref<64x64xf32, #tpu.memory_space<vmem>>, vector<8x32xf32>,
    %c8_70 = arith.constant 8 : index
    %c32_71 = arith.constant 32 : index
    %302 = vector.load %arg12[%c8_70, %c32_71] : memref<64x64xf32, #tpu.memory_space<vmem>>, vector<8x32xf32>
    tpu.vector_store %arg12[%c8_70, %c32_71], %300 {strides = array<i32>} : memref<64x64xf32, #tpu.memory_space<vmem>>, vector<8x32xf32>,
    %303 = vector.extract_strided_slice %7 {offsets = [56, 0], sizes = [8, 128], strides = [1, 1]} : vector<64x128xf32> to vector<8x128xf32>
    %304 = arith.truncf %285 : vector<8x32xf32> to vector<8x32xbf16>
    %cst_72 = arith.constant dense<0.000000e+00> : vector<8x128xf32>
    %305 = tpu.matmul %304, %16, %cst_72 {dimension_numbers = #tpu.dot_dimension_numbers<[1], [0], [0], [1], [0, 0, 1, 1], [], []>} : vector<8x32xbf16>, vector<32x128xbf16>, vector<8x128xf32> -> vector<8x128xf32>
    %306 = arith.addf %303, %305 : vector<8x128xf32>
    %307 = vector.extract_strided_slice %14 {offsets = [0, 0], sizes = [8, 128], strides = [1, 1]} : vector<64x128xf32> to vector<8x128xf32>
    %308 = arith.truncf %300 : vector<8x32xf32> to vector<8x32xbf16>
    %cst_73 = arith.constant dense<0.000000e+00> : vector<8x128xf32>
    %309 = tpu.matmul %308, %18, %cst_73 {dimension_numbers = #tpu.dot_dimension_numbers<[1], [0], [0], [1], [0, 0, 1, 1], [], []>} : vector<8x32xbf16>, vector<32x128xbf16>, vector<8x128xf32> -> vector<8x128xf32>
    %310 = arith.addf %307, %309 : vector<8x128xf32>
    %311 = arith.negf %306 : vector<8x128xf32>
    %312 = math.exp %311 : vector<8x128xf32>
    %cst_74 = arith.constant 1.000000e+00 : f32
    %313 = vector.broadcast %cst_74 : f32 to vector<8x128xf32>
    %314 = arith.addf %313, %312 : vector<8x128xf32>
    %315 = arith.divf %313, %314 : vector<8x128xf32>
    %316 = math.tanh %306 : vector<8x128xf32>
    %317 = vector.extract_strided_slice %315 {offsets = [0, 0], sizes = [8, 32], strides = [1, 1]} : vector<8x128xf32> to vector<8x32xf32>
    %318 = vector.extract_strided_slice %315 {offsets = [0, 32], sizes = [8, 32], strides = [1, 1]} : vector<8x128xf32> to vector<8x32xf32>
    %319 = vector.extract_strided_slice %316 {offsets = [0, 64], sizes = [8, 32], strides = [1, 1]} : vector<8x128xf32> to vector<8x32xf32>
    %320 = vector.extract_strided_slice %315 {offsets = [0, 96], sizes = [8, 32], strides = [1, 1]} : vector<8x128xf32> to vector<8x32xf32>
    %321 = arith.mulf %318, %283 : vector<8x32xf32>
    %322 = arith.mulf %317, %319 : vector<8x32xf32>
    %323 = arith.addf %321, %322 : vector<8x32xf32>
    %324 = math.tanh %323 : vector<8x32xf32>
    %325 = arith.mulf %320, %324 : vector<8x32xf32>
    %326 = arith.negf %310 : vector<8x128xf32>
    %327 = math.exp %326 : vector<8x128xf32>
    %cst_75 = arith.constant 1.000000e+00 : f32
    %328 = vector.broadcast %cst_75 : f32 to vector<8x128xf32>
    %329 = arith.addf %328, %327 : vector<8x128xf32>
    %330 = arith.divf %328, %329 : vector<8x128xf32>
    %331 = math.tanh %310 : vector<8x128xf32>
    %332 = vector.extract_strided_slice %330 {offsets = [0, 0], sizes = [8, 32], strides = [1, 1]} : vector<8x128xf32> to vector<8x32xf32>
    %333 = vector.extract_strided_slice %330 {offsets = [0, 32], sizes = [8, 32], strides = [1, 1]} : vector<8x128xf32> to vector<8x32xf32>
    %334 = vector.extract_strided_slice %331 {offsets = [0, 64], sizes = [8, 32], strides = [1, 1]} : vector<8x128xf32> to vector<8x32xf32>
    %335 = vector.extract_strided_slice %330 {offsets = [0, 96], sizes = [8, 32], strides = [1, 1]} : vector<8x128xf32> to vector<8x32xf32>
    %336 = arith.mulf %333, %298 : vector<8x32xf32>
    %337 = arith.mulf %332, %334 : vector<8x32xf32>
    %338 = arith.addf %336, %337 : vector<8x32xf32>
    %339 = math.tanh %338 : vector<8x32xf32>
    %340 = arith.mulf %335, %339 : vector<8x32xf32>
    %c56_76 = arith.constant 56 : index
    %c0_77 = arith.constant 0 : index
    %341 = vector.load %arg12[%c56_76, %c0_77] : memref<64x64xf32, #tpu.memory_space<vmem>>, vector<8x32xf32>
    tpu.vector_store %arg12[%c56_76, %c0_77], %325 {strides = array<i32>} : memref<64x64xf32, #tpu.memory_space<vmem>>, vector<8x32xf32>,
    %c0_78 = arith.constant 0 : index
    %c32_79 = arith.constant 32 : index
    %342 = vector.load %arg12[%c0_78, %c32_79] : memref<64x64xf32, #tpu.memory_space<vmem>>, vector<8x32xf32>
    tpu.vector_store %arg12[%c0_78, %c32_79], %340 {strides = array<i32>} : memref<64x64xf32, #tpu.memory_space<vmem>>, vector<8x32xf32>,
    %c0_80 = arith.constant 0 : index
    %c0_81 = arith.constant 0 : index
    %343 = vector.load %arg12[%c0_80, %c0_81] : memref<64x64xf32, #tpu.memory_space<vmem>>, vector<64x64xf32>
    %344 = arith.truncf %343 : vector<64x64xf32> to vector<64x64xbf16>
    %c0_82 = arith.constant 0 : index
    %c0_83 = arith.constant 0 : index
    %c0_84 = arith.constant 0 : index
    %345 = vector.load %arg4[%c0_82, %c0_83, %c0_84] : memref<2x64x128xbf16, #tpu.memory_space<vmem>>, vector<1x64x128xbf16>
    %346 = vector.shape_cast %345 : vector<1x64x128xbf16> to vector<64x128xbf16>
    %cst_85 = arith.constant dense<0.000000e+00> : vector<64x128xf32>
    %347 = tpu.matmul %344, %346, %cst_85 {dimension_numbers = #tpu.dot_dimension_numbers<[1], [0], [0], [1], [0, 0, 1, 1], [], []>} : vector<64x64xbf16>, vector<64x128xbf16>, vector<64x128xf32> -> vector<64x128xf32>
    %c0_86 = arith.constant 0 : index
    %c0_87 = arith.constant 0 : index
    %c0_88 = arith.constant 0 : index
    %348 = vector.load %arg6[%c0_86, %c0_87, %c0_88] : memref<2x1x128xf32, #tpu.memory_space<vmem>>, vector<1x1x128xf32>
    %349 = vector.shape_cast %348 : vector<1x1x128xf32> to vector<1x128xf32>
    %350 = vector.broadcast %349 : vector<1x128xf32> to vector<64x128xf32>
    %351 = arith.addf %347, %350 : vector<64x128xf32>
    %c1_89 = arith.constant 1 : index
    %c0_90 = arith.constant 0 : index
    %c0_91 = arith.constant 0 : index
    %352 = vector.load %arg4[%c1_89, %c0_90, %c0_91] : memref<2x64x128xbf16, #tpu.memory_space<vmem>>, vector<1x64x128xbf16>
    %353 = vector.shape_cast %352 : vector<1x64x128xbf16> to vector<64x128xbf16>
    %cst_92 = arith.constant dense<0.000000e+00> : vector<64x128xf32>
    %354 = tpu.matmul %344, %353, %cst_92 {dimension_numbers = #tpu.dot_dimension_numbers<[1], [0], [0], [1], [0, 0, 1, 1], [], []>} : vector<64x64xbf16>, vector<64x128xbf16>, vector<64x128xf32> -> vector<64x128xf32>
    %c1_93 = arith.constant 1 : index
    %c0_94 = arith.constant 0 : index
    %c0_95 = arith.constant 0 : index
    %355 = vector.load %arg6[%c1_93, %c0_94, %c0_95] : memref<2x1x128xf32, #tpu.memory_space<vmem>>, vector<1x1x128xf32>
    %356 = vector.shape_cast %355 : vector<1x1x128xf32> to vector<1x128xf32>
    %357 = vector.broadcast %356 : vector<1x128xf32> to vector<64x128xf32>
    %358 = arith.addf %354, %357 : vector<64x128xf32>
    %c0_96 = arith.constant 0 : index
    %c0_97 = arith.constant 0 : index
    %c0_98 = arith.constant 0 : index
    %359 = vector.load %arg5[%c0_96, %c0_97, %c0_98] : memref<2x32x128xbf16, #tpu.memory_space<vmem>>, vector<1x32x128xbf16>
    %360 = vector.shape_cast %359 : vector<1x32x128xbf16> to vector<32x128xbf16>
    %c1_99 = arith.constant 1 : index
    %c0_100 = arith.constant 0 : index
    %c0_101 = arith.constant 0 : index
    %361 = vector.load %arg5[%c1_99, %c0_100, %c0_101] : memref<2x32x128xbf16, #tpu.memory_space<vmem>>, vector<1x32x128xbf16>
    %362 = vector.shape_cast %361 : vector<1x32x128xbf16> to vector<32x128xbf16>
    %cst_102 = arith.constant 0.000000e+00 : f32
    %363 = vector.broadcast %cst_102 : f32 to vector<8x32xf32>
    %cst_103 = arith.constant 0.000000e+00 : f32
    %364 = vector.broadcast %cst_103 : f32 to vector<8x32xf32>
    %cst_104 = arith.constant 0.000000e+00 : f32
    %365 = vector.broadcast %cst_104 : f32 to vector<8x32xf32>
    %cst_105 = arith.constant 0.000000e+00 : f32
    %366 = vector.broadcast %cst_105 : f32 to vector<8x32xf32>
    %367 = vector.extract_strided_slice %351 {offsets = [0, 0], sizes = [8, 128], strides = [1, 1]} : vector<64x128xf32> to vector<8x128xf32>
    %368 = arith.truncf %363 : vector<8x32xf32> to vector<8x32xbf16>
    %cst_106 = arith.constant dense<0.000000e+00> : vector<8x128xf32>
    %369 = tpu.matmul %368, %360, %cst_106 {dimension_numbers = #tpu.dot_dimension_numbers<[1], [0], [0], [1], [0, 0, 1, 1], [], []>} : vector<8x32xbf16>, vector<32x128xbf16>, vector<8x128xf32> -> vector<8x128xf32>
    %370 = arith.addf %367, %369 : vector<8x128xf32>
    %371 = vector.extract_strided_slice %358 {offsets = [56, 0], sizes = [8, 128], strides = [1, 1]} : vector<64x128xf32> to vector<8x128xf32>
    %372 = arith.truncf %365 : vector<8x32xf32> to vector<8x32xbf16>
    %cst_107 = arith.constant dense<0.000000e+00> : vector<8x128xf32>
    %373 = tpu.matmul %372, %362, %cst_107 {dimension_numbers = #tpu.dot_dimension_numbers<[1], [0], [0], [1], [0, 0, 1, 1], [], []>} : vector<8x32xbf16>, vector<32x128xbf16>, vector<8x128xf32> -> vector<8x128xf32>
    %374 = arith.addf %371, %373 : vector<8x128xf32>
    %375 = arith.negf %370 : vector<8x128xf32>
    %376 = math.exp %375 : vector<8x128xf32>
    %cst_108 = arith.constant 1.000000e+00 : f32
    %377 = vector.broadcast %cst_108 : f32 to vector<8x128xf32>
    %378 = arith.addf %377, %376 : vector<8x128xf32>
    %379 = arith.divf %377, %378 : vector<8x128xf32>
    %380 = math.tanh %370 : vector<8x128xf32>
    %381 = vector.extract_strided_slice %379 {offsets = [0, 0], sizes = [8, 32], strides = [1, 1]} : vector<8x128xf32> to vector<8x32xf32>
    %382 = vector.extract_strided_slice %379 {offsets = [0, 32], sizes = [8, 32], strides = [1, 1]} : vector<8x128xf32> to vector<8x32xf32>
    %383 = vector.extract_strided_slice %380 {offsets = [0, 64], sizes = [8, 32], strides = [1, 1]} : vector<8x128xf32> to vector<8x32xf32>
    %384 = vector.extract_strided_slice %379 {offsets = [0, 96], sizes = [8, 32], strides = [1, 1]} : vector<8x128xf32> to vector<8x32xf32>
    %385 = arith.mulf %382, %364 : vector<8x32xf32>
    %386 = arith.mulf %381, %383 : vector<8x32xf32>
    %387 = arith.addf %385, %386 : vector<8x32xf32>
    %388 = math.tanh %387 : vector<8x32xf32>
    %389 = arith.mulf %384, %388 : vector<8x32xf32>
    %390 = arith.negf %374 : vector<8x128xf32>
    %391 = math.exp %390 : vector<8x128xf32>
    %cst_109 = arith.constant 1.000000e+00 : f32
    %392 = vector.broadcast %cst_109 : f32 to vector<8x128xf32>
    %393 = arith.addf %392, %391 : vector<8x128xf32>
    %394 = arith.divf %392, %393 : vector<8x128xf32>
    %395 = math.tanh %374 : vector<8x128xf32>
    %396 = vector.extract_strided_slice %394 {offsets = [0, 0], sizes = [8, 32], strides = [1, 1]} : vector<8x128xf32> to vector<8x32xf32>
    %397 = vector.extract_strided_slice %394 {offsets = [0, 32], sizes = [8, 32], strides = [1, 1]} : vector<8x128xf32> to vector<8x32xf32>
    %398 = vector.extract_strided_slice %395 {offsets = [0, 64], sizes = [8, 32], strides = [1, 1]} : vector<8x128xf32> to vector<8x32xf32>
    %399 = vector.extract_strided_slice %394 {offsets = [0, 96], sizes = [8, 32], strides = [1, 1]} : vector<8x128xf32> to vector<8x32xf32>
    %400 = arith.mulf %397, %366 : vector<8x32xf32>
    %401 = arith.mulf %396, %398 : vector<8x32xf32>
    %402 = arith.addf %400, %401 : vector<8x32xf32>
    %403 = math.tanh %402 : vector<8x32xf32>
    %404 = arith.mulf %399, %403 : vector<8x32xf32>
    %c0_110 = arith.constant 0 : index
    %c0_111 = arith.constant 0 : index
    %405 = vector.load %arg12[%c0_110, %c0_111] : memref<64x64xf32, #tpu.memory_space<vmem>>, vector<8x32xf32>
    tpu.vector_store %arg12[%c0_110, %c0_111], %389 {strides = array<i32>} : memref<64x64xf32, #tpu.memory_space<vmem>>, vector<8x32xf32>,
    %c56_112 = arith.constant 56 : index
    %c32_113 = arith.constant 32 : index
    %406 = vector.load %arg12[%c56_112, %c32_113] : memref<64x64xf32, #tpu.memory_space<vmem>>, vector<8x32xf32>
    tpu.vector_store %arg12[%c56_112, %c32_113], %404 {strides = array<i32>} : memref<64x64xf32, #tpu.memory_space<vmem>>, vector<8x32xf32>,
    %407 = vector.extract_strided_slice %351 {offsets = [8, 0], sizes = [8, 128], strides = [1, 1]} : vector<64x128xf32> to vector<8x128xf32>
    %408 = arith.truncf %389 : vector<8x32xf32> to vector<8x32xbf16>
    %cst_114 = arith.constant dense<0.000000e+00> : vector<8x128xf32>
    %409 = tpu.matmul %408, %360, %cst_114 {dimension_numbers = #tpu.dot_dimension_numbers<[1], [0], [0], [1], [0, 0, 1, 1], [], []>} : vector<8x32xbf16>, vector<32x128xbf16>, vector<8x128xf32> -> vector<8x128xf32>
    %410 = arith.addf %407, %409 : vector<8x128xf32>
    %411 = vector.extract_strided_slice %358 {offsets = [48, 0], sizes = [8, 128], strides = [1, 1]} : vector<64x128xf32> to vector<8x128xf32>
    %412 = arith.truncf %404 : vector<8x32xf32> to vector<8x32xbf16>
    %cst_115 = arith.constant dense<0.000000e+00> : vector<8x128xf32>
    %413 = tpu.matmul %412, %362, %cst_115 {dimension_numbers = #tpu.dot_dimension_numbers<[1], [0], [0], [1], [0, 0, 1, 1], [], []>} : vector<8x32xbf16>, vector<32x128xbf16>, vector<8x128xf32> -> vector<8x128xf32>
    %414 = arith.addf %411, %413 : vector<8x128xf32>
    %415 = arith.negf %410 : vector<8x128xf32>
    %416 = math.exp %415 : vector<8x128xf32>
    %cst_116 = arith.constant 1.000000e+00 : f32
    %417 = vector.broadcast %cst_116 : f32 to vector<8x128xf32>
    %418 = arith.addf %417, %416 : vector<8x128xf32>
    %419 = arith.divf %417, %418 : vector<8x128xf32>
    %420 = math.tanh %410 : vector<8x128xf32>
    %421 = vector.extract_strided_slice %419 {offsets = [0, 0], sizes = [8, 32], strides = [1, 1]} : vector<8x128xf32> to vector<8x32xf32>
    %422 = vector.extract_strided_slice %419 {offsets = [0, 32], sizes = [8, 32], strides = [1, 1]} : vector<8x128xf32> to vector<8x32xf32>
    %423 = vector.extract_strided_slice %420 {offsets = [0, 64], sizes = [8, 32], strides = [1, 1]} : vector<8x128xf32> to vector<8x32xf32>
    %424 = vector.extract_strided_slice %419 {offsets = [0, 96], sizes = [8, 32], strides = [1, 1]} : vector<8x128xf32> to vector<8x32xf32>
    %425 = arith.mulf %422, %387 : vector<8x32xf32>
    %426 = arith.mulf %421, %423 : vector<8x32xf32>
    %427 = arith.addf %425, %426 : vector<8x32xf32>
    %428 = math.tanh %427 : vector<8x32xf32>
    %429 = arith.mulf %424, %428 : vector<8x32xf32>
    %430 = arith.negf %414 : vector<8x128xf32>
    %431 = math.exp %430 : vector<8x128xf32>
    %cst_117 = arith.constant 1.000000e+00 : f32
    %432 = vector.broadcast %cst_117 : f32 to vector<8x128xf32>
    %433 = arith.addf %432, %431 : vector<8x128xf32>
    %434 = arith.divf %432, %433 : vector<8x128xf32>
    %435 = math.tanh %414 : vector<8x128xf32>
    %436 = vector.extract_strided_slice %434 {offsets = [0, 0], sizes = [8, 32], strides = [1, 1]} : vector<8x128xf32> to vector<8x32xf32>
    %437 = vector.extract_strided_slice %434 {offsets = [0, 32], sizes = [8, 32], strides = [1, 1]} : vector<8x128xf32> to vector<8x32xf32>
    %438 = vector.extract_strided_slice %435 {offsets = [0, 64], sizes = [8, 32], strides = [1, 1]} : vector<8x128xf32> to vector<8x32xf32>
    %439 = vector.extract_strided_slice %434 {offsets = [0, 96], sizes = [8, 32], strides = [1, 1]} : vector<8x128xf32> to vector<8x32xf32>
    %440 = arith.mulf %437, %402 : vector<8x32xf32>
    %441 = arith.mulf %436, %438 : vector<8x32xf32>
    %442 = arith.addf %440, %441 : vector<8x32xf32>
    %443 = math.tanh %442 : vector<8x32xf32>
    %444 = arith.mulf %439, %443 : vector<8x32xf32>
    %c8_118 = arith.constant 8 : index
    %c0_119 = arith.constant 0 : index
    %445 = vector.load %arg12[%c8_118, %c0_119] : memref<64x64xf32, #tpu.memory_space<vmem>>, vector<8x32xf32>
    tpu.vector_store %arg12[%c8_118, %c0_119], %429 {strides = array<i32>} : memref<64x64xf32, #tpu.memory_space<vmem>>, vector<8x32xf32>,
    %c48_120 = arith.constant 48 : index
    %c32_121 = arith.constant 32 : index
    %446 = vector.load %arg12[%c48_120, %c32_121] : memref<64x64xf32, #tpu.memory_space<vmem>>, vector<8x32xf32>
    tpu.vector_store %arg12[%c48_120, %c32_121], %444 {strides = array<i32>} : memref<64x64xf32, #tpu.memory_space<vmem>>, vector<8x32xf32>,
    %447 = vector.extract_strided_slice %351 {offsets = [16, 0], sizes = [8, 128], strides = [1, 1]} : vector<64x128xf32> to vector<8x128xf32>
    %448 = arith.truncf %429 : vector<8x32xf32> to vector<8x32xbf16>
    %cst_122 = arith.constant dense<0.000000e+00> : vector<8x128xf32>
    %449 = tpu.matmul %448, %360, %cst_122 {dimension_numbers = #tpu.dot_dimension_numbers<[1], [0], [0], [1], [0, 0, 1, 1], [], []>} : vector<8x32xbf16>, vector<32x128xbf16>, vector<8x128xf32> -> vector<8x128xf32>
    %450 = arith.addf %447, %449 : vector<8x128xf32>
    %451 = vector.extract_strided_slice %358 {offsets = [40, 0], sizes = [8, 128], strides = [1, 1]} : vector<64x128xf32> to vector<8x128xf32>
    %452 = arith.truncf %444 : vector<8x32xf32> to vector<8x32xbf16>
    %cst_123 = arith.constant dense<0.000000e+00> : vector<8x128xf32>
    %453 = tpu.matmul %452, %362, %cst_123 {dimension_numbers = #tpu.dot_dimension_numbers<[1], [0], [0], [1], [0, 0, 1, 1], [], []>} : vector<8x32xbf16>, vector<32x128xbf16>, vector<8x128xf32> -> vector<8x128xf32>
    %454 = arith.addf %451, %453 : vector<8x128xf32>
    %455 = arith.negf %450 : vector<8x128xf32>
    %456 = math.exp %455 : vector<8x128xf32>
    %cst_124 = arith.constant 1.000000e+00 : f32
    %457 = vector.broadcast %cst_124 : f32 to vector<8x128xf32>
    %458 = arith.addf %457, %456 : vector<8x128xf32>
    %459 = arith.divf %457, %458 : vector<8x128xf32>
    %460 = math.tanh %450 : vector<8x128xf32>
    %461 = vector.extract_strided_slice %459 {offsets = [0, 0], sizes = [8, 32], strides = [1, 1]} : vector<8x128xf32> to vector<8x32xf32>
    %462 = vector.extract_strided_slice %459 {offsets = [0, 32], sizes = [8, 32], strides = [1, 1]} : vector<8x128xf32> to vector<8x32xf32>
    %463 = vector.extract_strided_slice %460 {offsets = [0, 64], sizes = [8, 32], strides = [1, 1]} : vector<8x128xf32> to vector<8x32xf32>
    %464 = vector.extract_strided_slice %459 {offsets = [0, 96], sizes = [8, 32], strides = [1, 1]} : vector<8x128xf32> to vector<8x32xf32>
    %465 = arith.mulf %462, %427 : vector<8x32xf32>
    %466 = arith.mulf %461, %463 : vector<8x32xf32>
    %467 = arith.addf %465, %466 : vector<8x32xf32>
    %468 = math.tanh %467 : vector<8x32xf32>
    %469 = arith.mulf %464, %468 : vector<8x32xf32>
    %470 = arith.negf %454 : vector<8x128xf32>
    %471 = math.exp %470 : vector<8x128xf32>
    %cst_125 = arith.constant 1.000000e+00 : f32
    %472 = vector.broadcast %cst_125 : f32 to vector<8x128xf32>
    %473 = arith.addf %472, %471 : vector<8x128xf32>
    %474 = arith.divf %472, %473 : vector<8x128xf32>
    %475 = math.tanh %454 : vector<8x128xf32>
    %476 = vector.extract_strided_slice %474 {offsets = [0, 0], sizes = [8, 32], strides = [1, 1]} : vector<8x128xf32> to vector<8x32xf32>
    %477 = vector.extract_strided_slice %474 {offsets = [0, 32], sizes = [8, 32], strides = [1, 1]} : vector<8x128xf32> to vector<8x32xf32>
    %478 = vector.extract_strided_slice %475 {offsets = [0, 64], sizes = [8, 32], strides = [1, 1]} : vector<8x128xf32> to vector<8x32xf32>
    %479 = vector.extract_strided_slice %474 {offsets = [0, 96], sizes = [8, 32], strides = [1, 1]} : vector<8x128xf32> to vector<8x32xf32>
    %480 = arith.mulf %477, %442 : vector<8x32xf32>
    %481 = arith.mulf %476, %478 : vector<8x32xf32>
    %482 = arith.addf %480, %481 : vector<8x32xf32>
    %483 = math.tanh %482 : vector<8x32xf32>
    %484 = arith.mulf %479, %483 : vector<8x32xf32>
    %c16_126 = arith.constant 16 : index
    %c0_127 = arith.constant 0 : index
    %485 = vector.load %arg12[%c16_126, %c0_127] : memref<64x64xf32, #tpu.memory_space<vmem>>, vector<8x32xf32>
    tpu.vector_store %arg12[%c16_126, %c0_127], %469 {strides = array<i32>} : memref<64x64xf32, #tpu.memory_space<vmem>>, vector<8x32xf32>,
    %c40_128 = arith.constant 40 : index
    %c32_129 = arith.constant 32 : index
    %486 = vector.load %arg12[%c40_128, %c32_129] : memref<64x64xf32, #tpu.memory_space<vmem>>, vector<8x32xf32>
    tpu.vector_store %arg12[%c40_128, %c32_129], %484 {strides = array<i32>} : memref<64x64xf32, #tpu.memory_space<vmem>>, vector<8x32xf32>,
    %487 = vector.extract_strided_slice %351 {offsets = [24, 0], sizes = [8, 128], strides = [1, 1]} : vector<64x128xf32> to vector<8x128xf32>
    %488 = arith.truncf %469 : vector<8x32xf32> to vector<8x32xbf16>
    %cst_130 = arith.constant dense<0.000000e+00> : vector<8x128xf32>
    %489 = tpu.matmul %488, %360, %cst_130 {dimension_numbers = #tpu.dot_dimension_numbers<[1], [0], [0], [1], [0, 0, 1, 1], [], []>} : vector<8x32xbf16>, vector<32x128xbf16>, vector<8x128xf32> -> vector<8x128xf32>
    %490 = arith.addf %487, %489 : vector<8x128xf32>
    %491 = vector.extract_strided_slice %358 {offsets = [32, 0], sizes = [8, 128], strides = [1, 1]} : vector<64x128xf32> to vector<8x128xf32>
    %492 = arith.truncf %484 : vector<8x32xf32> to vector<8x32xbf16>
    %cst_131 = arith.constant dense<0.000000e+00> : vector<8x128xf32>
    %493 = tpu.matmul %492, %362, %cst_131 {dimension_numbers = #tpu.dot_dimension_numbers<[1], [0], [0], [1], [0, 0, 1, 1], [], []>} : vector<8x32xbf16>, vector<32x128xbf16>, vector<8x128xf32> -> vector<8x128xf32>
    %494 = arith.addf %491, %493 : vector<8x128xf32>
    %495 = arith.negf %490 : vector<8x128xf32>
    %496 = math.exp %495 : vector<8x128xf32>
    %cst_132 = arith.constant 1.000000e+00 : f32
    %497 = vector.broadcast %cst_132 : f32 to vector<8x128xf32>
    %498 = arith.addf %497, %496 : vector<8x128xf32>
    %499 = arith.divf %497, %498 : vector<8x128xf32>
    %500 = math.tanh %490 : vector<8x128xf32>
    %501 = vector.extract_strided_slice %499 {offsets = [0, 0], sizes = [8, 32], strides = [1, 1]} : vector<8x128xf32> to vector<8x32xf32>
    %502 = vector.extract_strided_slice %499 {offsets = [0, 32], sizes = [8, 32], strides = [1, 1]} : vector<8x128xf32> to vector<8x32xf32>
    %503 = vector.extract_strided_slice %500 {offsets = [0, 64], sizes = [8, 32], strides = [1, 1]} : vector<8x128xf32> to vector<8x32xf32>
    %504 = vector.extract_strided_slice %499 {offsets = [0, 96], sizes = [8, 32], strides = [1, 1]} : vector<8x128xf32> to vector<8x32xf32>
    %505 = arith.mulf %502, %467 : vector<8x32xf32>
    %506 = arith.mulf %501, %503 : vector<8x32xf32>
    %507 = arith.addf %505, %506 : vector<8x32xf32>
    %508 = math.tanh %507 : vector<8x32xf32>
    %509 = arith.mulf %504, %508 : vector<8x32xf32>
    %510 = arith.negf %494 : vector<8x128xf32>
    %511 = math.exp %510 : vector<8x128xf32>
    %cst_133 = arith.constant 1.000000e+00 : f32
    %512 = vector.broadcast %cst_133 : f32 to vector<8x128xf32>
    %513 = arith.addf %512, %511 : vector<8x128xf32>
    %514 = arith.divf %512, %513 : vector<8x128xf32>
    %515 = math.tanh %494 : vector<8x128xf32>
    %516 = vector.extract_strided_slice %514 {offsets = [0, 0], sizes = [8, 32], strides = [1, 1]} : vector<8x128xf32> to vector<8x32xf32>
    %517 = vector.extract_strided_slice %514 {offsets = [0, 32], sizes = [8, 32], strides = [1, 1]} : vector<8x128xf32> to vector<8x32xf32>
    %518 = vector.extract_strided_slice %515 {offsets = [0, 64], sizes = [8, 32], strides = [1, 1]} : vector<8x128xf32> to vector<8x32xf32>
    %519 = vector.extract_strided_slice %514 {offsets = [0, 96], sizes = [8, 32], strides = [1, 1]} : vector<8x128xf32> to vector<8x32xf32>
    %520 = arith.mulf %517, %482 : vector<8x32xf32>
    %521 = arith.mulf %516, %518 : vector<8x32xf32>
    %522 = arith.addf %520, %521 : vector<8x32xf32>
    %523 = math.tanh %522 : vector<8x32xf32>
    %524 = arith.mulf %519, %523 : vector<8x32xf32>
    %c24_134 = arith.constant 24 : index
    %c0_135 = arith.constant 0 : index
    %525 = vector.load %arg12[%c24_134, %c0_135] : memref<64x64xf32, #tpu.memory_space<vmem>>, vector<8x32xf32>
    tpu.vector_store %arg12[%c24_134, %c0_135], %509 {strides = array<i32>} : memref<64x64xf32, #tpu.memory_space<vmem>>, vector<8x32xf32>,
    %c32_136 = arith.constant 32 : index
    %c32_137 = arith.constant 32 : index
    %526 = vector.load %arg12[%c32_136, %c32_137] : memref<64x64xf32, #tpu.memory_space<vmem>>, vector<8x32xf32>
    tpu.vector_store %arg12[%c32_136, %c32_137], %524 {strides = array<i32>} : memref<64x64xf32, #tpu.memory_space<vmem>>, vector<8x32xf32>,
    %527 = vector.extract_strided_slice %351 {offsets = [32, 0], sizes = [8, 128], strides = [1, 1]} : vector<64x128xf32> to vector<8x128xf32>
    %528 = arith.truncf %509 : vector<8x32xf32> to vector<8x32xbf16>
    %cst_138 = arith.constant dense<0.000000e+00> : vector<8x128xf32>
    %529 = tpu.matmul %528, %360, %cst_138 {dimension_numbers = #tpu.dot_dimension_numbers<[1], [0], [0], [1], [0, 0, 1, 1], [], []>} : vector<8x32xbf16>, vector<32x128xbf16>, vector<8x128xf32> -> vector<8x128xf32>
    %530 = arith.addf %527, %529 : vector<8x128xf32>
    %531 = vector.extract_strided_slice %358 {offsets = [24, 0], sizes = [8, 128], strides = [1, 1]} : vector<64x128xf32> to vector<8x128xf32>
    %532 = arith.truncf %524 : vector<8x32xf32> to vector<8x32xbf16>
    %cst_139 = arith.constant dense<0.000000e+00> : vector<8x128xf32>
    %533 = tpu.matmul %532, %362, %cst_139 {dimension_numbers = #tpu.dot_dimension_numbers<[1], [0], [0], [1], [0, 0, 1, 1], [], []>} : vector<8x32xbf16>, vector<32x128xbf16>, vector<8x128xf32> -> vector<8x128xf32>
    %534 = arith.addf %531, %533 : vector<8x128xf32>
    %535 = arith.negf %530 : vector<8x128xf32>
    %536 = math.exp %535 : vector<8x128xf32>
    %cst_140 = arith.constant 1.000000e+00 : f32
    %537 = vector.broadcast %cst_140 : f32 to vector<8x128xf32>
    %538 = arith.addf %537, %536 : vector<8x128xf32>
    %539 = arith.divf %537, %538 : vector<8x128xf32>
    %540 = math.tanh %530 : vector<8x128xf32>
    %541 = vector.extract_strided_slice %539 {offsets = [0, 0], sizes = [8, 32], strides = [1, 1]} : vector<8x128xf32> to vector<8x32xf32>
    %542 = vector.extract_strided_slice %539 {offsets = [0, 32], sizes = [8, 32], strides = [1, 1]} : vector<8x128xf32> to vector<8x32xf32>
    %543 = vector.extract_strided_slice %540 {offsets = [0, 64], sizes = [8, 32], strides = [1, 1]} : vector<8x128xf32> to vector<8x32xf32>
    %544 = vector.extract_strided_slice %539 {offsets = [0, 96], sizes = [8, 32], strides = [1, 1]} : vector<8x128xf32> to vector<8x32xf32>
    %545 = arith.mulf %542, %507 : vector<8x32xf32>
    %546 = arith.mulf %541, %543 : vector<8x32xf32>
    %547 = arith.addf %545, %546 : vector<8x32xf32>
    %548 = math.tanh %547 : vector<8x32xf32>
    %549 = arith.mulf %544, %548 : vector<8x32xf32>
    %550 = arith.negf %534 : vector<8x128xf32>
    %551 = math.exp %550 : vector<8x128xf32>
    %cst_141 = arith.constant 1.000000e+00 : f32
    %552 = vector.broadcast %cst_141 : f32 to vector<8x128xf32>
    %553 = arith.addf %552, %551 : vector<8x128xf32>
    %554 = arith.divf %552, %553 : vector<8x128xf32>
    %555 = math.tanh %534 : vector<8x128xf32>
    %556 = vector.extract_strided_slice %554 {offsets = [0, 0], sizes = [8, 32], strides = [1, 1]} : vector<8x128xf32> to vector<8x32xf32>
    %557 = vector.extract_strided_slice %554 {offsets = [0, 32], sizes = [8, 32], strides = [1, 1]} : vector<8x128xf32> to vector<8x32xf32>
    %558 = vector.extract_strided_slice %555 {offsets = [0, 64], sizes = [8, 32], strides = [1, 1]} : vector<8x128xf32> to vector<8x32xf32>
    %559 = vector.extract_strided_slice %554 {offsets = [0, 96], sizes = [8, 32], strides = [1, 1]} : vector<8x128xf32> to vector<8x32xf32>
    %560 = arith.mulf %557, %522 : vector<8x32xf32>
    %561 = arith.mulf %556, %558 : vector<8x32xf32>
    %562 = arith.addf %560, %561 : vector<8x32xf32>
    %563 = math.tanh %562 : vector<8x32xf32>
    %564 = arith.mulf %559, %563 : vector<8x32xf32>
    %c32_142 = arith.constant 32 : index
    %c0_143 = arith.constant 0 : index
    %565 = vector.load %arg12[%c32_142, %c0_143] : memref<64x64xf32, #tpu.memory_space<vmem>>, vector<8x32xf32>
    tpu.vector_store %arg12[%c32_142, %c0_143], %549 {strides = array<i32>} : memref<64x64xf32, #tpu.memory_space<vmem>>, vector<8x32xf32>,
    %c24_144 = arith.constant 24 : index
    %c32_145 = arith.constant 32 : index
    %566 = vector.load %arg12[%c24_144, %c32_145] : memref<64x64xf32, #tpu.memory_space<vmem>>, vector<8x32xf32>
    tpu.vector_store %arg12[%c24_144, %c32_145], %564 {strides = array<i32>} : memref<64x64xf32, #tpu.memory_space<vmem>>, vector<8x32xf32>,
    %567 = vector.extract_strided_slice %351 {offsets = [40, 0], sizes = [8, 128], strides = [1, 1]} : vector<64x128xf32> to vector<8x128xf32>
    %568 = arith.truncf %549 : vector<8x32xf32> to vector<8x32xbf16>
    %cst_146 = arith.constant dense<0.000000e+00> : vector<8x128xf32>
    %569 = tpu.matmul %568, %360, %cst_146 {dimension_numbers = #tpu.dot_dimension_numbers<[1], [0], [0], [1], [0, 0, 1, 1], [], []>} : vector<8x32xbf16>, vector<32x128xbf16>, vector<8x128xf32> -> vector<8x128xf32>
    %570 = arith.addf %567, %569 : vector<8x128xf32>
    %571 = vector.extract_strided_slice %358 {offsets = [16, 0], sizes = [8, 128], strides = [1, 1]} : vector<64x128xf32> to vector<8x128xf32>
    %572 = arith.truncf %564 : vector<8x32xf32> to vector<8x32xbf16>
    %cst_147 = arith.constant dense<0.000000e+00> : vector<8x128xf32>
    %573 = tpu.matmul %572, %362, %cst_147 {dimension_numbers = #tpu.dot_dimension_numbers<[1], [0], [0], [1], [0, 0, 1, 1], [], []>} : vector<8x32xbf16>, vector<32x128xbf16>, vector<8x128xf32> -> vector<8x128xf32>
    %574 = arith.addf %571, %573 : vector<8x128xf32>
    %575 = arith.negf %570 : vector<8x128xf32>
    %576 = math.exp %575 : vector<8x128xf32>
    %cst_148 = arith.constant 1.000000e+00 : f32
    %577 = vector.broadcast %cst_148 : f32 to vector<8x128xf32>
    %578 = arith.addf %577, %576 : vector<8x128xf32>
    %579 = arith.divf %577, %578 : vector<8x128xf32>
    %580 = math.tanh %570 : vector<8x128xf32>
    %581 = vector.extract_strided_slice %579 {offsets = [0, 0], sizes = [8, 32], strides = [1, 1]} : vector<8x128xf32> to vector<8x32xf32>
    %582 = vector.extract_strided_slice %579 {offsets = [0, 32], sizes = [8, 32], strides = [1, 1]} : vector<8x128xf32> to vector<8x32xf32>
    %583 = vector.extract_strided_slice %580 {offsets = [0, 64], sizes = [8, 32], strides = [1, 1]} : vector<8x128xf32> to vector<8x32xf32>
    %584 = vector.extract_strided_slice %579 {offsets = [0, 96], sizes = [8, 32], strides = [1, 1]} : vector<8x128xf32> to vector<8x32xf32>
    %585 = arith.mulf %582, %547 : vector<8x32xf32>
    %586 = arith.mulf %581, %583 : vector<8x32xf32>
    %587 = arith.addf %585, %586 : vector<8x32xf32>
    %588 = math.tanh %587 : vector<8x32xf32>
    %589 = arith.mulf %584, %588 : vector<8x32xf32>
    %590 = arith.negf %574 : vector<8x128xf32>
    %591 = math.exp %590 : vector<8x128xf32>
    %cst_149 = arith.constant 1.000000e+00 : f32
    %592 = vector.broadcast %cst_149 : f32 to vector<8x128xf32>
    %593 = arith.addf %592, %591 : vector<8x128xf32>
    %594 = arith.divf %592, %593 : vector<8x128xf32>
    %595 = math.tanh %574 : vector<8x128xf32>
    %596 = vector.extract_strided_slice %594 {offsets = [0, 0], sizes = [8, 32], strides = [1, 1]} : vector<8x128xf32> to vector<8x32xf32>
    %597 = vector.extract_strided_slice %594 {offsets = [0, 32], sizes = [8, 32], strides = [1, 1]} : vector<8x128xf32> to vector<8x32xf32>
    %598 = vector.extract_strided_slice %595 {offsets = [0, 64], sizes = [8, 32], strides = [1, 1]} : vector<8x128xf32> to vector<8x32xf32>
    %599 = vector.extract_strided_slice %594 {offsets = [0, 96], sizes = [8, 32], strides = [1, 1]} : vector<8x128xf32> to vector<8x32xf32>
    %600 = arith.mulf %597, %562 : vector<8x32xf32>
    %601 = arith.mulf %596, %598 : vector<8x32xf32>
    %602 = arith.addf %600, %601 : vector<8x32xf32>
    %603 = math.tanh %602 : vector<8x32xf32>
    %604 = arith.mulf %599, %603 : vector<8x32xf32>
    %c40_150 = arith.constant 40 : index
    %c0_151 = arith.constant 0 : index
    %605 = vector.load %arg12[%c40_150, %c0_151] : memref<64x64xf32, #tpu.memory_space<vmem>>, vector<8x32xf32>
    tpu.vector_store %arg12[%c40_150, %c0_151], %589 {strides = array<i32>} : memref<64x64xf32, #tpu.memory_space<vmem>>, vector<8x32xf32>,
    %c16_152 = arith.constant 16 : index
    %c32_153 = arith.constant 32 : index
    %606 = vector.load %arg12[%c16_152, %c32_153] : memref<64x64xf32, #tpu.memory_space<vmem>>, vector<8x32xf32>
    tpu.vector_store %arg12[%c16_152, %c32_153], %604 {strides = array<i32>} : memref<64x64xf32, #tpu.memory_space<vmem>>, vector<8x32xf32>,
    %607 = vector.extract_strided_slice %351 {offsets = [48, 0], sizes = [8, 128], strides = [1, 1]} : vector<64x128xf32> to vector<8x128xf32>
    %608 = arith.truncf %589 : vector<8x32xf32> to vector<8x32xbf16>
    %cst_154 = arith.constant dense<0.000000e+00> : vector<8x128xf32>
    %609 = tpu.matmul %608, %360, %cst_154 {dimension_numbers = #tpu.dot_dimension_numbers<[1], [0], [0], [1], [0, 0, 1, 1], [], []>} : vector<8x32xbf16>, vector<32x128xbf16>, vector<8x128xf32> -> vector<8x128xf32>
    %610 = arith.addf %607, %609 : vector<8x128xf32>
    %611 = vector.extract_strided_slice %358 {offsets = [8, 0], sizes = [8, 128], strides = [1, 1]} : vector<64x128xf32> to vector<8x128xf32>
    %612 = arith.truncf %604 : vector<8x32xf32> to vector<8x32xbf16>
    %cst_155 = arith.constant dense<0.000000e+00> : vector<8x128xf32>
    %613 = tpu.matmul %612, %362, %cst_155 {dimension_numbers = #tpu.dot_dimension_numbers<[1], [0], [0], [1], [0, 0, 1, 1], [], []>} : vector<8x32xbf16>, vector<32x128xbf16>, vector<8x128xf32> -> vector<8x128xf32>
    %614 = arith.addf %611, %613 : vector<8x128xf32>
    %615 = arith.negf %610 : vector<8x128xf32>
    %616 = math.exp %615 : vector<8x128xf32>
    %cst_156 = arith.constant 1.000000e+00 : f32
    %617 = vector.broadcast %cst_156 : f32 to vector<8x128xf32>
    %618 = arith.addf %617, %616 : vector<8x128xf32>
    %619 = arith.divf %617, %618 : vector<8x128xf32>
    %620 = math.tanh %610 : vector<8x128xf32>
    %621 = vector.extract_strided_slice %619 {offsets = [0, 0], sizes = [8, 32], strides = [1, 1]} : vector<8x128xf32> to vector<8x32xf32>
    %622 = vector.extract_strided_slice %619 {offsets = [0, 32], sizes = [8, 32], strides = [1, 1]} : vector<8x128xf32> to vector<8x32xf32>
    %623 = vector.extract_strided_slice %620 {offsets = [0, 64], sizes = [8, 32], strides = [1, 1]} : vector<8x128xf32> to vector<8x32xf32>
    %624 = vector.extract_strided_slice %619 {offsets = [0, 96], sizes = [8, 32], strides = [1, 1]} : vector<8x128xf32> to vector<8x32xf32>
    %625 = arith.mulf %622, %587 : vector<8x32xf32>
    %626 = arith.mulf %621, %623 : vector<8x32xf32>
    %627 = arith.addf %625, %626 : vector<8x32xf32>
    %628 = math.tanh %627 : vector<8x32xf32>
    %629 = arith.mulf %624, %628 : vector<8x32xf32>
    %630 = arith.negf %614 : vector<8x128xf32>
    %631 = math.exp %630 : vector<8x128xf32>
    %cst_157 = arith.constant 1.000000e+00 : f32
    %632 = vector.broadcast %cst_157 : f32 to vector<8x128xf32>
    %633 = arith.addf %632, %631 : vector<8x128xf32>
    %634 = arith.divf %632, %633 : vector<8x128xf32>
    %635 = math.tanh %614 : vector<8x128xf32>
    %636 = vector.extract_strided_slice %634 {offsets = [0, 0], sizes = [8, 32], strides = [1, 1]} : vector<8x128xf32> to vector<8x32xf32>
    %637 = vector.extract_strided_slice %634 {offsets = [0, 32], sizes = [8, 32], strides = [1, 1]} : vector<8x128xf32> to vector<8x32xf32>
    %638 = vector.extract_strided_slice %635 {offsets = [0, 64], sizes = [8, 32], strides = [1, 1]} : vector<8x128xf32> to vector<8x32xf32>
    %639 = vector.extract_strided_slice %634 {offsets = [0, 96], sizes = [8, 32], strides = [1, 1]} : vector<8x128xf32> to vector<8x32xf32>
    %640 = arith.mulf %637, %602 : vector<8x32xf32>
    %641 = arith.mulf %636, %638 : vector<8x32xf32>
    %642 = arith.addf %640, %641 : vector<8x32xf32>
    %643 = math.tanh %642 : vector<8x32xf32>
    %644 = arith.mulf %639, %643 : vector<8x32xf32>
    %c48_158 = arith.constant 48 : index
    %c0_159 = arith.constant 0 : index
    %645 = vector.load %arg12[%c48_158, %c0_159] : memref<64x64xf32, #tpu.memory_space<vmem>>, vector<8x32xf32>
    tpu.vector_store %arg12[%c48_158, %c0_159], %629 {strides = array<i32>} : memref<64x64xf32, #tpu.memory_space<vmem>>, vector<8x32xf32>,
    %c8_160 = arith.constant 8 : index
    %c32_161 = arith.constant 32 : index
    %646 = vector.load %arg12[%c8_160, %c32_161] : memref<64x64xf32, #tpu.memory_space<vmem>>, vector<8x32xf32>
    tpu.vector_store %arg12[%c8_160, %c32_161], %644 {strides = array<i32>} : memref<64x64xf32, #tpu.memory_space<vmem>>, vector<8x32xf32>,
    %647 = vector.extract_strided_slice %351 {offsets = [56, 0], sizes = [8, 128], strides = [1, 1]} : vector<64x128xf32> to vector<8x128xf32>
    %648 = arith.truncf %629 : vector<8x32xf32> to vector<8x32xbf16>
    %cst_162 = arith.constant dense<0.000000e+00> : vector<8x128xf32>
    %649 = tpu.matmul %648, %360, %cst_162 {dimension_numbers = #tpu.dot_dimension_numbers<[1], [0], [0], [1], [0, 0, 1, 1], [], []>} : vector<8x32xbf16>, vector<32x128xbf16>, vector<8x128xf32> -> vector<8x128xf32>
    %650 = arith.addf %647, %649 : vector<8x128xf32>
    %651 = vector.extract_strided_slice %358 {offsets = [0, 0], sizes = [8, 128], strides = [1, 1]} : vector<64x128xf32> to vector<8x128xf32>
    %652 = arith.truncf %644 : vector<8x32xf32> to vector<8x32xbf16>
    %cst_163 = arith.constant dense<0.000000e+00> : vector<8x128xf32>
    %653 = tpu.matmul %652, %362, %cst_163 {dimension_numbers = #tpu.dot_dimension_numbers<[1], [0], [0], [1], [0, 0, 1, 1], [], []>} : vector<8x32xbf16>, vector<32x128xbf16>, vector<8x128xf32> -> vector<8x128xf32>
    %654 = arith.addf %651, %653 : vector<8x128xf32>
    %655 = arith.negf %650 : vector<8x128xf32>
    %656 = math.exp %655 : vector<8x128xf32>
    %cst_164 = arith.constant 1.000000e+00 : f32
    %657 = vector.broadcast %cst_164 : f32 to vector<8x128xf32>
    %658 = arith.addf %657, %656 : vector<8x128xf32>
    %659 = arith.divf %657, %658 : vector<8x128xf32>
    %660 = math.tanh %650 : vector<8x128xf32>
    %661 = vector.extract_strided_slice %659 {offsets = [0, 0], sizes = [8, 32], strides = [1, 1]} : vector<8x128xf32> to vector<8x32xf32>
    %662 = vector.extract_strided_slice %659 {offsets = [0, 32], sizes = [8, 32], strides = [1, 1]} : vector<8x128xf32> to vector<8x32xf32>
    %663 = vector.extract_strided_slice %660 {offsets = [0, 64], sizes = [8, 32], strides = [1, 1]} : vector<8x128xf32> to vector<8x32xf32>
    %664 = vector.extract_strided_slice %659 {offsets = [0, 96], sizes = [8, 32], strides = [1, 1]} : vector<8x128xf32> to vector<8x32xf32>
    %665 = arith.mulf %662, %627 : vector<8x32xf32>
    %666 = arith.mulf %661, %663 : vector<8x32xf32>
    %667 = arith.addf %665, %666 : vector<8x32xf32>
    %668 = math.tanh %667 : vector<8x32xf32>
    %669 = arith.mulf %664, %668 : vector<8x32xf32>
    %670 = arith.negf %654 : vector<8x128xf32>
    %671 = math.exp %670 : vector<8x128xf32>
    %cst_165 = arith.constant 1.000000e+00 : f32
    %672 = vector.broadcast %cst_165 : f32 to vector<8x128xf32>
    %673 = arith.addf %672, %671 : vector<8x128xf32>
    %674 = arith.divf %672, %673 : vector<8x128xf32>
    %675 = math.tanh %654 : vector<8x128xf32>
    %676 = vector.extract_strided_slice %674 {offsets = [0, 0], sizes = [8, 32], strides = [1, 1]} : vector<8x128xf32> to vector<8x32xf32>
    %677 = vector.extract_strided_slice %674 {offsets = [0, 32], sizes = [8, 32], strides = [1, 1]} : vector<8x128xf32> to vector<8x32xf32>
    %678 = vector.extract_strided_slice %675 {offsets = [0, 64], sizes = [8, 32], strides = [1, 1]} : vector<8x128xf32> to vector<8x32xf32>
    %679 = vector.extract_strided_slice %674 {offsets = [0, 96], sizes = [8, 32], strides = [1, 1]} : vector<8x128xf32> to vector<8x32xf32>
    %680 = arith.mulf %677, %642 : vector<8x32xf32>
    %681 = arith.mulf %676, %678 : vector<8x32xf32>
    %682 = arith.addf %680, %681 : vector<8x32xf32>
    %683 = math.tanh %682 : vector<8x32xf32>
    %684 = arith.mulf %679, %683 : vector<8x32xf32>
    %c56_166 = arith.constant 56 : index
    %c0_167 = arith.constant 0 : index
    %685 = vector.load %arg12[%c56_166, %c0_167] : memref<64x64xf32, #tpu.memory_space<vmem>>, vector<8x32xf32>
    tpu.vector_store %arg12[%c56_166, %c0_167], %669 {strides = array<i32>} : memref<64x64xf32, #tpu.memory_space<vmem>>, vector<8x32xf32>,
    %c0_168 = arith.constant 0 : index
    %c32_169 = arith.constant 32 : index
    %686 = vector.load %arg12[%c0_168, %c32_169] : memref<64x64xf32, #tpu.memory_space<vmem>>, vector<8x32xf32>
    tpu.vector_store %arg12[%c0_168, %c32_169], %684 {strides = array<i32>} : memref<64x64xf32, #tpu.memory_space<vmem>>, vector<8x32xf32>,
    %c0_170 = arith.constant 0 : index
    %c0_171 = arith.constant 0 : index
    %687 = vector.load %arg12[%c0_170, %c0_171] : memref<64x64xf32, #tpu.memory_space<vmem>>, vector<64x64xf32>
    %688 = arith.truncf %687 : vector<64x64xf32> to vector<64x64xbf16>
    %c0_172 = arith.constant 0 : index
    %c0_173 = arith.constant 0 : index
    %689 = vector.load %arg7[%c0_172, %c0_173] : memref<64x32xbf16, #tpu.memory_space<vmem>>, vector<64x32xbf16>
    %cst_174 = arith.constant dense<0.000000e+00> : vector<64x32xf32>
    %690 = tpu.matmul %688, %689, %cst_174 {dimension_numbers = #tpu.dot_dimension_numbers<[1], [0], [0], [1], [0, 0, 1, 1], [], []>} : vector<64x64xbf16>, vector<64x32xbf16>, vector<64x32xf32> -> vector<64x32xf32>
    %c0_175 = arith.constant 0 : index
    %c0_176 = arith.constant 0 : index
    %691 = vector.load %arg8[%c0_175, %c0_176] : memref<1x32xf32, #tpu.memory_space<vmem>>, vector<1x32xf32>
    %692 = vector.broadcast %691 : vector<1x32xf32> to vector<64x32xf32>
    %693 = arith.addf %690, %692 : vector<64x32xf32>
    %cst_177 = arith.constant 0.000000e+00 : f32
    %694 = vector.broadcast %cst_177 : f32 to vector<64x32xf32>
    %695 = arith.maximumf %693, %694 : vector<64x32xf32>
    %696 = arith.truncf %695 : vector<64x32xf32> to vector<64x32xbf16>
    %c0_178 = arith.constant 0 : index
    %c0_179 = arith.constant 0 : index
    %697 = vector.load %arg9[%c0_178, %c0_179] : memref<32x16xbf16, #tpu.memory_space<vmem>>, vector<32x16xbf16>
    %cst_180 = arith.constant dense<0.000000e+00> : vector<64x16xf32>
    %698 = tpu.matmul %696, %697, %cst_180 {dimension_numbers = #tpu.dot_dimension_numbers<[1], [0], [0], [1], [0, 0, 1, 1], [], []>} : vector<64x32xbf16>, vector<32x16xbf16>, vector<64x16xf32> -> vector<64x16xf32>
    %c0_181 = arith.constant 0 : index
    %c0_182 = arith.constant 0 : index
    %699 = vector.load %arg10[%c0_181, %c0_182] : memref<1x16xf32, #tpu.memory_space<vmem>>, vector<1x16xf32>
    %700 = vector.broadcast %699 : vector<1x16xf32> to vector<64x16xf32>
    %701 = arith.addf %698, %700 : vector<64x16xf32>
    %c0_183 = arith.constant 0 : index
    %c0_184 = arith.constant 0 : index
    %702 = vector.load %arg11[%c0_183, %c0_184] : memref<64x16xf32, #tpu.memory_space<vmem>>, vector<64x16xf32>
    tpu.vector_store %arg11[%c0_183, %c0_184], %701 {strides = array<i32>} : memref<64x16xf32, #tpu.memory_space<vmem>>, vector<64x16xf32>,
    return
  }
}

</mosaic_0001>

<llo_original>
// kernel: twi_tts_forward.1
$region0: #{twi_tts_forward.1}
  #allocation0 [shape = 'u32[]', space=smem, size = 0x4, offset = 0x4, fixed_abs, tag = 'smem constant byte address 0x4 - core index']
  #allocation1 [shape = 'u32[144,128]{1,0:T(1,128)}', space=vmem, size = 0x12000, scoped, tag = 'internal scratch']
  #allocation2 [shape = 'f32[64,64]{1,0:T(8,128)}', space=vmem, size = 0x8000, scoped, tag = 'scratch operand']
  %s0 = inlined_call_operand.vmem [shape: bf16[64,32], index: 0, kind: input, shape index: {}]
  %s1 = inlined_call_operand.hbm [shape: bf16[2,32,128], index: 1, kind: input, shape index: {}]
  %s2 = inlined_call_operand.hbm [shape: bf16[2,32,128], index: 2, kind: input, shape index: {}]
  %s3 = inlined_call_operand.hbm [shape: f32[2,1,128], index: 3, kind: input, shape index: {}]
  %s4 = inlined_call_operand.vmem [shape: bf16[2,64,128], index: 4, kind: input, shape index: {}]
  %s5 = inlined_call_operand.vmem [shape: bf16[2,32,128], index: 5, kind: input, shape index: {}]
  %s6 = inlined_call_operand.hbm [shape: f32[2,1,128], index: 6, kind: input, shape index: {}]
  %s7 = inlined_call_operand.vmem [shape: bf16[64,32], index: 7, kind: input, shape index: {}]
  %s8 = inlined_call_operand.hbm [shape: f32[1,32], index: 8, kind: input, shape index: {}]
  %s9 = inlined_call_operand.hbm [shape: bf16[32,16], index: 9, kind: input, shape index: {}]
  %s10 = inlined_call_operand.vmem [shape: f32[1,16], index: 10, kind: input, shape index: {}]
  %s11 = inlined_call_operand.vmem [shape: f32[64,16], index: 11, kind: output, shape index: {}]
  %s12 = sld [smem:[#allocation0]]
  $region78: #{twi_tts_forward.1} parent=0
    _
  %s14 = ssub.s32 1, %s12
  %s15 = scalar_select 0, %s14, %s12
  $region1: #{twi_tts_forward.1} parent=0
    #allocation3 [shape = 'u8[16384]{0}', space=vmem, size = 0x4000, scoped, tag = 'input window, operand 1, single buffered']
    #allocation4 [shape = 's32[1]{0}', space=sflag, size = 0x4, scoped, tag = 'scoped memory for twi_tts_forward.1']
    #allocation5 [shape = 'u8[16384]{0}', space=vmem, size = 0x4000, scoped, tag = 'input window, operand 2, single buffered']
    #allocation6 [shape = 's32[1]{0}', space=sflag, size = 0x4, scoped, tag = 'scoped memory for twi_tts_forward.1']
    #allocation7 [shape = 'u8[1024]{0}', space=vmem, size = 0x400, scoped, tag = 'input window, operand 3, single buffered']
    #allocation8 [shape = 'u8[1024]{0}', space=vmem, size = 0x400, scoped, tag = 'input window, operand 6, single buffered']
    #allocation9 [shape = 's32[1]{0}', space=sflag, size = 0x4, scoped, tag = 'scoped memory for twi_tts_forward.1']
    #allocation10 [shape = 'u8[512]{0}', space=vmem, size = 0x400, scoped, tag = 'input window, operand 8, single buffered']
    #allocation11 [shape = 'u8[8192]{0}', space=vmem, size = 0x2000, scoped, tag = 'input window, operand 9, single buffered']
    #allocation12 [shape = 's32[1]{0}', space=sflag, size = 0x4, scoped, tag = 'scoped memory for twi_tts_forward.1']
    %16 = vsyncpa [#allocation4], 0
    %17 = vsyncpa [#allocation6], 0
    %18 = vsyncpa [#allocation9], 0
    %19 = vsyncpa [#allocation12], 0
    // Predicated region
    $region2: #{twi_tts_forward.1} parent=1 // pred_check
      _
    $region3: #{twi_tts_forward.1} parent=1 // pred_check_branch
      %21 = sbr.rel (0) target = $region5
    $region4: #{twi_tts_forward.1} parent=1 // pred_region
      _
    $region5: #{twi_tts_forward.1} parent=1 // pred_fallthru
      _
    // Predicated region
    $region6: #{twi_tts_forward.1} parent=1 // pred_check
      _
    $region7: #{twi_tts_forward.1} parent=1 // pred_check_branch
      %23 = sbr.rel (0) target = $region9
    $region8: #{twi_tts_forward.1} parent=1 // pred_region
      %s25 = ssub.s32 512, 512
      %26 = vsyncadd [#allocation4], %s25
      %s27 = sshll.u32 [#allocation3], 4
      %s28 = int_to_ptr.vmem [resolvable:$true] %s27
      %33 = dma.hbm_to_vmem [thread:$0]  %s1, 512, %s28, [#allocation4], 64, 64, 4
    $region9: #{twi_tts_forward.1} parent=1 // pred_fallthru
      _
    // Predicated region
    $region10: #{twi_tts_forward.1} parent=1 // pred_check
      _
    $region11: #{twi_tts_forward.1} parent=1 // pred_check_branch
      %35 = sbr.rel (0) target = $region13
    $region12: #{twi_tts_forward.1} parent=1 // pred_region
      %s37 = ssub.s32 512, 512
      %38 = vsyncadd [#allocation6], %s37
      %s39 = sshll.u32 [#allocation5], 4
      %s40 = int_to_ptr.vmem [resolvable:$true] %s39
      %45 = dma.hbm_to_vmem [thread:$0]  %s2, 512, %s40, [#allocation6], 64, 64, 4
    $region13: #{twi_tts_forward.1} parent=1 // pred_fallthru
      _
    // Predicated region
    $region14: #{twi_tts_forward.1} parent=1 // pred_check
      _
    $region15: #{twi_tts_forward.1} parent=1 // pred_check_branch
      %47 = sbr.rel (0) target = $region17
    $region16: #{twi_tts_forward.1} parent=1 // pred_region
      %s49 = ssub.s32 32, 32
      %50 = vsyncadd [#allocation6], %s49
      %s51 = sshll.u32 [#allocation7], 4
      %s52 = int_to_ptr.vmem [resolvable:$true] %s51
      %57 = dma.hbm_to_vmem [thread:$0]  %s3, 32, %s52, [#allocation6], 16, 16, 1
    $region17: #{twi_tts_forward.1} parent=1 // pred_fallthru
      _
    // Predicated region
    $region18: #{twi_tts_forward.1} parent=1 // pred_check
      _
    $region19: #{twi_tts_forward.1} parent=1 // pred_check_branch
      %59 = sbr.rel (0) target = $region21
    $region20: #{twi_tts_forward.1} parent=1 // pred_region
      _
    $region21: #{twi_tts_forward.1} parent=1 // pred_fallthru
      _
    // Predicated region
    $region22: #{twi_tts_forward.1} parent=1 // pred_check
      _
    $region23: #{twi_tts_forward.1} parent=1 // pred_check_branch
      %61 = sbr.rel (0) target = $region25
    $region24: #{twi_tts_forward.1} parent=1 // pred_region
      _
    $region25: #{twi_tts_forward.1} parent=1 // pred_fallthru
      _
    // Predicated region
    $region26: #{twi_tts_forward.1} parent=1 // pred_check
      _
    $region27: #{twi_tts_forward.1} parent=1 // pred_check_branch
      %63 = sbr.rel (0) target = $region29
    $region28: #{twi_tts_forward.1} parent=1 // pred_region
      %s65 = ssub.s32 32, 32
      %66 = vsyncadd [#allocation9], %s65
      %s67 = sshll.u32 [#allocation8], 4
      %s68 = int_to_ptr.vmem [resolvable:$true] %s67
      %73 = dma.hbm_to_vmem [thread:$0]  %s6, 32, %s68, [#allocation9], 16, 16, 1
    $region29: #{twi_tts_forward.1} parent=1 // pred_fallthru
      _
    // Predicated region
    $region30: #{twi_tts_forward.1} parent=1 // pred_check
      _
    $region31: #{twi_tts_forward.1} parent=1 // pred_check_branch
      %75 = sbr.rel (0) target = $region33
    $region32: #{twi_tts_forward.1} parent=1 // pred_region
      _
    $region33: #{twi_tts_forward.1} parent=1 // pred_fallthru
      _
    // Predicated region
    $region34: #{twi_tts_forward.1} parent=1 // pred_check
      _
    $region35: #{twi_tts_forward.1} parent=1 // pred_check_branch
      %77 = sbr.rel (0) target = $region37
    $region36: #{twi_tts_forward.1} parent=1 // pred_region
      %s79 = ssub.s32 16, 16
      %80 = vsyncadd [#allocation9], %s79
      %s82 = sshll.u32 [#allocation10], 4
      %s83 = int_to_ptr.vmem [resolvable:$true] %s82
      %85 = dma.hbm_to_vmem [thread:$0]  %s8, 16, %s83, [#allocation9]
    $region37: #{twi_tts_forward.1} parent=1 // pred_fallthru
      _
    // Predicated region
    $region38: #{twi_tts_forward.1} parent=1 // pred_check
      _
    $region39: #{twi_tts_forward.1} parent=1 // pred_check_branch
      %87 = sbr.rel (0) target = $region41
    $region40: #{twi_tts_forward.1} parent=1 // pred_region
      %s89 = ssub.s32 256, 256
      %90 = vsyncadd [#allocation12], %s89
      %s91 = sshll.u32 [#allocation11], 4
      %s92 = int_to_ptr.vmem [resolvable:$true] %s91
      %97 = dma.hbm_to_vmem [thread:$0]  %s9, 256, %s92, [#allocation12], 64, 64, 4
    $region41: #{twi_tts_forward.1} parent=1 // pred_fallthru
      _
    // Predicated region
    $region42: #{twi_tts_forward.1} parent=1 // pred_check
      _
    $region43: #{twi_tts_forward.1} parent=1 // pred_check_branch
      %99 = sbr.rel (0) target = $region45
    $region44: #{twi_tts_forward.1} parent=1 // pred_region
      _
    $region45: #{twi_tts_forward.1} parent=1 // pred_fallthru
      _
    // Predicated region
    $region46: #{twi_tts_forward.1} parent=1 // pred_check
      _
    $region47: #{twi_tts_forward.1} parent=1 // pred_check_branch
      %101 = sbr.rel (0) target = $region49
    $region48: #{twi_tts_forward.1} parent=1 // pred_region
      %102 = dma.done [#allocation4], 512
    $region49: #{twi_tts_forward.1} parent=1 // pred_fallthru
      _
    // Predicated region
    $region50: #{twi_tts_forward.1} parent=1 // pred_check
      _
    $region51: #{twi_tts_forward.1} parent=1 // pred_check_branch
      %104 = sbr.rel (0) target = $region53
    $region52: #{twi_tts_forward.1} parent=1 // pred_region
      %105 = dma.done [#allocation6], 512
    $region53: #{twi_tts_forward.1} parent=1 // pred_fallthru
      _
    // Predicated region
    $region54: #{twi_tts_forward.1} parent=1 // pred_check
      _
    $region55: #{twi_tts_forward.1} parent=1 // pred_check_branch
      %107 = sbr.rel (0) target = $region57
    $region56: #{twi_tts_forward.1} parent=1 // pred_region
      %108 = dma.done [#allocation6], 32
    $region57: #{twi_tts_forward.1} parent=1 // pred_fallthru
      _
    // Predicated region
    $region58: #{twi_tts_forward.1} parent=1 // pred_check
      _
    $region59: #{twi_tts_forward.1} parent=1 // pred_check_branch
      %110 = sbr.rel (0) target = $region61
    $region60: #{twi_tts_forward.1} parent=1 // pred_region
      %111 = dma.done [#allocation9], 32
    $region61: #{twi_tts_forward.1} parent=1 // pred_fallthru
      _
    // Predicated region
    $region62: #{twi_tts_forward.1} parent=1 // pred_check
      _
    $region63: #{twi_tts_forward.1} parent=1 // pred_check_branch
      %113 = sbr.rel (0) target = $region65
    $region64: #{twi_tts_forward.1} parent=1 // pred_region
      %114 = dma.done [#allocation9], 16
    $region65: #{twi_tts_forward.1} parent=1 // pred_fallthru
      _
    // Predicated region
    $region66: #{twi_tts_forward.1} parent=1 // pred_check
      _
    $region67: #{twi_tts_forward.1} parent=1 // pred_check_branch
      %116 = sbr.rel (0) target = $region69
    $region68: #{twi_tts_forward.1} parent=1 // pred_region
      %117 = dma.done [#allocation12], 256
    $region69: #{twi_tts_forward.1} parent=1 // pred_fallthru
      _
    %v119 = vld [vmem:[%s0] sm:$0xf]
    %v120 = vld [vmem:[%s0 + $0x4] sm:$0xf]
    %v121 = vld [vmem:[%s0 + $0x8] sm:$0xf]
    %v122 = vld [vmem:[%s0 + $0xc] sm:$0xf]
    %v123 = vld [vmem:[%s0 + $0x10] sm:$0xf]
    %v124 = vld [vmem:[%s0 + $0x14] sm:$0xf]
    %v125 = vld [vmem:[%s0 + $0x18] sm:$0xf]
    %v126 = vld [vmem:[%s0 + $0x1c] sm:$0xf]
    %v127 = vld [vmem:[#allocation3] sm:$0xf]
    %v128 = vld [vmem:[#allocation3 + $0x4] sm:$0xf]
    %v129 = vld [vmem:[#allocation3 + $0x8] sm:$0xf]
    %v130 = vld [vmem:[#allocation3 + $0xc] sm:$0xf]
    %v131 = vld [vmem:[#allocation7] sm:$0x1]
    %v133 = vlaneseq
    %v134 = vshrl.u32 %v133, 7
    %v135 = vsub.s32 0, %v134
    %v136 = vrot.slane %v131, %v135
    %v146 = vunpack.c.l.b16 %v119
    %v147 = vunpack.c.l.b16 %v120
    %v148 = vunpack.c.l.b16 %v121
    %v149 = vunpack.c.l.b16 %v122
    %v150 = vunpack.c.l.b16 %v123
    %v151 = vunpack.c.l.b16 %v124
    %v152 = vunpack.c.l.b16 %v125
    %v153 = vunpack.c.l.b16 %v126
    %v154 = vpack.c.b16 %v147, %v146
    %v155 = vpack.c.b16 %v149, %v148
    %v156 = vpack.c.b16 %v151, %v150
    %v157 = vpack.c.b16 %v153, %v152
    %v162 = vunpack.c.l.b16 %v127
    %v163 = vunpack.c.l.b16 %v128
    %v164 = vunpack.c.l.b16 %v129
    %v165 = vunpack.c.l.b16 %v130
    %v166 = vpack.c.b16 %v163, %v162
    %v167 = vpack.c.b16 %v165, %v164
    %vm170 = vcmask 261120
    %v172 = vsel %vm170, %v154, 0
    %v175 = vsel %vm170, %v155, 0
    %v178 = vsel %vm170, %v156, 0
    %v181 = vsel %vm170, %v157, 0
    %183 = vmatprep.subr.bf16.mxu0 0
    %184 = vmatpush1.bf16.msra.mxu0 %v166
    %185 = vmatprep.subr.bf16.mxu0 0
    %186 = vmatpush1.bf16.msra.mxu0 %v167
    %187 = vmatprep.subr.bf16.mxu0 0
    %188 = vmatpush1.bf16.msra.mxu0 0
    %189 = vmatprep.subr.bf16.mxu0 0
    %190 = vmatpush1.bf16.msra.mxu0 0
    %191 = vmatprep.subr.bf16.mxu0 0
    %192 = vmatpush1.bf16.msra.mxu0 0
    %193 = vmatprep.subr.bf16.mxu0 0
    %194 = vmatpush1.bf16.msra.mxu0 0
    %195 = vmatprep.subr.bf16.mxu0 0
    %196 = vmatpush1.bf16.msra.mxu0 0
    %197 = vmatprep.subr.bf16.mxu0 0
    %198 = vmatpush1.bf16.msra.mxu0 0
    %199 = vmatprep.subr.bf16.mxu0 0
    %200 = vmatpush1.bf16.msra.mxu0 0
    %201 = vmatprep.subr.bf16.mxu0 0
    %202 = vmatpush1.bf16.msra.mxu0 0
    %203 = vmatprep.subr.bf16.mxu0 0
    %204 = vmatpush1.bf16.msra.mxu0 0
    %205 = vmatprep.subr.bf16.mxu0 0
    %206 = vmatpush1.bf16.msra.mxu0 0
    %207 = vmatprep.subr.bf16.mxu0 0
    %208 = vmatpush1.bf16.msra.mxu0 0
    %209 = vmatprep.subr.bf16.mxu0 0
    %210 = vmatpush1.bf16.msra.mxu0 0
    %211 = vmatprep.subr.bf16.mxu0 0
    %212 = vmatpush1.bf16.msra.mxu0 0
    %213 = vmatprep.subr.bf16.mxu0 0
    %214 = vmatpush1.bf16.msra.mxu0 0
    %215 = vmatprep.mubr.bf16.mxu0 0
    %216 = vmatmul.mubr.bf16.gmra.mrb[0].mxu0 %v172
    %v217 = vpop.f32.mrb[0].mxu0
    %v218 = vadd.f32 %v136, %v217
    %v219 = vpop.f32.mrb[0].mxu0
    %v220 = vpop.f32.mrb[0].mxu0
    %v221 = vadd.f32 %v136, %v220
    %v222 = vpop.f32.mrb[0].mxu0
    %223 = vmatprep.mubr.bf16.mxu0 0
    %224 = vmatmul.mubr.bf16.gmra.mrb[0].mxu0 %v175
    %v225 = vpop.f32.mrb[0].mxu0
    %v226 = vadd.f32 %v136, %v225
    %v227 = vpop.f32.mrb[0].mxu0
    %v228 = vpop.f32.mrb[0].mxu0
    %v229 = vadd.f32 %v136, %v228
    %v230 = vpop.f32.mrb[0].mxu0
    %231 = vmatprep.mubr.bf16.mxu0 0
    %232 = vmatmul.mubr.bf16.gmra.mrb[0].mxu0 %v178
    %v233 = vpop.f32.mrb[0].mxu0
    %v234 = vadd.f32 %v136, %v233
    %v235 = vpop.f32.mrb[0].mxu0
    %v236 = vpop.f32.mrb[0].mxu0
    %v237 = vadd.f32 %v136, %v236
    %v238 = vpop.f32.mrb[0].mxu0
    %239 = vmatprep.mubr.bf16.mxu0 0
    %240 = vmatmul.mubr.bf16.gmra.mrb[0].mxu0 %v181
    %v241 = vpop.f32.mrb[0].mxu0
    %v242 = vadd.f32 %v136, %v241
    %v243 = vpop.f32.mrb[0].mxu0
    %v244 = vpop.f32.mrb[0].mxu0
    %v245 = vadd.f32 %v136, %v244
    %v246 = vpop.f32.mrb[0].mxu0
    %247 = vdwg.mxu0
    %s248 = scalar_lea.vmem [#allocation3], 16
    %v249 = vld [vmem:[%s248] sm:$0xf]
    %v250 = vld [vmem:[%s248 + $0x4] sm:$0xf]
    %v251 = vld [vmem:[%s248 + $0x8] sm:$0xf]
    %v252 = vld [vmem:[%s248 + $0xc] sm:$0xf]
    %s253 = scalar_lea.vmem [#allocation7], 1
    %v254 = vld [vmem:[%s253] sm:$0x1]
    %v256 = vlaneseq
    %v257 = vshrl.u32 %v256, 7
    %v258 = vsub.s32 0, %v257
    %v259 = vrot.slane %v254, %v258
    %v265 = vunpack.c.l.b16 %v249
    %v266 = vunpack.c.l.b16 %v250
    %v267 = vunpack.c.l.b16 %v251
    %v268 = vunpack.c.l.b16 %v252
    %v269 = vpack.c.b16 %v266, %v265
    %v270 = vpack.c.b16 %v268, %v267
    %273 = vmatprep.subr.bf16.mxu0 0
    %274 = vmatpush1.bf16.msra.mxu0 %v269
    %275 = vmatprep.subr.bf16.mxu0 0
    %276 = vmatpush1.bf16.msra.mxu0 %v270
    %277 = vmatprep.subr.bf16.mxu0 0
    %278 = vmatpush1.bf16.msra.mxu0 0
    %279 = vmatprep.subr.bf16.mxu0 0
    %280 = vmatpush1.bf16.msra.mxu0 0
    %281 = vmatprep.subr.bf16.mxu0 0
    %282 = vmatpush1.bf16.msra.mxu0 0
    %283 = vmatprep.subr.bf16.mxu0 0
    %284 = vmatpush1.bf16.msra.mxu0 0
    %285 = vmatprep.subr.bf16.mxu0 0
    %286 = vmatpush1.bf16.msra.mxu0 0
    %287 = vmatprep.subr.bf16.mxu0 0
    %288 = vmatpush1.bf16.msra.mxu0 0
    %289 = vmatprep.subr.bf16.mxu0 0
    %290 = vmatpush1.bf16.msra.mxu0 0
    %291 = vmatprep.subr.bf16.mxu0 0
    %292 = vmatpush1.bf16.msra.mxu0 0
    %293 = vmatprep.subr.bf16.mxu0 0
    %294 = vmatpush1.bf16.msra.mxu0 0
    %295 = vmatprep.subr.bf16.mxu0 0
    %296 = vmatpush1.bf16.msra.mxu0 0
    %297 = vmatprep.subr.bf16.mxu0 0
    %298 = vmatpush1.bf16.msra.mxu0 0
    %299 = vmatprep.subr.bf16.mxu0 0
    %300 = vmatpush1.bf16.msra.mxu0 0
    %301 = vmatprep.subr.bf16.mxu0 0
    %302 = vmatpush1.bf16.msra.mxu0 0
    %303 = vmatprep.subr.bf16.mxu0 0
    %304 = vmatpush1.bf16.msra.mxu0 0
    %305 = vmatprep.mubr.bf16.mxu0 0
    %306 = vmatmul.mubr.bf16.gmra.mrb[0].mxu0 %v172
    %v307 = vpop.f32.mrb[0].mxu0
    %v308 = vadd.f32 %v259, %v307
    %v309 = vpop.f32.mrb[0].mxu0
    %v310 = vpop.f32.mrb[0].mxu0
    %v311 = vadd.f32 %v259, %v310
    %v312 = vpop.f32.mrb[0].mxu0
    %313 = vmatprep.mubr.bf16.mxu0 0
    %314 = vmatmul.mubr.bf16.gmra.mrb[0].mxu0 %v175
    %v315 = vpop.f32.mrb[0].mxu0
    %v316 = vadd.f32 %v259, %v315
    %v317 = vpop.f32.mrb[0].mxu0
    %v318 = vpop.f32.mrb[0].mxu0
    %v319 = vadd.f32 %v259, %v318
    %v320 = vpop.f32.mrb[0].mxu0
    %321 = vmatprep.mubr.bf16.mxu0 0
    %322 = vmatmul.mubr.bf16.gmra.mrb[0].mxu0 %v178
    %v323 = vpop.f32.mrb[0].mxu0
    %v324 = vadd.f32 %v259, %v323
    %v325 = vpop.f32.mrb[0].mxu0
    %v326 = vpop.f32.mrb[0].mxu0
    %v327 = vadd.f32 %v259, %v326
    %v328 = vpop.f32.mrb[0].mxu0
    %329 = vmatprep.mubr.bf16.mxu0 0
    %330 = vmatmul.mubr.bf16.gmra.mrb[0].mxu0 %v181
    %v331 = vpop.f32.mrb[0].mxu0
    %v332 = vadd.f32 %v259, %v331
    %v333 = vpop.f32.mrb[0].mxu0
    %v334 = vpop.f32.mrb[0].mxu0
    %v335 = vadd.f32 %v259, %v334
    %v336 = vpop.f32.mrb[0].mxu0
    %337 = vdwg.mxu0
    %v338 = vld [vmem:[#allocation5] sm:$0xf]
    %v339 = vld [vmem:[#allocation5 + $0x4] sm:$0xf]
    %v340 = vld [vmem:[#allocation5 + $0x8] sm:$0xf]
    %v341 = vld [vmem:[#allocation5 + $0xc] sm:$0xf]
    %s342 = scalar_lea.vmem [#allocation5], 16
    %v343 = vld [vmem:[%s342] sm:$0xf]
    %v344 = vld [vmem:[%s342 + $0x4] sm:$0xf]
    %v345 = vld [vmem:[%s342 + $0x8] sm:$0xf]
    %v346 = vld [vmem:[%s342 + $0xc] sm:$0xf]
    %v351 = vunpack.c.l.b16 %v338
    %v352 = vunpack.c.l.b16 %v339
    %v353 = vunpack.c.l.b16 %v340
    %v354 = vunpack.c.l.b16 %v341
    %v355 = vpack.c.b16 %v352, %v351
    %v356 = vpack.c.b16 %v354, %v353
    %v360 = vsel %vm170, 0, 0
    %362 = vmatprep.subr.bf16.mxu0 0
    %363 = vmatpush1.bf16.msra.mxu0 %v355
    %364 = vmatprep.subr.bf16.mxu0 0
    %365 = vmatpush1.bf16.msra.mxu0 %v356
    %366 = vmatprep.subr.bf16.mxu0 0
    %367 = vmatpush1.bf16.msra.mxu0 0
    %368 = vmatprep.subr.bf16.mxu0 0
    %369 = vmatpush1.bf16.msra.mxu0 0
    %370 = vmatprep.subr.bf16.mxu0 0
    %371 = vmatpush1.bf16.msra.mxu0 0
    %372 = vmatprep.subr.bf16.mxu0 0
    %373 = vmatpush1.bf16.msra.mxu0 0
    %374 = vmatprep.subr.bf16.mxu0 0
    %375 = vmatpush1.bf16.msra.mxu0 0
    %376 = vmatprep.subr.bf16.mxu0 0
    %377 = vmatpush1.bf16.msra.mxu0 0
    %378 = vmatprep.subr.bf16.mxu0 0
    %379 = vmatpush1.bf16.msra.mxu0 0
    %380 = vmatprep.subr.bf16.mxu0 0
    %381 = vmatpush1.bf16.msra.mxu0 0
    %382 = vmatprep.subr.bf16.mxu0 0
    %383 = vmatpush1.bf16.msra.mxu0 0
    %384 = vmatprep.subr.bf16.mxu0 0
    %385 = vmatpush1.bf16.msra.mxu0 0
    %386 = vmatprep.subr.bf16.mxu0 0
    %387 = vmatpush1.bf16.msra.mxu0 0
    %388 = vmatprep.subr.bf16.mxu0 0
    %389 = vmatpush1.bf16.msra.mxu0 0
    %390 = vmatprep.subr.bf16.mxu0 0
    %391 = vmatpush1.bf16.msra.mxu0 0
    %392 = vmatprep.subr.bf16.mxu0 0
    %393 = vmatpush1.bf16.msra.mxu0 0
    %394 = vmatprep.mubr.bf16.mxu0 0
    %395 = vmatmul.mubr.bf16.gmra.mrb[0].mxu0 %v360
    %v396 = vpop.f32.mrb[0].mxu0
    %v397 = vadd.f32 0.0, %v396
    %v398 = vpop.f32.mrb[0].mxu0
    %v399 = vpop.f32.mrb[0].mxu0
    %v400 = vpop.f32.mrb[0].mxu0
    %401 = vdwg.mxu0
    %v402 = vadd.f32 %v218, %v397
    %v407 = vunpack.c.l.b16 %v343
    %v408 = vunpack.c.l.b16 %v344
    %v409 = vunpack.c.l.b16 %v345
    %v410 = vunpack.c.l.b16 %v346
    %v411 = vpack.c.b16 %v408, %v407
    %v412 = vpack.c.b16 %v410, %v409
    %415 = vmatprep.subr.bf16.mxu0 0
    %416 = vmatpush1.bf16.msra.mxu0 %v411
    %417 = vmatprep.subr.bf16.mxu0 0
    %418 = vmatpush1.bf16.msra.mxu0 %v412
    %419 = vmatprep.subr.bf16.mxu0 0
    %420 = vmatpush1.bf16.msra.mxu0 0
    %421 = vmatprep.subr.bf16.mxu0 0
    %422 = vmatpush1.bf16.msra.mxu0 0
    %423 = vmatprep.subr.bf16.mxu0 0
    %424 = vmatpush1.bf16.msra.mxu0 0
    %425 = vmatprep.subr.bf16.mxu0 0
    %426 = vmatpush1.bf16.msra.mxu0 0
    %427 = vmatprep.subr.bf16.mxu0 0
    %428 = vmatpush1.bf16.msra.mxu0 0
    %429 = vmatprep.subr.bf16.mxu0 0
    %430 = vmatpush1.bf16.msra.mxu0 0
    %431 = vmatprep.subr.bf16.mxu0 0
    %432 = vmatpush1.bf16.msra.mxu0 0
    %433 = vmatprep.subr.bf16.mxu0 0
    %434 = vmatpush1.bf16.msra.mxu0 0
    %435 = vmatprep.subr.bf16.mxu0 0
    %436 = vmatpush1.bf16.msra.mxu0 0
    %437 = vmatprep.subr.bf16.mxu0 0
    %438 = vmatpush1.bf16.msra.mxu0 0
    %439 = vmatprep.subr.bf16.mxu0 0
    %440 = vmatpush1.bf16.msra.mxu0 0
    %441 = vmatprep.subr.bf16.mxu0 0
    %442 = vmatpush1.bf16.msra.mxu0 0
    %443 = vmatprep.subr.bf16.mxu0 0
    %444 = vmatpush1.bf16.msra.mxu0 0
    %445 = vmatprep.subr.bf16.mxu0 0
    %446 = vmatpush1.bf16.msra.mxu0 0
    %447 = vmatprep.mubr.bf16.mxu0 0
    %448 = vmatmul.mubr.bf16.gmra.mrb[0].mxu0 %v360
    %v449 = vpop.f32.mrb[0].mxu0
    %v450 = vadd.f32 0.0, %v449
    %v451 = vpop.f32.mrb[0].mxu0
    %v452 = vpop.f32.mrb[0].mxu0
    %v453 = vpop.f32.mrb[0].mxu0
    %454 = vdwg.mxu0
    %v455 = vadd.f32 %v335, %v450
    %v456 = vxor.u32 %v402, 2147483648
    %v457 = vmul.f32 %v456, 1.442695
    %v458 = vpow.pop %v457
    %v459 = vadd.f32 %v458, 1.0
    %v460 = vrcp.pop %v459
    %v461 = vmul.f32 1.0, %v460
    %v462 = vtanh.pop %v402
    %v463 = vmul.f32 %v461, 0.0
    %465 = vrot.lane.b32.xlu0 %v462, 64
    %v466 = vpop.permute.xlu0 %465
    %v468 = vmul.f32 %v461, %v466
    %470 = vrot.lane.b32.xlu0 %v468, 32
    %v471 = vpop.permute.xlu0 %470
    %v473 = vadd.f32 %v463, %v471
    %v474 = vtanh.pop %v473
    %476 = vrot.lane.b32.xlu0 %v474, 64
    %v477 = vpop.permute.xlu0 %476
    %v479 = vmul.f32 %v461, %v477
    %v480 = vxor.u32 %v455, 2147483648
    %v481 = vmul.f32 %v480, 1.442695
    %v482 = vpow.pop %v481
    %v483 = vadd.f32 %v482, 1.0
    %v484 = vrcp.pop %v483
    %v485 = vmul.f32 1.0, %v484
    %v486 = vtanh.pop %v455
    %v487 = vmul.f32 %v485, 0.0
    %489 = vrot.lane.b32.xlu0 %v486, 64
    %v490 = vpop.permute.xlu0 %489
    %v492 = vmul.f32 %v485, %v490
    %494 = vrot.lane.b32.xlu0 %v492, 32
    %v495 = vpop.permute.xlu0 %494
    %v497 = vadd.f32 %v487, %v495
    %v498 = vtanh.pop %v497
    %500 = vrot.lane.b32.xlu0 %v498, 64
    %v501 = vpop.permute.xlu0 %500
    %v503 = vmul.f32 %v485, %v501
    %505 = vrot.lane.b32.xlu0 %v479, 32
    %v506 = vpop.permute.xlu0 %505
    %508 = vst.msk [vmem:[#allocation2] sm:$0xff] %vm170, %v506
    %510 = vrot.lane.b32.xlu0 %v503, 64
    %v511 = vpop.permute.xlu0 %510
    %vm513 = vcmask 523520
    %514 = vst.msk [vmem:[#allocation2 + $0x38] sm:$0xff] %vm513, %v511
    %v515 = vpack.c.bf16 %v479, %v479
    %517 = vrot.lane.b32.xlu0 %v515, 32
    %v518 = vpop.permute.xlu0 %517
    %v520 = vsel %vm170, %v518, 0
    %522 = vmatprep.subr.bf16.mxu0 0
    %523 = vmatpush1.bf16.msra.mxu0 %v355
    %524 = vmatprep.subr.bf16.mxu0 0
    %525 = vmatpush1.bf16.msra.mxu0 %v356
    %526 = vmatprep.subr.bf16.mxu0 0
    %527 = vmatpush1.bf16.msra.mxu0 0
    %528 = vmatprep.subr.bf16.mxu0 0
    %529 = vmatpush1.bf16.msra.mxu0 0
    %530 = vmatprep.subr.bf16.mxu0 0
    %531 = vmatpush1.bf16.msra.mxu0 0
    %532 = vmatprep.subr.bf16.mxu0 0
    %533 = vmatpush1.bf16.msra.mxu0 0
    %534 = vmatprep.subr.bf16.mxu0 0
    %535 = vmatpush1.bf16.msra.mxu0 0
    %536 = vmatprep.subr.bf16.mxu0 0
    %537 = vmatpush1.bf16.msra.mxu0 0
    %538 = vmatprep.subr.bf16.mxu0 0
    %539 = vmatpush1.bf16.msra.mxu0 0
    %540 = vmatprep.subr.bf16.mxu0 0
    %541 = vmatpush1.bf16.msra.mxu0 0
    %542 = vmatprep.subr.bf16.mxu0 0
    %543 = vmatpush1.bf16.msra.mxu0 0
    %544 = vmatprep.subr.bf16.mxu0 0
    %545 = vmatpush1.bf16.msra.mxu0 0
    %546 = vmatprep.subr.bf16.mxu0 0
    %547 = vmatpush1.bf16.msra.mxu0 0
    %548 = vmatprep.subr.bf16.mxu0 0
    %549 = vmatpush1.bf16.msra.mxu0 0
    %550 = vmatprep.subr.bf16.mxu0 0
    %551 = vmatpush1.bf16.msra.mxu0 0
    %552 = vmatprep.subr.bf16.mxu0 0
    %553 = vmatpush1.bf16.msra.mxu0 0
    %554 = vmatprep.mubr.bf16.mxu0 0
    %555 = vmatmul.mubr.bf16.gmra.mrb[0].mxu0 %v520
    %v556 = vpop.f32.mrb[0].mxu0
    %v557 = vadd.f32 0.0, %v556
    %v558 = vpop.f32.mrb[0].mxu0
    %v559 = vpop.f32.mrb[0].mxu0
    %v560 = vpop.f32.mrb[0].mxu0
    %561 = vdwg.mxu0
    %v562 = vadd.f32 %v221, %v557
    %v563 = vpack.c.bf16 %v503, %v503
    %565 = vrot.lane.b32.xlu0 %v563, 32
    %v566 = vpop.permute.xlu0 %565
    %v568 = vsel %vm170, %v566, 0
    %570 = vmatprep.subr.bf16.mxu0 0
    %571 = vmatpush1.bf16.msra.mxu0 %v411
    %572 = vmatprep.subr.bf16.mxu0 0
    %573 = vmatpush1.bf16.msra.mxu0 %v412
    %574 = vmatprep.subr.bf16.mxu0 0
    %575 = vmatpush1.bf16.msra.mxu0 0
    %576 = vmatprep.subr.bf16.mxu0 0
    %577 = vmatpush1.bf16.msra.mxu0 0
    %578 = vmatprep.subr.bf16.mxu0 0
    %579 = vmatpush1.bf16.msra.mxu0 0
    %580 = vmatprep.subr.bf16.mxu0 0
    %581 = vmatpush1.bf16.msra.mxu0 0
    %582 = vmatprep.subr.bf16.mxu0 0
    %583 = vmatpush1.bf16.msra.mxu0 0
    %584 = vmatprep.subr.bf16.mxu0 0
    %585 = vmatpush1.bf16.msra.mxu0 0
    %586 = vmatprep.subr.bf16.mxu0 0
    %587 = vmatpush1.bf16.msra.mxu0 0
    %588 = vmatprep.subr.bf16.mxu0 0
    %589 = vmatpush1.bf16.msra.mxu0 0
    %590 = vmatprep.subr.bf16.mxu0 0
    %591 = vmatpush1.bf16.msra.mxu0 0
    %592 = vmatprep.subr.bf16.mxu0 0
    %593 = vmatpush1.bf16.msra.mxu0 0
    %594 = vmatprep.subr.bf16.mxu0 0
    %595 = vmatpush1.bf16.msra.mxu0 0
    %596 = vmatprep.subr.bf16.mxu0 0
    %597 = vmatpush1.bf16.msra.mxu0 0
    %598 = vmatprep.subr.bf16.mxu0 0
    %599 = vmatpush1.bf16.msra.mxu0 0
    %600 = vmatprep.subr.bf16.mxu0 0
    %601 = vmatpush1.bf16.msra.mxu0 0
    %602 = vmatprep.mubr.bf16.mxu0 0
    %603 = vmatmul.mubr.bf16.gmra.mrb[0].mxu0 %v568
    %v604 = vpop.f32.mrb[0].mxu0
    %v605 = vadd.f32 0.0, %v604
    %v606 = vpop.f32.mrb[0].mxu0
    %v607 = vpop.f32.mrb[0].mxu0
    %v608 = vpop.f32.mrb[0].mxu0
    %609 = vdwg.mxu0
    %v610 = vadd.f32 %v332, %v605
    %v611 = vxor.u32 %v562, 2147483648
    %v612 = vmul.f32 %v611, 1.442695
    %v613 = vpow.pop %v612
    %v614 = vadd.f32 %v613, 1.0
    %v615 = vrcp.pop %v614
    %v616 = vmul.f32 1.0, %v615
    %v617 = vtanh.pop %v562
    %v618 = vmul.f32 %v616, %v473
    %620 = vrot.lane.b32.xlu0 %v617, 64
    %v621 = vpop.permute.xlu0 %620
    %v623 = vmul.f32 %v616, %v621
    %625 = vrot.lane.b32.xlu0 %v623, 32
    %v626 = vpop.permute.xlu0 %625
    %v628 = vadd.f32 %v618, %v626
    %v629 = vtanh.pop %v628
    %631 = vrot.lane.b32.xlu0 %v629, 64
    %v632 = vpop.permute.xlu0 %631
    %v634 = vmul.f32 %v616, %v632
    %v635 = vxor.u32 %v610, 2147483648
    %v636 = vmul.f32 %v635, 1.442695
    %v637 = vpow.pop %v636
    %v638 = vadd.f32 %v637, 1.0
    %v639 = vrcp.pop %v638
    %v640 = vmul.f32 1.0, %v639
    %v641 = vtanh.pop %v610
    %v642 = vmul.f32 %v640, %v497
    %644 = vrot.lane.b32.xlu0 %v641, 64
    %v645 = vpop.permute.xlu0 %644
    %v647 = vmul.f32 %v640, %v645
    %649 = vrot.lane.b32.xlu0 %v647, 32
    %v650 = vpop.permute.xlu0 %649
    %v652 = vadd.f32 %v642, %v650
    %v653 = vtanh.pop %v652
    %655 = vrot.lane.b32.xlu0 %v653, 64
    %v656 = vpop.permute.xlu0 %655
    %v658 = vmul.f32 %v640, %v656
    %660 = vrot.lane.b32.xlu0 %v634, 32
    %v661 = vpop.permute.xlu0 %660
    %663 = vst.msk [vmem:[#allocation2 + $0x8] sm:$0xff] %vm170, %v661
    %665 = vrot.lane.b32.xlu0 %v658, 64
    %v666 = vpop.permute.xlu0 %665
    %668 = vst.msk [vmem:[#allocation2 + $0x30] sm:$0xff] %vm513, %v666
    %v669 = vpack.c.bf16 %v634, %v634
    %671 = vrot.lane.b32.xlu0 %v669, 32
    %v672 = vpop.permute.xlu0 %671
    %v674 = vsel %vm170, %v672, 0
    %676 = vmatprep.subr.bf16.mxu0 0
    %677 = vmatpush1.bf16.msra.mxu0 %v355
    %678 = vmatprep.subr.bf16.mxu0 0
    %679 = vmatpush1.bf16.msra.mxu0 %v356
    %680 = vmatprep.subr.bf16.mxu0 0
    %681 = vmatpush1.bf16.msra.mxu0 0
    %682 = vmatprep.subr.bf16.mxu0 0
    %683 = vmatpush1.bf16.msra.mxu0 0
    %684 = vmatprep.subr.bf16.mxu0 0
    %685 = vmatpush1.bf16.msra.mxu0 0
    %686 = vmatprep.subr.bf16.mxu0 0
    %687 = vmatpush1.bf16.msra.mxu0 0
    %688 = vmatprep.subr.bf16.mxu0 0
    %689 = vmatpush1.bf16.msra.mxu0 0
    %690 = vmatprep.subr.bf16.mxu0 0
    %691 = vmatpush1.bf16.msra.mxu0 0
    %692 = vmatprep.subr.bf16.mxu0 0
    %693 = vmatpush1.bf16.msra.mxu0 0
    %694 = vmatprep.subr.bf16.mxu0 0
    %695 = vmatpush1.bf16.msra.mxu0 0
    %696 = vmatprep.subr.bf16.mxu0 0
    %697 = vmatpush1.bf16.msra.mxu0 0
    %698 = vmatprep.subr.bf16.mxu0 0
    %699 = vmatpush1.bf16.msra.mxu0 0
    %700 = vmatprep.subr.bf16.mxu0 0
    %701 = vmatpush1.bf16.msra.mxu0 0
    %702 = vmatprep.subr.bf16.mxu0 0
    %703 = vmatpush1.bf16.msra.mxu0 0
    %704 = vmatprep.subr.bf16.mxu0 0
    %705 = vmatpush1.bf16.msra.mxu0 0
    %706 = vmatprep.subr.bf16.mxu0 0
    %707 = vmatpush1.bf16.msra.mxu0 0
    %708 = vmatprep.mubr.bf16.mxu0 0
    %709 = vmatmul.mubr.bf16.gmra.mrb[0].mxu0 %v674
    %v710 = vpop.f32.mrb[0].mxu0
    %v711 = vadd.f32 0.0, %v710
    %v712 = vpop.f32.mrb[0].mxu0
    %v713 = vpop.f32.mrb[0].mxu0
    %v714 = vpop.f32.mrb[0].mxu0
    %715 = vdwg.mxu0
    %v716 = vadd.f32 %v226, %v711
    %v717 = vpack.c.bf16 %v658, %v658
    %719 = vrot.lane.b32.xlu0 %v717, 32
    %v720 = vpop.permute.xlu0 %719
    %v722 = vsel %vm170, %v720, 0
    %724 = vmatprep.subr.bf16.mxu0 0
    %725 = vmatpush1.bf16.msra.mxu0 %v411
    %726 = vmatprep.subr.bf16.mxu0 0
    %727 = vmatpush1.bf16.msra.mxu0 %v412
    %728 = vmatprep.subr.bf16.mxu0 0
    %729 = vmatpush1.bf16.msra.mxu0 0
    %730 = vmatprep.subr.bf16.mxu0 0
    %731 = vmatpush1.bf16.msra.mxu0 0
    %732 = vmatprep.subr.bf16.mxu0 0
    %733 = vmatpush1.bf16.msra.mxu0 0
    %734 = vmatprep.subr.bf16.mxu0 0
    %735 = vmatpush1.bf16.msra.mxu0 0
    %736 = vmatprep.subr.bf16.mxu0 0
    %737 = vmatpush1.bf16.msra.mxu0 0
    %738 = vmatprep.subr.bf16.mxu0 0
    %739 = vmatpush1.bf16.msra.mxu0 0
    %740 = vmatprep.subr.bf16.mxu0 0
    %741 = vmatpush1.bf16.msra.mxu0 0
    %742 = vmatprep.subr.bf16.mxu0 0
    %743 = vmatpush1.bf16.msra.mxu0 0
    %744 = vmatprep.subr.bf16.mxu0 0
    %745 = vmatpush1.bf16.msra.mxu0 0
    %746 = vmatprep.subr.bf16.mxu0 0
    %747 = vmatpush1.bf16.msra.mxu0 0
    %748 = vmatprep.subr.bf16.mxu0 0
    %749 = vmatpush1.bf16.msra.mxu0 0
    %750 = vmatprep.subr.bf16.mxu0 0
    %751 = vmatpush1.bf16.msra.mxu0 0
    %752 = vmatprep.subr.bf16.mxu0 0
    %753 = vmatpush1.bf16.msra.mxu0 0
    %754 = vmatprep.subr.bf16.mxu0 0
    %755 = vmatpush1.bf16.msra.mxu0 0
    %756 = vmatprep.mubr.bf16.mxu0 0
    %757 = vmatmul.mubr.bf16.gmra.mrb[0].mxu0 %v722
    %v758 = vpop.f32.mrb[0].mxu0
    %v759 = vadd.f32 0.0, %v758
    %v760 = vpop.f32.mrb[0].mxu0
    %v761 = vpop.f32.mrb[0].mxu0
    %v762 = vpop.f32.mrb[0].mxu0
    %763 = vdwg.mxu0
    %v764 = vadd.f32 %v327, %v759
    %v765 = vxor.u32 %v716, 2147483648
    %v766 = vmul.f32 %v765, 1.442695
    %v767 = vpow.pop %v766
    %v768 = vadd.f32 %v767, 1.0
    %v769 = vrcp.pop %v768
    %v770 = vmul.f32 1.0, %v769
    %v771 = vtanh.pop %v716
    %v772 = vmul.f32 %v770, %v628
    %774 = vrot.lane.b32.xlu0 %v771, 64
    %v775 = vpop.permute.xlu0 %774
    %v777 = vmul.f32 %v770, %v775
    %779 = vrot.lane.b32.xlu0 %v777, 32
    %v780 = vpop.permute.xlu0 %779
    %v782 = vadd.f32 %v772, %v780
    %v783 = vtanh.pop %v782
    %785 = vrot.lane.b32.xlu0 %v783, 64
    %v786 = vpop.permute.xlu0 %785
    %v788 = vmul.f32 %v770, %v786
    %v789 = vxor.u32 %v764, 2147483648
    %v790 = vmul.f32 %v789, 1.442695
    %v791 = vpow.pop %v790
    %v792 = vadd.f32 %v791, 1.0
    %v793 = vrcp.pop %v792
    %v794 = vmul.f32 1.0, %v793
    %v795 = vtanh.pop %v764
    %v796 = vmul.f32 %v794, %v652
    %798 = vrot.lane.b32.xlu0 %v795, 64
    %v799 = vpop.permute.xlu0 %798
    %v801 = vmul.f32 %v794, %v799
    %803 = vrot.lane.b32.xlu0 %v801, 32
    %v804 = vpop.permute.xlu0 %803
    %v806 = vadd.f32 %v796, %v804
    %v807 = vtanh.pop %v806
    %809 = vrot.lane.b32.xlu0 %v807, 64
    %v810 = vpop.permute.xlu0 %809
    %v812 = vmul.f32 %v794, %v810
    %814 = vrot.lane.b32.xlu0 %v788, 32
    %v815 = vpop.permute.xlu0 %814
    %817 = vst.msk [vmem:[#allocation2 + $0x10] sm:$0xff] %vm170, %v815
    %819 = vrot.lane.b32.xlu0 %v812, 64
    %v820 = vpop.permute.xlu0 %819
    %822 = vst.msk [vmem:[#allocation2 + $0x28] sm:$0xff] %vm513, %v820
    %v823 = vpack.c.bf16 %v788, %v788
    %825 = vrot.lane.b32.xlu0 %v823, 32
    %v826 = vpop.permute.xlu0 %825
    %v828 = vsel %vm170, %v826, 0
    %830 = vmatprep.subr.bf16.mxu0 0
    %831 = vmatpush1.bf16.msra.mxu0 %v355
    %832 = vmatprep.subr.bf16.mxu0 0
    %833 = vmatpush1.bf16.msra.mxu0 %v356
    %834 = vmatprep.subr.bf16.mxu0 0
    %835 = vmatpush1.bf16.msra.mxu0 0
    %836 = vmatprep.subr.bf16.mxu0 0
    %837 = vmatpush1.bf16.msra.mxu0 0
    %838 = vmatprep.subr.bf16.mxu0 0
    %839 = vmatpush1.bf16.msra.mxu0 0
    %840 = vmatprep.subr.bf16.mxu0 0
    %841 = vmatpush1.bf16.msra.mxu0 0
    %842 = vmatprep.subr.bf16.mxu0 0
    %843 = vmatpush1.bf16.msra.mxu0 0
    %844 = vmatprep.subr.bf16.mxu0 0
    %845 = vmatpush1.bf16.msra.mxu0 0
    %846 = vmatprep.subr.bf16.mxu0 0
    %847 = vmatpush1.bf16.msra.mxu0 0
    %848 = vmatprep.subr.bf16.mxu0 0
    %849 = vmatpush1.bf16.msra.mxu0 0
    %850 = vmatprep.subr.bf16.mxu0 0
    %851 = vmatpush1.bf16.msra.mxu0 0
    %852 = vmatprep.subr.bf16.mxu0 0
    %853 = vmatpush1.bf16.msra.mxu0 0
    %854 = vmatprep.subr.bf16.mxu0 0
    %855 = vmatpush1.bf16.msra.mxu0 0
    %856 = vmatprep.subr.bf16.mxu0 0
    %857 = vmatpush1.bf16.msra.mxu0 0
    %858 = vmatprep.subr.bf16.mxu0 0
    %859 = vmatpush1.bf16.msra.mxu0 0
    %860 = vmatprep.subr.bf16.mxu0 0
    %861 = vmatpush1.bf16.msra.mxu0 0
    %862 = vmatprep.mubr.bf16.mxu0 0
    %863 = vmatmul.mubr.bf16.gmra.mrb[0].mxu0 %v828
    %v864 = vpop.f32.mrb[0].mxu0
    %v865 = vadd.f32 0.0, %v864
    %v866 = vpop.f32.mrb[0].mxu0
    %v867 = vpop.f32.mrb[0].mxu0
    %v868 = vpop.f32.mrb[0].mxu0
    %869 = vdwg.mxu0
    %v870 = vadd.f32 %v229, %v865
    %v871 = vpack.c.bf16 %v812, %v812
    %873 = vrot.lane.b32.xlu0 %v871, 32
    %v874 = vpop.permute.xlu0 %873
    %v876 = vsel %vm170, %v874, 0
    %878 = vmatprep.subr.bf16.mxu0 0
    %879 = vmatpush1.bf16.msra.mxu0 %v411
    %880 = vmatprep.subr.bf16.mxu0 0
    %881 = vmatpush1.bf16.msra.mxu0 %v412
    %882 = vmatprep.subr.bf16.mxu0 0
    %883 = vmatpush1.bf16.msra.mxu0 0
    %884 = vmatprep.subr.bf16.mxu0 0
    %885 = vmatpush1.bf16.msra.mxu0 0
    %886 = vmatprep.subr.bf16.mxu0 0
    %887 = vmatpush1.bf16.msra.mxu0 0
    %888 = vmatprep.subr.bf16.mxu0 0
    %889 = vmatpush1.bf16.msra.mxu0 0
    %890 = vmatprep.subr.bf16.mxu0 0
    %891 = vmatpush1.bf16.msra.mxu0 0
    %892 = vmatprep.subr.bf16.mxu0 0
    %893 = vmatpush1.bf16.msra.mxu0 0
    %894 = vmatprep.subr.bf16.mxu0 0
    %895 = vmatpush1.bf16.msra.mxu0 0
    %896 = vmatprep.subr.bf16.mxu0 0
    %897 = vmatpush1.bf16.msra.mxu0 0
    %898 = vmatprep.subr.bf16.mxu0 0
    %899 = vmatpush1.bf16.msra.mxu0 0
    %900 = vmatprep.subr.bf16.mxu0 0
    %901 = vmatpush1.bf16.msra.mxu0 0
    %902 = vmatprep.subr.bf16.mxu0 0
    %903 = vmatpush1.bf16.msra.mxu0 0
    %904 = vmatprep.subr.bf16.mxu0 0
    %905 = vmatpush1.bf16.msra.mxu0 0
    %906 = vmatprep.subr.bf16.mxu0 0
    %907 = vmatpush1.bf16.msra.mxu0 0
    %908 = vmatprep.subr.bf16.mxu0 0
    %909 = vmatpush1.bf16.msra.mxu0 0
    %910 = vmatprep.mubr.bf16.mxu0 0
    %911 = vmatmul.mubr.bf16.gmra.mrb[0].mxu0 %v876
    %v912 = vpop.f32.mrb[0].mxu0
    %v913 = vadd.f32 0.0, %v912
    %v914 = vpop.f32.mrb[0].mxu0
    %v915 = vpop.f32.mrb[0].mxu0
    %v916 = vpop.f32.mrb[0].mxu0
    %917 = vdwg.mxu0
    %v918 = vadd.f32 %v324, %v913
    %v919 = vxor.u32 %v870, 2147483648
    %v920 = vmul.f32 %v919, 1.442695
    %v921 = vpow.pop %v920
    %v922 = vadd.f32 %v921, 1.0
    %v923 = vrcp.pop %v922
    %v924 = vmul.f32 1.0, %v923
    %v925 = vtanh.pop %v870
    %v926 = vmul.f32 %v924, %v782
    %928 = vrot.lane.b32.xlu0 %v925, 64
    %v929 = vpop.permute.xlu0 %928
    %v931 = vmul.f32 %v924, %v929
    %933 = vrot.lane.b32.xlu0 %v931, 32
    %v934 = vpop.permute.xlu0 %933
    %v936 = vadd.f32 %v926, %v934
    %v937 = vtanh.pop %v936
    %939 = vrot.lane.b32.xlu0 %v937, 64
    %v940 = vpop.permute.xlu0 %939
    %v942 = vmul.f32 %v924, %v940
    %v943 = vxor.u32 %v918, 2147483648
    %v944 = vmul.f32 %v943, 1.442695
    %v945 = vpow.pop %v944
    %v946 = vadd.f32 %v945, 1.0
    %v947 = vrcp.pop %v946
    %v948 = vmul.f32 1.0, %v947
    %v949 = vtanh.pop %v918
    %v950 = vmul.f32 %v948, %v806
    %952 = vrot.lane.b32.xlu0 %v949, 64
    %v953 = vpop.permute.xlu0 %952
    %v955 = vmul.f32 %v948, %v953
    %957 = vrot.lane.b32.xlu0 %v955, 32
    %v958 = vpop.permute.xlu0 %957
    %v960 = vadd.f32 %v950, %v958
    %v961 = vtanh.pop %v960
    %963 = vrot.lane.b32.xlu0 %v961, 64
    %v964 = vpop.permute.xlu0 %963
    %v966 = vmul.f32 %v948, %v964
    %968 = vrot.lane.b32.xlu0 %v942, 32
    %v969 = vpop.permute.xlu0 %968
    %971 = vst.msk [vmem:[#allocation2 + $0x18] sm:$0xff] %vm170, %v969
    %973 = vrot.lane.b32.xlu0 %v966, 64
    %v974 = vpop.permute.xlu0 %973
    %976 = vst.msk [vmem:[#allocation2 + $0x20] sm:$0xff] %vm513, %v974
    %v977 = vpack.c.bf16 %v942, %v942
    %979 = vrot.lane.b32.xlu0 %v977, 32
    %v980 = vpop.permute.xlu0 %979
    %v982 = vsel %vm170, %v980, 0
    %984 = vmatprep.subr.bf16.mxu0 0
    %985 = vmatpush1.bf16.msra.mxu0 %v355
    %986 = vmatprep.subr.bf16.mxu0 0
    %987 = vmatpush1.bf16.msra.mxu0 %v356
    %988 = vmatprep.subr.bf16.mxu0 0
    %989 = vmatpush1.bf16.msra.mxu0 0
    %990 = vmatprep.subr.bf16.mxu0 0
    %991 = vmatpush1.bf16.msra.mxu0 0
    %992 = vmatprep.subr.bf16.mxu0 0
    %993 = vmatpush1.bf16.msra.mxu0 0
    %994 = vmatprep.subr.bf16.mxu0 0
    %995 = vmatpush1.bf16.msra.mxu0 0
    %996 = vmatprep.subr.bf16.mxu0 0
    %997 = vmatpush1.bf16.msra.mxu0 0
    %998 = vmatprep.subr.bf16.mxu0 0
    %999 = vmatpush1.bf16.msra.mxu0 0
    %1000 = vmatprep.subr.bf16.mxu0 0
    %1001 = vmatpush1.bf16.msra.mxu0 0
    %1002 = vmatprep.subr.bf16.mxu0 0
    %1003 = vmatpush1.bf16.msra.mxu0 0
    %1004 = vmatprep.subr.bf16.mxu0 0
    %1005 = vmatpush1.bf16.msra.mxu0 0
    %1006 = vmatprep.subr.bf16.mxu0 0
    %1007 = vmatpush1.bf16.msra.mxu0 0
    %1008 = vmatprep.subr.bf16.mxu0 0
    %1009 = vmatpush1.bf16.msra.mxu0 0
    %1010 = vmatprep.subr.bf16.mxu0 0
    %1011 = vmatpush1.bf16.msra.mxu0 0
    %1012 = vmatprep.subr.bf16.mxu0 0
    %1013 = vmatpush1.bf16.msra.mxu0 0
    %1014 = vmatprep.subr.bf16.mxu0 0
    %1015 = vmatpush1.bf16.msra.mxu0 0
    %1016 = vmatprep.mubr.bf16.mxu0 0
    %1017 = vmatmul.mubr.bf16.gmra.mrb[0].mxu0 %v982
    %v1018 = vpop.f32.mrb[0].mxu0
    %v1019 = vadd.f32 0.0, %v1018
    %v1020 = vpop.f32.mrb[0].mxu0
    %v1021 = vpop.f32.mrb[0].mxu0
    %v1022 = vpop.f32.mrb[0].mxu0
    %1023 = vdwg.mxu0
    %v1024 = vadd.f32 %v234, %v1019
    %v1025 = vpack.c.bf16 %v966, %v966
    %1027 = vrot.lane.b32.xlu0 %v1025, 32
    %v1028 = vpop.permute.xlu0 %1027
    %v1030 = vsel %vm170, %v1028, 0
    %1032 = vmatprep.subr.bf16.mxu0 0
    %1033 = vmatpush1.bf16.msra.mxu0 %v411
    %1034 = vmatprep.subr.bf16.mxu0 0
    %1035 = vmatpush1.bf16.msra.mxu0 %v412
    %1036 = vmatprep.subr.bf16.mxu0 0
    %1037 = vmatpush1.bf16.msra.mxu0 0
    %1038 = vmatprep.subr.bf16.mxu0 0
    %1039 = vmatpush1.bf16.msra.mxu0 0
    %1040 = vmatprep.subr.bf16.mxu0 0
    %1041 = vmatpush1.bf16.msra.mxu0 0
    %1042 = vmatprep.subr.bf16.mxu0 0
    %1043 = vmatpush1.bf16.msra.mxu0 0
    %1044 = vmatprep.subr.bf16.mxu0 0
    %1045 = vmatpush1.bf16.msra.mxu0 0
    %1046 = vmatprep.subr.bf16.mxu0 0
    %1047 = vmatpush1.bf16.msra.mxu0 0
    %1048 = vmatprep.subr.bf16.mxu0 0
    %1049 = vmatpush1.bf16.msra.mxu0 0
    %1050 = vmatprep.subr.bf16.mxu0 0
    %1051 = vmatpush1.bf16.msra.mxu0 0
    %1052 = vmatprep.subr.bf16.mxu0 0
    %1053 = vmatpush1.bf16.msra.mxu0 0
    %1054 = vmatprep.subr.bf16.mxu0 0
    %1055 = vmatpush1.bf16.msra.mxu0 0
    %1056 = vmatprep.subr.bf16.mxu0 0
    %1057 = vmatpush1.bf16.msra.mxu0 0
    %1058 = vmatprep.subr.bf16.mxu0 0
    %1059 = vmatpush1.bf16.msra.mxu0 0
    %1060 = vmatprep.subr.bf16.mxu0 0
    %1061 = vmatpush1.bf16.msra.mxu0 0
    %1062 = vmatprep.subr.bf16.mxu0 0
    %1063 = vmatpush1.bf16.msra.mxu0 0
    %1064 = vmatprep.mubr.bf16.mxu0 0
    %1065 = vmatmul.mubr.bf16.gmra.mrb[0].mxu0 %v1030
    %v1066 = vpop.f32.mrb[0].mxu0
    %v1067 = vadd.f32 0.0, %v1066
    %v1068 = vpop.f32.mrb[0].mxu0
    %v1069 = vpop.f32.mrb[0].mxu0
    %v1070 = vpop.f32.mrb[0].mxu0
    %1071 = vdwg.mxu0
    %v1072 = vadd.f32 %v319, %v1067
    %v1073 = vxor.u32 %v1024, 2147483648
    %v1074 = vmul.f32 %v1073, 1.442695
    %v1075 = vpow.pop %v1074
    %v1076 = vadd.f32 %v1075, 1.0
    %v1077 = vrcp.pop %v1076
    %v1078 = vmul.f32 1.0, %v1077
    %v1079 = vtanh.pop %v1024
    %v1080 = vmul.f32 %v1078, %v936
    %1082 = vrot.lane.b32.xlu0 %v1079, 64
    %v1083 = vpop.permute.xlu0 %1082
    %v1085 = vmul.f32 %v1078, %v1083
    %1087 = vrot.lane.b32.xlu0 %v1085, 32
    %v1088 = vpop.permute.xlu0 %1087
    %v1090 = vadd.f32 %v1080, %v1088
    %v1091 = vtanh.pop %v1090
    %1093 = vrot.lane.b32.xlu0 %v1091, 64
    %v1094 = vpop.permute.xlu0 %1093
    %v1096 = vmul.f32 %v1078, %v1094
    %v1097 = vxor.u32 %v1072, 2147483648
    %v1098 = vmul.f32 %v1097, 1.442695
    %v1099 = vpow.pop %v1098
    %v1100 = vadd.f32 %v1099, 1.0
    %v1101 = vrcp.pop %v1100
    %v1102 = vmul.f32 1.0, %v1101
    %v1103 = vtanh.pop %v1072
    %v1104 = vmul.f32 %v1102, %v960
    %1106 = vrot.lane.b32.xlu0 %v1103, 64
    %v1107 = vpop.permute.xlu0 %1106
    %v1109 = vmul.f32 %v1102, %v1107
    %1111 = vrot.lane.b32.xlu0 %v1109, 32
    %v1112 = vpop.permute.xlu0 %1111
    %v1114 = vadd.f32 %v1104, %v1112
    %v1115 = vtanh.pop %v1114
    %1117 = vrot.lane.b32.xlu0 %v1115, 64
    %v1118 = vpop.permute.xlu0 %1117
    %v1120 = vmul.f32 %v1102, %v1118
    %1122 = vrot.lane.b32.xlu0 %v1096, 32
    %v1123 = vpop.permute.xlu0 %1122
    %1125 = vst.msk [vmem:[#allocation2 + $0x20] sm:$0xff] %vm170, %v1123
    %1127 = vrot.lane.b32.xlu0 %v1120, 64
    %v1128 = vpop.permute.xlu0 %1127
    %1130 = vst.msk [vmem:[#allocation2 + $0x18] sm:$0xff] %vm513, %v1128
    %v1131 = vpack.c.bf16 %v1096, %v1096
    %1133 = vrot.lane.b32.xlu0 %v1131, 32
    %v1134 = vpop.permute.xlu0 %1133
    %v1136 = vsel %vm170, %v1134, 0
    %1138 = vmatprep.subr.bf16.mxu0 0
    %1139 = vmatpush1.bf16.msra.mxu0 %v355
    %1140 = vmatprep.subr.bf16.mxu0 0
    %1141 = vmatpush1.bf16.msra.mxu0 %v356
    %1142 = vmatprep.subr.bf16.mxu0 0
    %1143 = vmatpush1.bf16.msra.mxu0 0
    %1144 = vmatprep.subr.bf16.mxu0 0
    %1145 = vmatpush1.bf16.msra.mxu0 0
    %1146 = vmatprep.subr.bf16.mxu0 0
    %1147 = vmatpush1.bf16.msra.mxu0 0
    %1148 = vmatprep.subr.bf16.mxu0 0
    %1149 = vmatpush1.bf16.msra.mxu0 0
    %1150 = vmatprep.subr.bf16.mxu0 0
    %1151 = vmatpush1.bf16.msra.mxu0 0
    %1152 = vmatprep.subr.bf16.mxu0 0
    %1153 = vmatpush1.bf16.msra.mxu0 0
    %1154 = vmatprep.subr.bf16.mxu0 0
    %1155 = vmatpush1.bf16.msra.mxu0 0
    %1156 = vmatprep.subr.bf16.mxu0 0
    %1157 = vmatpush1.bf16.msra.mxu0 0
    %1158 = vmatprep.subr.bf16.mxu0 0
    %1159 = vmatpush1.bf16.msra.mxu0 0
    %1160 = vmatprep.subr.bf16.mxu0 0
    %1161 = vmatpush1.bf16.msra.mxu0 0
    %1162 = vmatprep.subr.bf16.mxu0 0
    %1163 = vmatpush1.bf16.msra.mxu0 0
    %1164 = vmatprep.subr.bf16.mxu0 0
    %1165 = vmatpush1.bf16.msra.mxu0 0
    %1166 = vmatprep.subr.bf16.mxu0 0
    %1167 = vmatpush1.bf16.msra.mxu0 0
    %1168 = vmatprep.subr.bf16.mxu0 0
    %1169 = vmatpush1.bf16.msra.mxu0 0
    %1170 = vmatprep.mubr.bf16.mxu0 0
    %1171 = vmatmul.mubr.bf16.gmra.mrb[0].mxu0 %v1136
    %v1172 = vpop.f32.mrb[0].mxu0
    %v1173 = vadd.f32 0.0, %v1172
    %v1174 = vpop.f32.mrb[0].mxu0
    %v1175 = vpop.f32.mrb[0].mxu0
    %v1176 = vpop.f32.mrb[0].mxu0
    %1177 = vdwg.mxu0
    %v1178 = vadd.f32 %v237, %v1173
    %v1179 = vpack.c.bf16 %v1120, %v1120
    %1181 = vrot.lane.b32.xlu0 %v1179, 32
    %v1182 = vpop.permute.xlu0 %1181
    %v1184 = vsel %vm170, %v1182, 0
    %1186 = vmatprep.subr.bf16.mxu0 0
    %1187 = vmatpush1.bf16.msra.mxu0 %v411
    %1188 = vmatprep.subr.bf16.mxu0 0
    %1189 = vmatpush1.bf16.msra.mxu0 %v412
    %1190 = vmatprep.subr.bf16.mxu0 0
    %1191 = vmatpush1.bf16.msra.mxu0 0
    %1192 = vmatprep.subr.bf16.mxu0 0
    %1193 = vmatpush1.bf16.msra.mxu0 0
    %1194 = vmatprep.subr.bf16.mxu0 0
    %1195 = vmatpush1.bf16.msra.mxu0 0
    %1196 = vmatprep.subr.bf16.mxu0 0
    %1197 = vmatpush1.bf16.msra.mxu0 0
    %1198 = vmatprep.subr.bf16.mxu0 0
    %1199 = vmatpush1.bf16.msra.mxu0 0
    %1200 = vmatprep.subr.bf16.mxu0 0
    %1201 = vmatpush1.bf16.msra.mxu0 0
    %1202 = vmatprep.subr.bf16.mxu0 0
    %1203 = vmatpush1.bf16.msra.mxu0 0
    %1204 = vmatprep.subr.bf16.mxu0 0
    %1205 = vmatpush1.bf16.msra.mxu0 0
    %1206 = vmatprep.subr.bf16.mxu0 0
    %1207 = vmatpush1.bf16.msra.mxu0 0
    %1208 = vmatprep.subr.bf16.mxu0 0
    %1209 = vmatpush1.bf16.msra.mxu0 0
    %1210 = vmatprep.subr.bf16.mxu0 0
    %1211 = vmatpush1.bf16.msra.mxu0 0
    %1212 = vmatprep.subr.bf16.mxu0 0
    %1213 = vmatpush1.bf16.msra.mxu0 0
    %1214 = vmatprep.subr.bf16.mxu0 0
    %1215 = vmatpush1.bf16.msra.mxu0 0
    %1216 = vmatprep.subr.bf16.mxu0 0
    %1217 = vmatpush1.bf16.msra.mxu0 0
    %1218 = vmatprep.mubr.bf16.mxu0 0
    %1219 = vmatmul.mubr.bf16.gmra.mrb[0].mxu0 %v1184
    %v1220 = vpop.f32.mrb[0].mxu0
    %v1221 = vadd.f32 0.0, %v1220
    %v1222 = vpop.f32.mrb[0].mxu0
    %v1223 = vpop.f32.mrb[0].mxu0
    %v1224 = vpop.f32.mrb[0].mxu0
    %1225 = vdwg.mxu0
    %v1226 = vadd.f32 %v316, %v1221
    %v1227 = vxor.u32 %v1178, 2147483648
    %v1228 = vmul.f32 %v1227, 1.442695
    %v1229 = vpow.pop %v1228
    %v1230 = vadd.f32 %v1229, 1.0
    %v1231 = vrcp.pop %v1230
    %v1232 = vmul.f32 1.0, %v1231
    %v1233 = vtanh.pop %v1178
    %v1234 = vmul.f32 %v1232, %v1090
    %1236 = vrot.lane.b32.xlu0 %v1233, 64
    %v1237 = vpop.permute.xlu0 %1236
    %v1239 = vmul.f32 %v1232, %v1237
    %1241 = vrot.lane.b32.xlu0 %v1239, 32
    %v1242 = vpop.permute.xlu0 %1241
    %v1244 = vadd.f32 %v1234, %v1242
    %v1245 = vtanh.pop %v1244
    %1247 = vrot.lane.b32.xlu0 %v1245, 64
    %v1248 = vpop.permute.xlu0 %1247
    %v1250 = vmul.f32 %v1232, %v1248
    %v1251 = vxor.u32 %v1226, 2147483648
    %v1252 = vmul.f32 %v1251, 1.442695
    %v1253 = vpow.pop %v1252
    %v1254 = vadd.f32 %v1253, 1.0
    %v1255 = vrcp.pop %v1254
    %v1256 = vmul.f32 1.0, %v1255
    %v1257 = vtanh.pop %v1226
    %v1258 = vmul.f32 %v1256, %v1114
    %1260 = vrot.lane.b32.xlu0 %v1257, 64
    %v1261 = vpop.permute.xlu0 %1260
    %v1263 = vmul.f32 %v1256, %v1261
    %1265 = vrot.lane.b32.xlu0 %v1263, 32
    %v1266 = vpop.permute.xlu0 %1265
    %v1268 = vadd.f32 %v1258, %v1266
    %v1269 = vtanh.pop %v1268
    %1271 = vrot.lane.b32.xlu0 %v1269, 64
    %v1272 = vpop.permute.xlu0 %1271
    %v1274 = vmul.f32 %v1256, %v1272
    %1276 = vrot.lane.b32.xlu0 %v1250, 32
    %v1277 = vpop.permute.xlu0 %1276
    %1279 = vst.msk [vmem:[#allocation2 + $0x28] sm:$0xff] %vm170, %v1277
    %1281 = vrot.lane.b32.xlu0 %v1274, 64
    %v1282 = vpop.permute.xlu0 %1281
    %1284 = vst.msk [vmem:[#allocation2 + $0x10] sm:$0xff] %vm513, %v1282
    %v1285 = vpack.c.bf16 %v1250, %v1250
    %1287 = vrot.lane.b32.xlu0 %v1285, 32
    %v1288 = vpop.permute.xlu0 %1287
    %v1290 = vsel %vm170, %v1288, 0
    %1292 = vmatprep.subr.bf16.mxu0 0
    %1293 = vmatpush1.bf16.msra.mxu0 %v355
    %1294 = vmatprep.subr.bf16.mxu0 0
    %1295 = vmatpush1.bf16.msra.mxu0 %v356
    %1296 = vmatprep.subr.bf16.mxu0 0
    %1297 = vmatpush1.bf16.msra.mxu0 0
    %1298 = vmatprep.subr.bf16.mxu0 0
    %1299 = vmatpush1.bf16.msra.mxu0 0
    %1300 = vmatprep.subr.bf16.mxu0 0
    %1301 = vmatpush1.bf16.msra.mxu0 0
    %1302 = vmatprep.subr.bf16.mxu0 0
    %1303 = vmatpush1.bf16.msra.mxu0 0
    %1304 = vmatprep.subr.bf16.mxu0 0
    %1305 = vmatpush1.bf16.msra.mxu0 0
    %1306 = vmatprep.subr.bf16.mxu0 0
    %1307 = vmatpush1.bf16.msra.mxu0 0
    %1308 = vmatprep.subr.bf16.mxu0 0
    %1309 = vmatpush1.bf16.msra.mxu0 0
    %1310 = vmatprep.subr.bf16.mxu0 0
    %1311 = vmatpush1.bf16.msra.mxu0 0
    %1312 = vmatprep.subr.bf16.mxu0 0
    %1313 = vmatpush1.bf16.msra.mxu0 0
    %1314 = vmatprep.subr.bf16.mxu0 0
    %1315 = vmatpush1.bf16.msra.mxu0 0
    %1316 = vmatprep.subr.bf16.mxu0 0
    %1317 = vmatpush1.bf16.msra.mxu0 0
    %1318 = vmatprep.subr.bf16.mxu0 0
    %1319 = vmatpush1.bf16.msra.mxu0 0
    %1320 = vmatprep.subr.bf16.mxu0 0
    %1321 = vmatpush1.bf16.msra.mxu0 0
    %1322 = vmatprep.subr.bf16.mxu0 0
    %1323 = vmatpush1.bf16.msra.mxu0 0
    %1324 = vmatprep.mubr.bf16.mxu0 0
    %1325 = vmatmul.mubr.bf16.gmra.mrb[0].mxu0 %v1290
    %v1326 = vpop.f32.mrb[0].mxu0
    %v1327 = vadd.f32 0.0, %v1326
    %v1328 = vpop.f32.mrb[0].mxu0
    %v1329 = vpop.f32.mrb[0].mxu0
    %v1330 = vpop.f32.mrb[0].mxu0
    %1331 = vdwg.mxu0
    %v1332 = vadd.f32 %v242, %v1327
    %v1333 = vpack.c.bf16 %v1274, %v1274
    %1335 = vrot.lane.b32.xlu0 %v1333, 32
    %v1336 = vpop.permute.xlu0 %1335
    %v1338 = vsel %vm170, %v1336, 0
    %1340 = vmatprep.subr.bf16.mxu0 0
    %1341 = vmatpush1.bf16.msra.mxu0 %v411
    %1342 = vmatprep.subr.bf16.mxu0 0
    %1343 = vmatpush1.bf16.msra.mxu0 %v412
    %1344 = vmatprep.subr.bf16.mxu0 0
    %1345 = vmatpush1.bf16.msra.mxu0 0
    %1346 = vmatprep.subr.bf16.mxu0 0
    %1347 = vmatpush1.bf16.msra.mxu0 0
    %1348 = vmatprep.subr.bf16.mxu0 0
    %1349 = vmatpush1.bf16.msra.mxu0 0
    %1350 = vmatprep.subr.bf16.mxu0 0
    %1351 = vmatpush1.bf16.msra.mxu0 0
    %1352 = vmatprep.subr.bf16.mxu0 0
    %1353 = vmatpush1.bf16.msra.mxu0 0
    %1354 = vmatprep.subr.bf16.mxu0 0
    %1355 = vmatpush1.bf16.msra.mxu0 0
    %1356 = vmatprep.subr.bf16.mxu0 0
    %1357 = vmatpush1.bf16.msra.mxu0 0
    %1358 = vmatprep.subr.bf16.mxu0 0
    %1359 = vmatpush1.bf16.msra.mxu0 0
    %1360 = vmatprep.subr.bf16.mxu0 0
    %1361 = vmatpush1.bf16.msra.mxu0 0
    %1362 = vmatprep.subr.bf16.mxu0 0
    %1363 = vmatpush1.bf16.msra.mxu0 0
    %1364 = vmatprep.subr.bf16.mxu0 0
    %1365 = vmatpush1.bf16.msra.mxu0 0
    %1366 = vmatprep.subr.bf16.mxu0 0
    %1367 = vmatpush1.bf16.msra.mxu0 0
    %1368 = vmatprep.subr.bf16.mxu0 0
    %1369 = vmatpush1.bf16.msra.mxu0 0
    %1370 = vmatprep.subr.bf16.mxu0 0
    %1371 = vmatpush1.bf16.msra.mxu0 0
    %1372 = vmatprep.mubr.bf16.mxu0 0
    %1373 = vmatmul.mubr.bf16.gmra.mrb[0].mxu0 %v1338
    %v1374 = vpop.f32.mrb[0].mxu0
    %v1375 = vadd.f32 0.0, %v1374
    %v1376 = vpop.f32.mrb[0].mxu0
    %v1377 = vpop.f32.mrb[0].mxu0
    %v1378 = vpop.f32.mrb[0].mxu0
    %1379 = vdwg.mxu0
    %v1380 = vadd.f32 %v311, %v1375
    %v1381 = vxor.u32 %v1332, 2147483648
    %v1382 = vmul.f32 %v1381, 1.442695
    %v1383 = vpow.pop %v1382
    %v1384 = vadd.f32 %v1383, 1.0
    %v1385 = vrcp.pop %v1384
    %v1386 = vmul.f32 1.0, %v1385
    %v1387 = vtanh.pop %v1332
    %v1388 = vmul.f32 %v1386, %v1244
    %1390 = vrot.lane.b32.xlu0 %v1387, 64
    %v1391 = vpop.permute.xlu0 %1390
    %v1393 = vmul.f32 %v1386, %v1391
    %1395 = vrot.lane.b32.xlu0 %v1393, 32
    %v1396 = vpop.permute.xlu0 %1395
    %v1398 = vadd.f32 %v1388, %v1396
    %v1399 = vtanh.pop %v1398
    %1401 = vrot.lane.b32.xlu0 %v1399, 64
    %v1402 = vpop.permute.xlu0 %1401
    %v1404 = vmul.f32 %v1386, %v1402
    %v1405 = vxor.u32 %v1380, 2147483648
    %v1406 = vmul.f32 %v1405, 1.442695
    %v1407 = vpow.pop %v1406
    %v1408 = vadd.f32 %v1407, 1.0
    %v1409 = vrcp.pop %v1408
    %v1410 = vmul.f32 1.0, %v1409
    %v1411 = vtanh.pop %v1380
    %v1412 = vmul.f32 %v1410, %v1268
    %1414 = vrot.lane.b32.xlu0 %v1411, 64
    %v1415 = vpop.permute.xlu0 %1414
    %v1417 = vmul.f32 %v1410, %v1415
    %1419 = vrot.lane.b32.xlu0 %v1417, 32
    %v1420 = vpop.permute.xlu0 %1419
    %v1422 = vadd.f32 %v1412, %v1420
    %v1423 = vtanh.pop %v1422
    %1425 = vrot.lane.b32.xlu0 %v1423, 64
    %v1426 = vpop.permute.xlu0 %1425
    %v1428 = vmul.f32 %v1410, %v1426
    %1430 = vrot.lane.b32.xlu0 %v1404, 32
    %v1431 = vpop.permute.xlu0 %1430
    %1433 = vst.msk [vmem:[#allocation2 + $0x30] sm:$0xff] %vm170, %v1431
    %1435 = vrot.lane.b32.xlu0 %v1428, 64
    %v1436 = vpop.permute.xlu0 %1435
    %1438 = vst.msk [vmem:[#allocation2 + $0x8] sm:$0xff] %vm513, %v1436
    %v1439 = vpack.c.bf16 %v1404, %v1404
    %1441 = vrot.lane.b32.xlu0 %v1439, 32
    %v1442 = vpop.permute.xlu0 %1441
    %v1444 = vsel %vm170, %v1442, 0
    %1446 = vmatprep.subr.bf16.mxu0 0
    %1447 = vmatpush1.bf16.msra.mxu0 %v355
    %1448 = vmatprep.subr.bf16.mxu0 0
    %1449 = vmatpush1.bf16.msra.mxu0 %v356
    %1450 = vmatprep.subr.bf16.mxu0 0
    %1451 = vmatpush1.bf16.msra.mxu0 0
    %1452 = vmatprep.subr.bf16.mxu0 0
    %1453 = vmatpush1.bf16.msra.mxu0 0
    %1454 = vmatprep.subr.bf16.mxu0 0
    %1455 = vmatpush1.bf16.msra.mxu0 0
    %1456 = vmatprep.subr.bf16.mxu0 0
    %1457 = vmatpush1.bf16.msra.mxu0 0
    %1458 = vmatprep.subr.bf16.mxu0 0
    %1459 = vmatpush1.bf16.msra.mxu0 0
    %1460 = vmatprep.subr.bf16.mxu0 0
    %1461 = vmatpush1.bf16.msra.mxu0 0
    %1462 = vmatprep.subr.bf16.mxu0 0
    %1463 = vmatpush1.bf16.msra.mxu0 0
    %1464 = vmatprep.subr.bf16.mxu0 0
    %1465 = vmatpush1.bf16.msra.mxu0 0
    %1466 = vmatprep.subr.bf16.mxu0 0
    %1467 = vmatpush1.bf16.msra.mxu0 0
    %1468 = vmatprep.subr.bf16.mxu0 0
    %1469 = vmatpush1.bf16.msra.mxu0 0
    %1470 = vmatprep.subr.bf16.mxu0 0
    %1471 = vmatpush1.bf16.msra.mxu0 0
    %1472 = vmatprep.subr.bf16.mxu0 0
    %1473 = vmatpush1.bf16.msra.mxu0 0
    %1474 = vmatprep.subr.bf16.mxu0 0
    %1475 = vmatpush1.bf16.msra.mxu0 0
    %1476 = vmatprep.subr.bf16.mxu0 0
    %1477 = vmatpush1.bf16.msra.mxu0 0
    %1478 = vmatprep.mubr.bf16.mxu0 0
    %1479 = vmatmul.mubr.bf16.gmra.mrb[0].mxu0 %v1444
    %v1480 = vpop.f32.mrb[0].mxu0
    %v1481 = vadd.f32 0.0, %v1480
    %v1482 = vpop.f32.mrb[0].mxu0
    %v1483 = vpop.f32.mrb[0].mxu0
    %v1484 = vpop.f32.mrb[0].mxu0
    %1485 = vdwg.mxu0
    %v1486 = vadd.f32 %v245, %v1481
    %v1487 = vpack.c.bf16 %v1428, %v1428
    %1489 = vrot.lane.b32.xlu0 %v1487, 32
    %v1490 = vpop.permute.xlu0 %1489
    %v1492 = vsel %vm170, %v1490, 0
    %1494 = vmatprep.subr.bf16.mxu0 0
    %1495 = vmatpush1.bf16.msra.mxu0 %v411
    %1496 = vmatprep.subr.bf16.mxu0 0
    %1497 = vmatpush1.bf16.msra.mxu0 %v412
    %1498 = vmatprep.subr.bf16.mxu0 0
    %1499 = vmatpush1.bf16.msra.mxu0 0
    %1500 = vmatprep.subr.bf16.mxu0 0
    %1501 = vmatpush1.bf16.msra.mxu0 0
    %1502 = vmatprep.subr.bf16.mxu0 0
    %1503 = vmatpush1.bf16.msra.mxu0 0
    %1504 = vmatprep.subr.bf16.mxu0 0
    %1505 = vmatpush1.bf16.msra.mxu0 0
    %1506 = vmatprep.subr.bf16.mxu0 0
    %1507 = vmatpush1.bf16.msra.mxu0 0
    %1508 = vmatprep.subr.bf16.mxu0 0
    %1509 = vmatpush1.bf16.msra.mxu0 0
    %1510 = vmatprep.subr.bf16.mxu0 0
    %1511 = vmatpush1.bf16.msra.mxu0 0
    %1512 = vmatprep.subr.bf16.mxu0 0
    %1513 = vmatpush1.bf16.msra.mxu0 0
    %1514 = vmatprep.subr.bf16.mxu0 0
    %1515 = vmatpush1.bf16.msra.mxu0 0
    %1516 = vmatprep.subr.bf16.mxu0 0
    %1517 = vmatpush1.bf16.msra.mxu0 0
    %1518 = vmatprep.subr.bf16.mxu0 0
    %1519 = vmatpush1.bf16.msra.mxu0 0
    %1520 = vmatprep.subr.bf16.mxu0 0
    %1521 = vmatpush1.bf16.msra.mxu0 0
    %1522 = vmatprep.subr.bf16.mxu0 0
    %1523 = vmatpush1.bf16.msra.mxu0 0
    %1524 = vmatprep.subr.bf16.mxu0 0
    %1525 = vmatpush1.bf16.msra.mxu0 0
    %1526 = vmatprep.mubr.bf16.mxu0 0
    %1527 = vmatmul.mubr.bf16.gmra.mrb[0].mxu0 %v1492
    %v1528 = vpop.f32.mrb[0].mxu0
    %v1529 = vadd.f32 0.0, %v1528
    %v1530 = vpop.f32.mrb[0].mxu0
    %v1531 = vpop.f32.mrb[0].mxu0
    %v1532 = vpop.f32.mrb[0].mxu0
    %1533 = vdwg.mxu0
    %v1534 = vadd.f32 %v308, %v1529
    %v1535 = vxor.u32 %v1486, 2147483648
    %v1536 = vmul.f32 %v1535, 1.442695
    %v1537 = vpow.pop %v1536
    %v1538 = vadd.f32 %v1537, 1.0
    %v1539 = vrcp.pop %v1538
    %v1540 = vmul.f32 1.0, %v1539
    %v1541 = vtanh.pop %v1486
    %v1542 = vmul.f32 %v1540, %v1398
    %1544 = vrot.lane.b32.xlu0 %v1541, 64
    %v1545 = vpop.permute.xlu0 %1544
    %v1547 = vmul.f32 %v1540, %v1545
    %1549 = vrot.lane.b32.xlu0 %v1547, 32
    %v1550 = vpop.permute.xlu0 %1549
    %v1552 = vadd.f32 %v1542, %v1550
    %v1553 = vtanh.pop %v1552
    %1555 = vrot.lane.b32.xlu0 %v1553, 64
    %v1556 = vpop.permute.xlu0 %1555
    %v1558 = vmul.f32 %v1540, %v1556
    %v1559 = vxor.u32 %v1534, 2147483648
    %v1560 = vmul.f32 %v1559, 1.442695
    %v1561 = vpow.pop %v1560
    %v1562 = vadd.f32 %v1561, 1.0
    %v1563 = vrcp.pop %v1562
    %v1564 = vmul.f32 1.0, %v1563
    %v1565 = vtanh.pop %v1534
    %v1566 = vmul.f32 %v1564, %v1422
    %1568 = vrot.lane.b32.xlu0 %v1565, 64
    %v1569 = vpop.permute.xlu0 %1568
    %v1571 = vmul.f32 %v1564, %v1569
    %1573 = vrot.lane.b32.xlu0 %v1571, 32
    %v1574 = vpop.permute.xlu0 %1573
    %v1576 = vadd.f32 %v1566, %v1574
    %v1577 = vtanh.pop %v1576
    %1579 = vrot.lane.b32.xlu0 %v1577, 64
    %v1580 = vpop.permute.xlu0 %1579
    %v1582 = vmul.f32 %v1564, %v1580
    %1584 = vrot.lane.b32.xlu0 %v1558, 32
    %v1585 = vpop.permute.xlu0 %1584
    %1587 = vst.msk [vmem:[#allocation2 + $0x38] sm:$0xff] %vm170, %v1585
    %1589 = vrot.lane.b32.xlu0 %v1582, 64
    %v1590 = vpop.permute.xlu0 %1589
    %1592 = vst.msk [vmem:[#allocation2] sm:$0xff] %vm513, %v1590
    %v1593 = vld [vmem:[#allocation2] sm:$0xff]
    %v1594 = vld [vmem:[#allocation2 + $0x8] sm:$0xff]
    %v1595 = vld [vmem:[#allocation2 + $0x10] sm:$0xff]
    %v1596 = vld [vmem:[#allocation2 + $0x18] sm:$0xff]
    %v1597 = vld [vmem:[#allocation2 + $0x20] sm:$0xff]
    %v1598 = vld [vmem:[#allocation2 + $0x28] sm:$0xff]
    %v1599 = vld [vmem:[#allocation2 + $0x30] sm:$0xff]
    %v1600 = vld [vmem:[#allocation2 + $0x38] sm:$0xff]
    %v1601 = vpack.c.bf16 %v1594, %v1593
    %v1602 = vpack.c.bf16 %v1596, %v1595
    %v1603 = vpack.c.bf16 %v1598, %v1597
    %v1604 = vpack.c.bf16 %v1600, %v1599
    %v1605 = vld [vmem:[%s4] sm:$0xf]
    %v1606 = vld [vmem:[%s4 + $0x4] sm:$0xf]
    %v1607 = vld [vmem:[%s4 + $0x8] sm:$0xf]
    %v1608 = vld [vmem:[%s4 + $0xc] sm:$0xf]
    %v1609 = vld [vmem:[%s4 + $0x10] sm:$0xf]
    %v1610 = vld [vmem:[%s4 + $0x14] sm:$0xf]
    %v1611 = vld [vmem:[%s4 + $0x18] sm:$0xf]
    %v1612 = vld [vmem:[%s4 + $0x1c] sm:$0xf]
    %v1613 = vld [vmem:[#allocation8] sm:$0x1]
    %v1615 = vlaneseq
    %v1616 = vshrl.u32 %v1615, 7
    %v1617 = vsub.s32 0, %v1616
    %v1618 = vrot.slane %v1613, %v1617
    %v1628 = vunpack.c.l.b16 %v1605
    %v1629 = vunpack.c.l.b16 %v1606
    %v1630 = vunpack.c.l.b16 %v1607
    %v1631 = vunpack.c.l.b16 %v1608
    %v1632 = vunpack.c.l.b16 %v1609
    %v1633 = vunpack.c.l.b16 %v1610
    %v1634 = vunpack.c.l.b16 %v1611
    %v1635 = vunpack.c.l.b16 %v1612
    %v1636 = vpack.c.b16 %v1629, %v1628
    %v1637 = vpack.c.b16 %v1631, %v1630
    %v1638 = vpack.c.b16 %v1633, %v1632
    %v1639 = vpack.c.b16 %v1635, %v1634
    %vm1644 = vcmask 523264
    %v1646 = vsel %vm1644, %v1601, 0
    %v1649 = vsel %vm1644, %v1602, 0
    %v1652 = vsel %vm1644, %v1603, 0
    %v1655 = vsel %vm1644, %v1604, 0
    %1657 = vmatprep.subr.bf16.mxu0 0
    %1658 = vmatpush1.bf16.msra.mxu0 %v1636
    %1659 = vmatprep.subr.bf16.mxu0 0
    %1660 = vmatpush1.bf16.msra.mxu0 %v1637
    %1661 = vmatprep.subr.bf16.mxu0 0
    %1662 = vmatpush1.bf16.msra.mxu0 %v1638
    %1663 = vmatprep.subr.bf16.mxu0 0
    %1664 = vmatpush1.bf16.msra.mxu0 %v1639
    %1665 = vmatprep.subr.bf16.mxu0 0
    %1666 = vmatpush1.bf16.msra.mxu0 0
    %1667 = vmatprep.subr.bf16.mxu0 0
    %1668 = vmatpush1.bf16.msra.mxu0 0
    %1669 = vmatprep.subr.bf16.mxu0 0
    %1670 = vmatpush1.bf16.msra.mxu0 0
    %1671 = vmatprep.subr.bf16.mxu0 0
    %1672 = vmatpush1.bf16.msra.mxu0 0
    %1673 = vmatprep.subr.bf16.mxu0 0
    %1674 = vmatpush1.bf16.msra.mxu0 0
    %1675 = vmatprep.subr.bf16.mxu0 0
    %1676 = vmatpush1.bf16.msra.mxu0 0
    %1677 = vmatprep.subr.bf16.mxu0 0
    %1678 = vmatpush1.bf16.msra.mxu0 0
    %1679 = vmatprep.subr.bf16.mxu0 0
    %1680 = vmatpush1.bf16.msra.mxu0 0
    %1681 = vmatprep.subr.bf16.mxu0 0
    %1682 = vmatpush1.bf16.msra.mxu0 0
    %1683 = vmatprep.subr.bf16.mxu0 0
    %1684 = vmatpush1.bf16.msra.mxu0 0
    %1685 = vmatprep.subr.bf16.mxu0 0
    %1686 = vmatpush1.bf16.msra.mxu0 0
    %1687 = vmatprep.subr.bf16.mxu0 0
    %1688 = vmatpush1.bf16.msra.mxu0 0
    %1689 = vmatprep.mubr.bf16.mxu0 0
    %1690 = vmatmul.mubr.bf16.gmra.mrb[0].mxu0 %v1646
    %v1691 = vpop.f32.mrb[0].mxu0
    %v1692 = vadd.f32 %v1618, %v1691
    %v1693 = vpop.f32.mrb[0].mxu0
    %v1694 = vpop.f32.mrb[0].mxu0
    %v1695 = vadd.f32 %v1618, %v1694
    %v1696 = vpop.f32.mrb[0].mxu0
    %1697 = vmatprep.mubr.bf16.mxu0 0
    %1698 = vmatmul.mubr.bf16.gmra.mrb[0].mxu0 %v1649
    %v1699 = vpop.f32.mrb[0].mxu0
    %v1700 = vadd.f32 %v1618, %v1699
    %v1701 = vpop.f32.mrb[0].mxu0
    %v1702 = vpop.f32.mrb[0].mxu0
    %v1703 = vadd.f32 %v1618, %v1702
    %v1704 = vpop.f32.mrb[0].mxu0
    %1705 = vmatprep.mubr.bf16.mxu0 0
    %1706 = vmatmul.mubr.bf16.gmra.mrb[0].mxu0 %v1652
    %v1707 = vpop.f32.mrb[0].mxu0
    %v1708 = vadd.f32 %v1618, %v1707
    %v1709 = vpop.f32.mrb[0].mxu0
    %v1710 = vpop.f32.mrb[0].mxu0
    %v1711 = vadd.f32 %v1618, %v1710
    %v1712 = vpop.f32.mrb[0].mxu0
    %1713 = vmatprep.mubr.bf16.mxu0 0
    %1714 = vmatmul.mubr.bf16.gmra.mrb[0].mxu0 %v1655
    %v1715 = vpop.f32.mrb[0].mxu0
    %v1716 = vadd.f32 %v1618, %v1715
    %v1717 = vpop.f32.mrb[0].mxu0
    %v1718 = vpop.f32.mrb[0].mxu0
    %v1719 = vadd.f32 %v1618, %v1718
    %v1720 = vpop.f32.mrb[0].mxu0
    %1721 = vdwg.mxu0
    %s1722 = scalar_lea.vmem %s4, 32
    %v1723 = vld [vmem:[%s1722] sm:$0xf]
    %v1724 = vld [vmem:[%s1722 + $0x4] sm:$0xf]
    %v1725 = vld [vmem:[%s1722 + $0x8] sm:$0xf]
    %v1726 = vld [vmem:[%s1722 + $0xc] sm:$0xf]
    %v1727 = vld [vmem:[%s1722 + $0x10] sm:$0xf]
    %v1728 = vld [vmem:[%s1722 + $0x14] sm:$0xf]
    %v1729 = vld [vmem:[%s1722 + $0x18] sm:$0xf]
    %v1730 = vld [vmem:[%s1722 + $0x1c] sm:$0xf]
    %s1731 = scalar_lea.vmem [#allocation8], 1
    %v1732 = vld [vmem:[%s1731] sm:$0x1]
    %v1734 = vlaneseq
    %v1735 = vshrl.u32 %v1734, 7
    %v1736 = vsub.s32 0, %v1735
    %v1737 = vrot.slane %v1732, %v1736
    %v1747 = vunpack.c.l.b16 %v1723
    %v1748 = vunpack.c.l.b16 %v1724
    %v1749 = vunpack.c.l.b16 %v1725
    %v1750 = vunpack.c.l.b16 %v1726
    %v1751 = vunpack.c.l.b16 %v1727
    %v1752 = vunpack.c.l.b16 %v1728
    %v1753 = vunpack.c.l.b16 %v1729
    %v1754 = vunpack.c.l.b16 %v1730
    %v1755 = vpack.c.b16 %v1748, %v1747
    %v1756 = vpack.c.b16 %v1750, %v1749
    %v1757 = vpack.c.b16 %v1752, %v1751
    %v1758 = vpack.c.b16 %v1754, %v1753
    %1763 = vmatprep.subr.bf16.mxu0 0
    %1764 = vmatpush1.bf16.msra.mxu0 %v1755
    %1765 = vmatprep.subr.bf16.mxu0 0
    %1766 = vmatpush1.bf16.msra.mxu0 %v1756
    %1767 = vmatprep.subr.bf16.mxu0 0
    %1768 = vmatpush1.bf16.msra.mxu0 %v1757
    %1769 = vmatprep.subr.bf16.mxu0 0
    %1770 = vmatpush1.bf16.msra.mxu0 %v1758
    %1771 = vmatprep.subr.bf16.mxu0 0
    %1772 = vmatpush1.bf16.msra.mxu0 0
    %1773 = vmatprep.subr.bf16.mxu0 0
    %1774 = vmatpush1.bf16.msra.mxu0 0
    %1775 = vmatprep.subr.bf16.mxu0 0
    %1776 = vmatpush1.bf16.msra.mxu0 0
    %1777 = vmatprep.subr.bf16.mxu0 0
    %1778 = vmatpush1.bf16.msra.mxu0 0
    %1779 = vmatprep.subr.bf16.mxu0 0
    %1780 = vmatpush1.bf16.msra.mxu0 0
    %1781 = vmatprep.subr.bf16.mxu0 0
    %1782 = vmatpush1.bf16.msra.mxu0 0
    %1783 = vmatprep.subr.bf16.mxu0 0
    %1784 = vmatpush1.bf16.msra.mxu0 0
    %1785 = vmatprep.subr.bf16.mxu0 0
    %1786 = vmatpush1.bf16.msra.mxu0 0
    %1787 = vmatprep.subr.bf16.mxu0 0
    %1788 = vmatpush1.bf16.msra.mxu0 0
    %1789 = vmatprep.subr.bf16.mxu0 0
    %1790 = vmatpush1.bf16.msra.mxu0 0
    %1791 = vmatprep.subr.bf16.mxu0 0
    %1792 = vmatpush1.bf16.msra.mxu0 0
    %1793 = vmatprep.subr.bf16.mxu0 0
    %1794 = vmatpush1.bf16.msra.mxu0 0
    %1795 = vmatprep.mubr.bf16.mxu0 0
    %1796 = vmatmul.mubr.bf16.gmra.mrb[0].mxu0 %v1646
    %v1797 = vpop.f32.mrb[0].mxu0
    %v1798 = vadd.f32 %v1737, %v1797
    %v1799 = vpop.f32.mrb[0].mxu0
    %v1800 = vpop.f32.mrb[0].mxu0
    %v1801 = vadd.f32 %v1737, %v1800
    %v1802 = vpop.f32.mrb[0].mxu0
    %1803 = vmatprep.mubr.bf16.mxu0 0
    %1804 = vmatmul.mubr.bf16.gmra.mrb[0].mxu0 %v1649
    %v1805 = vpop.f32.mrb[0].mxu0
    %v1806 = vadd.f32 %v1737, %v1805
    %v1807 = vpop.f32.mrb[0].mxu0
    %v1808 = vpop.f32.mrb[0].mxu0
    %v1809 = vadd.f32 %v1737, %v1808
    %v1810 = vpop.f32.mrb[0].mxu0
    %1811 = vmatprep.mubr.bf16.mxu0 0
    %1812 = vmatmul.mubr.bf16.gmra.mrb[0].mxu0 %v1652
    %v1813 = vpop.f32.mrb[0].mxu0
    %v1814 = vadd.f32 %v1737, %v1813
    %v1815 = vpop.f32.mrb[0].mxu0
    %v1816 = vpop.f32.mrb[0].mxu0
    %v1817 = vadd.f32 %v1737, %v1816
    %v1818 = vpop.f32.mrb[0].mxu0
    %1819 = vmatprep.mubr.bf16.mxu0 0
    %1820 = vmatmul.mubr.bf16.gmra.mrb[0].mxu0 %v1655
    %v1821 = vpop.f32.mrb[0].mxu0
    %v1822 = vadd.f32 %v1737, %v1821
    %v1823 = vpop.f32.mrb[0].mxu0
    %v1824 = vpop.f32.mrb[0].mxu0
    %v1825 = vadd.f32 %v1737, %v1824
    %v1826 = vpop.f32.mrb[0].mxu0
    %1827 = vdwg.mxu0
    %v1828 = vld [vmem:[%s5] sm:$0xf]
    %v1829 = vld [vmem:[%s5 + $0x4] sm:$0xf]
    %v1830 = vld [vmem:[%s5 + $0x8] sm:$0xf]
    %v1831 = vld [vmem:[%s5 + $0xc] sm:$0xf]
    %s1832 = scalar_lea.vmem %s5, 16
    %v1833 = vld [vmem:[%s1832] sm:$0xf]
    %v1834 = vld [vmem:[%s1832 + $0x4] sm:$0xf]
    %v1835 = vld [vmem:[%s1832 + $0x8] sm:$0xf]
    %v1836 = vld [vmem:[%s1832 + $0xc] sm:$0xf]
    %v1841 = vunpack.c.l.b16 %v1828
    %v1842 = vunpack.c.l.b16 %v1829
    %v1843 = vunpack.c.l.b16 %v1830
    %v1844 = vunpack.c.l.b16 %v1831
    %v1845 = vpack.c.b16 %v1842, %v1841
    %v1846 = vpack.c.b16 %v1844, %v1843
    %1849 = vmatprep.subr.bf16.mxu0 0
    %1850 = vmatpush1.bf16.msra.mxu0 %v1845
    %1851 = vmatprep.subr.bf16.mxu0 0
    %1852 = vmatpush1.bf16.msra.mxu0 %v1846
    %1853 = vmatprep.subr.bf16.mxu0 0
    %1854 = vmatpush1.bf16.msra.mxu0 0
    %1855 = vmatprep.subr.bf16.mxu0 0
    %1856 = vmatpush1.bf16.msra.mxu0 0
    %1857 = vmatprep.subr.bf16.mxu0 0
    %1858 = vmatpush1.bf16.msra.mxu0 0
    %1859 = vmatprep.subr.bf16.mxu0 0
    %1860 = vmatpush1.bf16.msra.mxu0 0
    %1861 = vmatprep.subr.bf16.mxu0 0
    %1862 = vmatpush1.bf16.msra.mxu0 0
    %1863 = vmatprep.subr.bf16.mxu0 0
    %1864 = vmatpush1.bf16.msra.mxu0 0
    %1865 = vmatprep.subr.bf16.mxu0 0
    %1866 = vmatpush1.bf16.msra.mxu0 0
    %1867 = vmatprep.subr.bf16.mxu0 0
    %1868 = vmatpush1.bf16.msra.mxu0 0
    %1869 = vmatprep.subr.bf16.mxu0 0
    %1870 = vmatpush1.bf16.msra.mxu0 0
    %1871 = vmatprep.subr.bf16.mxu0 0
    %1872 = vmatpush1.bf16.msra.mxu0 0
    %1873 = vmatprep.subr.bf16.mxu0 0
    %1874 = vmatpush1.bf16.msra.mxu0 0
    %1875 = vmatprep.subr.bf16.mxu0 0
    %1876 = vmatpush1.bf16.msra.mxu0 0
    %1877 = vmatprep.subr.bf16.mxu0 0
    %1878 = vmatpush1.bf16.msra.mxu0 0
    %1879 = vmatprep.subr.bf16.mxu0 0
    %1880 = vmatpush1.bf16.msra.mxu0 0
    %1881 = vmatprep.mubr.bf16.mxu0 0
    %1882 = vmatmul.mubr.bf16.gmra.mrb[0].mxu0 %v360
    %v1883 = vpop.f32.mrb[0].mxu0
    %v1884 = vadd.f32 0.0, %v1883
    %v1885 = vpop.f32.mrb[0].mxu0
    %v1886 = vpop.f32.mrb[0].mxu0
    %v1887 = vpop.f32.mrb[0].mxu0
    %1888 = vdwg.mxu0
    %v1889 = vadd.f32 %v1692, %v1884
    %v1894 = vunpack.c.l.b16 %v1833
    %v1895 = vunpack.c.l.b16 %v1834
    %v1896 = vunpack.c.l.b16 %v1835
    %v1897 = vunpack.c.l.b16 %v1836
    %v1898 = vpack.c.b16 %v1895, %v1894
    %v1899 = vpack.c.b16 %v1897, %v1896
    %1902 = vmatprep.subr.bf16.mxu0 0
    %1903 = vmatpush1.bf16.msra.mxu0 %v1898
    %1904 = vmatprep.subr.bf16.mxu0 0
    %1905 = vmatpush1.bf16.msra.mxu0 %v1899
    %1906 = vmatprep.subr.bf16.mxu0 0
    %1907 = vmatpush1.bf16.msra.mxu0 0
    %1908 = vmatprep.subr.bf16.mxu0 0
    %1909 = vmatpush1.bf16.msra.mxu0 0
    %1910 = vmatprep.subr.bf16.mxu0 0
    %1911 = vmatpush1.bf16.msra.mxu0 0
    %1912 = vmatprep.subr.bf16.mxu0 0
    %1913 = vmatpush1.bf16.msra.mxu0 0
    %1914 = vmatprep.subr.bf16.mxu0 0
    %1915 = vmatpush1.bf16.msra.mxu0 0
    %1916 = vmatprep.subr.bf16.mxu0 0
    %1917 = vmatpush1.bf16.msra.mxu0 0
    %1918 = vmatprep.subr.bf16.mxu0 0
    %1919 = vmatpush1.bf16.msra.mxu0 0
    %1920 = vmatprep.subr.bf16.mxu0 0
    %1921 = vmatpush1.bf16.msra.mxu0 0
    %1922 = vmatprep.subr.bf16.mxu0 0
    %1923 = vmatpush1.bf16.msra.mxu0 0
    %1924 = vmatprep.subr.bf16.mxu0 0
    %1925 = vmatpush1.bf16.msra.mxu0 0
    %1926 = vmatprep.subr.bf16.mxu0 0
    %1927 = vmatpush1.bf16.msra.mxu0 0
    %1928 = vmatprep.subr.bf16.mxu0 0
    %1929 = vmatpush1.bf16.msra.mxu0 0
    %1930 = vmatprep.subr.bf16.mxu0 0
    %1931 = vmatpush1.bf16.msra.mxu0 0
    %1932 = vmatprep.subr.bf16.mxu0 0
    %1933 = vmatpush1.bf16.msra.mxu0 0
    %1934 = vmatprep.mubr.bf16.mxu0 0
    %1935 = vmatmul.mubr.bf16.gmra.mrb[0].mxu0 %v360
    %v1936 = vpop.f32.mrb[0].mxu0
    %v1937 = vadd.f32 0.0, %v1936
    %v1938 = vpop.f32.mrb[0].mxu0
    %v1939 = vpop.f32.mrb[0].mxu0
    %v1940 = vpop.f32.mrb[0].mxu0
    %1941 = vdwg.mxu0
    %v1942 = vadd.f32 %v1825, %v1937
    %v1943 = vxor.u32 %v1889, 2147483648
    %v1944 = vmul.f32 %v1943, 1.442695
    %v1945 = vpow.pop %v1944
    %v1946 = vadd.f32 %v1945, 1.0
    %v1947 = vrcp.pop %v1946
    %v1948 = vmul.f32 1.0, %v1947
    %v1949 = vtanh.pop %v1889
    %v1950 = vmul.f32 %v1948, 0.0
    %1952 = vrot.lane.b32.xlu0 %v1949, 64
    %v1953 = vpop.permute.xlu0 %1952
    %v1955 = vmul.f32 %v1948, %v1953
    %1957 = vrot.lane.b32.xlu0 %v1955, 32
    %v1958 = vpop.permute.xlu0 %1957
    %v1960 = vadd.f32 %v1950, %v1958
    %v1961 = vtanh.pop %v1960
    %1963 = vrot.lane.b32.xlu0 %v1961, 64
    %v1964 = vpop.permute.xlu0 %1963
    %v1966 = vmul.f32 %v1948, %v1964
    %v1967 = vxor.u32 %v1942, 2147483648
    %v1968 = vmul.f32 %v1967, 1.442695
    %v1969 = vpow.pop %v1968
    %v1970 = vadd.f32 %v1969, 1.0
    %v1971 = vrcp.pop %v1970
    %v1972 = vmul.f32 1.0, %v1971
    %v1973 = vtanh.pop %v1942
    %v1974 = vmul.f32 %v1972, 0.0
    %1976 = vrot.lane.b32.xlu0 %v1973, 64
    %v1977 = vpop.permute.xlu0 %1976
    %v1979 = vmul.f32 %v1972, %v1977
    %1981 = vrot.lane.b32.xlu0 %v1979, 32
    %v1982 = vpop.permute.xlu0 %1981
    %v1984 = vadd.f32 %v1974, %v1982
    %v1985 = vtanh.pop %v1984
    %1987 = vrot.lane.b32.xlu0 %v1985, 64
    %v1988 = vpop.permute.xlu0 %1987
    %v1990 = vmul.f32 %v1972, %v1988
    %1992 = vrot.lane.b32.xlu0 %v1966, 32
    %v1993 = vpop.permute.xlu0 %1992
    %1995 = vst.msk [vmem:[#allocation2] sm:$0xff] %vm170, %v1993
    %1997 = vrot.lane.b32.xlu0 %v1990, 64
    %v1998 = vpop.permute.xlu0 %1997
    %2000 = vst.msk [vmem:[#allocation2 + $0x38] sm:$0xff] %vm513, %v1998
    %v2001 = vpack.c.bf16 %v1966, %v1966
    %2003 = vrot.lane.b32.xlu0 %v2001, 32
    %v2004 = vpop.permute.xlu0 %2003
    %v2006 = vsel %vm170, %v2004, 0
    %2008 = vmatprep.subr.bf16.mxu0 0
    %2009 = vmatpush1.bf16.msra.mxu0 %v1845
    %2010 = vmatprep.subr.bf16.mxu0 0
    %2011 = vmatpush1.bf16.msra.mxu0 %v1846
    %2012 = vmatprep.subr.bf16.mxu0 0
    %2013 = vmatpush1.bf16.msra.mxu0 0
    %2014 = vmatprep.subr.bf16.mxu0 0
    %2015 = vmatpush1.bf16.msra.mxu0 0
    %2016 = vmatprep.subr.bf16.mxu0 0
    %2017 = vmatpush1.bf16.msra.mxu0 0
    %2018 = vmatprep.subr.bf16.mxu0 0
    %2019 = vmatpush1.bf16.msra.mxu0 0
    %2020 = vmatprep.subr.bf16.mxu0 0
    %2021 = vmatpush1.bf16.msra.mxu0 0
    %2022 = vmatprep.subr.bf16.mxu0 0
    %2023 = vmatpush1.bf16.msra.mxu0 0
    %2024 = vmatprep.subr.bf16.mxu0 0
    %2025 = vmatpush1.bf16.msra.mxu0 0
    %2026 = vmatprep.subr.bf16.mxu0 0
    %2027 = vmatpush1.bf16.msra.mxu0 0
    %2028 = vmatprep.subr.bf16.mxu0 0
    %2029 = vmatpush1.bf16.msra.mxu0 0
    %2030 = vmatprep.subr.bf16.mxu0 0
    %2031 = vmatpush1.bf16.msra.mxu0 0
    %2032 = vmatprep.subr.bf16.mxu0 0
    %2033 = vmatpush1.bf16.msra.mxu0 0
    %2034 = vmatprep.subr.bf16.mxu0 0
    %2035 = vmatpush1.bf16.msra.mxu0 0
    %2036 = vmatprep.subr.bf16.mxu0 0
    %2037 = vmatpush1.bf16.msra.mxu0 0
    %2038 = vmatprep.subr.bf16.mxu0 0
    %2039 = vmatpush1.bf16.msra.mxu0 0
    %2040 = vmatprep.mubr.bf16.mxu0 0
    %2041 = vmatmul.mubr.bf16.gmra.mrb[0].mxu0 %v2006
    %v2042 = vpop.f32.mrb[0].mxu0
    %v2043 = vadd.f32 0.0, %v2042
    %v2044 = vpop.f32.mrb[0].mxu0
    %v2045 = vpop.f32.mrb[0].mxu0
    %v2046 = vpop.f32.mrb[0].mxu0
    %2047 = vdwg.mxu0
    %v2048 = vadd.f32 %v1695, %v2043
    %v2049 = vpack.c.bf16 %v1990, %v1990
    %2051 = vrot.lane.b32.xlu0 %v2049, 32
    %v2052 = vpop.permute.xlu0 %2051
    %v2054 = vsel %vm170, %v2052, 0
    %2056 = vmatprep.subr.bf16.mxu0 0
    %2057 = vmatpush1.bf16.msra.mxu0 %v1898
    %2058 = vmatprep.subr.bf16.mxu0 0
    %2059 = vmatpush1.bf16.msra.mxu0 %v1899
    %2060 = vmatprep.subr.bf16.mxu0 0
    %2061 = vmatpush1.bf16.msra.mxu0 0
    %2062 = vmatprep.subr.bf16.mxu0 0
    %2063 = vmatpush1.bf16.msra.mxu0 0
    %2064 = vmatprep.subr.bf16.mxu0 0
    %2065 = vmatpush1.bf16.msra.mxu0 0
    %2066 = vmatprep.subr.bf16.mxu0 0
    %2067 = vmatpush1.bf16.msra.mxu0 0
    %2068 = vmatprep.subr.bf16.mxu0 0
    %2069 = vmatpush1.bf16.msra.mxu0 0
    %2070 = vmatprep.subr.bf16.mxu0 0
    %2071 = vmatpush1.bf16.msra.mxu0 0
    %2072 = vmatprep.subr.bf16.mxu0 0
    %2073 = vmatpush1.bf16.msra.mxu0 0
    %2074 = vmatprep.subr.bf16.mxu0 0
    %2075 = vmatpush1.bf16.msra.mxu0 0
    %2076 = vmatprep.subr.bf16.mxu0 0
    %2077 = vmatpush1.bf16.msra.mxu0 0
    %2078 = vmatprep.subr.bf16.mxu0 0
    %2079 = vmatpush1.bf16.msra.mxu0 0
    %2080 = vmatprep.subr.bf16.mxu0 0
    %2081 = vmatpush1.bf16.msra.mxu0 0
    %2082 = vmatprep.subr.bf16.mxu0 0
    %2083 = vmatpush1.bf16.msra.mxu0 0
    %2084 = vmatprep.subr.bf16.mxu0 0
    %2085 = vmatpush1.bf16.msra.mxu0 0
    %2086 = vmatprep.subr.bf16.mxu0 0
    %2087 = vmatpush1.bf16.msra.mxu0 0
    %2088 = vmatprep.mubr.bf16.mxu0 0
    %2089 = vmatmul.mubr.bf16.gmra.mrb[0].mxu0 %v2054
    %v2090 = vpop.f32.mrb[0].mxu0
    %v2091 = vadd.f32 0.0, %v2090
    %v2092 = vpop.f32.mrb[0].mxu0
    %v2093 = vpop.f32.mrb[0].mxu0
    %v2094 = vpop.f32.mrb[0].mxu0
    %2095 = vdwg.mxu0
    %v2096 = vadd.f32 %v1822, %v2091
    %v2097 = vxor.u32 %v2048, 2147483648
    %v2098 = vmul.f32 %v2097, 1.442695
    %v2099 = vpow.pop %v2098
    %v2100 = vadd.f32 %v2099, 1.0
    %v2101 = vrcp.pop %v2100
    %v2102 = vmul.f32 1.0, %v2101
    %v2103 = vtanh.pop %v2048
    %v2104 = vmul.f32 %v2102, %v1960
    %2106 = vrot.lane.b32.xlu0 %v2103, 64
    %v2107 = vpop.permute.xlu0 %2106
    %v2109 = vmul.f32 %v2102, %v2107
    %2111 = vrot.lane.b32.xlu0 %v2109, 32
    %v2112 = vpop.permute.xlu0 %2111
    %v2114 = vadd.f32 %v2104, %v2112
    %v2115 = vtanh.pop %v2114
    %2117 = vrot.lane.b32.xlu0 %v2115, 64
    %v2118 = vpop.permute.xlu0 %2117
    %v2120 = vmul.f32 %v2102, %v2118
    %v2121 = vxor.u32 %v2096, 2147483648
    %v2122 = vmul.f32 %v2121, 1.442695
    %v2123 = vpow.pop %v2122
    %v2124 = vadd.f32 %v2123, 1.0
    %v2125 = vrcp.pop %v2124
    %v2126 = vmul.f32 1.0, %v2125
    %v2127 = vtanh.pop %v2096
    %v2128 = vmul.f32 %v2126, %v1984
    %2130 = vrot.lane.b32.xlu0 %v2127, 64
    %v2131 = vpop.permute.xlu0 %2130
    %v2133 = vmul.f32 %v2126, %v2131
    %2135 = vrot.lane.b32.xlu0 %v2133, 32
    %v2136 = vpop.permute.xlu0 %2135
    %v2138 = vadd.f32 %v2128, %v2136
    %v2139 = vtanh.pop %v2138
    %2141 = vrot.lane.b32.xlu0 %v2139, 64
    %v2142 = vpop.permute.xlu0 %2141
    %v2144 = vmul.f32 %v2126, %v2142
    %2146 = vrot.lane.b32.xlu0 %v2120, 32
    %v2147 = vpop.permute.xlu0 %2146
    %2149 = vst.msk [vmem:[#allocation2 + $0x8] sm:$0xff] %vm170, %v2147
    %2151 = vrot.lane.b32.xlu0 %v2144, 64
    %v2152 = vpop.permute.xlu0 %2151
    %2154 = vst.msk [vmem:[#allocation2 + $0x30] sm:$0xff] %vm513, %v2152
    %v2155 = vpack.c.bf16 %v2120, %v2120
    %2157 = vrot.lane.b32.xlu0 %v2155, 32
    %v2158 = vpop.permute.xlu0 %2157
    %v2160 = vsel %vm170, %v2158, 0
    %2162 = vmatprep.subr.bf16.mxu0 0
    %2163 = vmatpush1.bf16.msra.mxu0 %v1845
    %2164 = vmatprep.subr.bf16.mxu0 0
    %2165 = vmatpush1.bf16.msra.mxu0 %v1846
    %2166 = vmatprep.subr.bf16.mxu0 0
    %2167 = vmatpush1.bf16.msra.mxu0 0
    %2168 = vmatprep.subr.bf16.mxu0 0
    %2169 = vmatpush1.bf16.msra.mxu0 0
    %2170 = vmatprep.subr.bf16.mxu0 0
    %2171 = vmatpush1.bf16.msra.mxu0 0
    %2172 = vmatprep.subr.bf16.mxu0 0
    %2173 = vmatpush1.bf16.msra.mxu0 0
    %2174 = vmatprep.subr.bf16.mxu0 0
    %2175 = vmatpush1.bf16.msra.mxu0 0
    %2176 = vmatprep.subr.bf16.mxu0 0
    %2177 = vmatpush1.bf16.msra.mxu0 0
    %2178 = vmatprep.subr.bf16.mxu0 0
    %2179 = vmatpush1.bf16.msra.mxu0 0
    %2180 = vmatprep.subr.bf16.mxu0 0
    %2181 = vmatpush1.bf16.msra.mxu0 0
    %2182 = vmatprep.subr.bf16.mxu0 0
    %2183 = vmatpush1.bf16.msra.mxu0 0
    %2184 = vmatprep.subr.bf16.mxu0 0
    %2185 = vmatpush1.bf16.msra.mxu0 0
    %2186 = vmatprep.subr.bf16.mxu0 0
    %2187 = vmatpush1.bf16.msra.mxu0 0
    %2188 = vmatprep.subr.bf16.mxu0 0
    %2189 = vmatpush1.bf16.msra.mxu0 0
    %2190 = vmatprep.subr.bf16.mxu0 0
    %2191 = vmatpush1.bf16.msra.mxu0 0
    %2192 = vmatprep.subr.bf16.mxu0 0
    %2193 = vmatpush1.bf16.msra.mxu0 0
    %2194 = vmatprep.mubr.bf16.mxu0 0
    %2195 = vmatmul.mubr.bf16.gmra.mrb[0].mxu0 %v2160
    %v2196 = vpop.f32.mrb[0].mxu0
    %v2197 = vadd.f32 0.0, %v2196
    %v2198 = vpop.f32.mrb[0].mxu0
    %v2199 = vpop.f32.mrb[0].mxu0
    %v2200 = vpop.f32.mrb[0].mxu0
    %2201 = vdwg.mxu0
    %v2202 = vadd.f32 %v1700, %v2197
    %v2203 = vpack.c.bf16 %v2144, %v2144
    %2205 = vrot.lane.b32.xlu0 %v2203, 32
    %v2206 = vpop.permute.xlu0 %2205
    %v2208 = vsel %vm170, %v2206, 0
    %2210 = vmatprep.subr.bf16.mxu0 0
    %2211 = vmatpush1.bf16.msra.mxu0 %v1898
    %2212 = vmatprep.subr.bf16.mxu0 0
    %2213 = vmatpush1.bf16.msra.mxu0 %v1899
    %2214 = vmatprep.subr.bf16.mxu0 0
    %2215 = vmatpush1.bf16.msra.mxu0 0
    %2216 = vmatprep.subr.bf16.mxu0 0
    %2217 = vmatpush1.bf16.msra.mxu0 0
    %2218 = vmatprep.subr.bf16.mxu0 0
    %2219 = vmatpush1.bf16.msra.mxu0 0
    %2220 = vmatprep.subr.bf16.mxu0 0
    %2221 = vmatpush1.bf16.msra.mxu0 0
    %2222 = vmatprep.subr.bf16.mxu0 0
    %2223 = vmatpush1.bf16.msra.mxu0 0
    %2224 = vmatprep.subr.bf16.mxu0 0
    %2225 = vmatpush1.bf16.msra.mxu0 0
    %2226 = vmatprep.subr.bf16.mxu0 0
    %2227 = vmatpush1.bf16.msra.mxu0 0
    %2228 = vmatprep.subr.bf16.mxu0 0
    %2229 = vmatpush1.bf16.msra.mxu0 0
    %2230 = vmatprep.subr.bf16.mxu0 0
    %2231 = vmatpush1.bf16.msra.mxu0 0
    %2232 = vmatprep.subr.bf16.mxu0 0
    %2233 = vmatpush1.bf16.msra.mxu0 0
    %2234 = vmatprep.subr.bf16.mxu0 0
    %2235 = vmatpush1.bf16.msra.mxu0 0
    %2236 = vmatprep.subr.bf16.mxu0 0
    %2237 = vmatpush1.bf16.msra.mxu0 0
    %2238 = vmatprep.subr.bf16.mxu0 0
    %2239 = vmatpush1.bf16.msra.mxu0 0
    %2240 = vmatprep.subr.bf16.mxu0 0
    %2241 = vmatpush1.bf16.msra.mxu0 0
    %2242 = vmatprep.mubr.bf16.mxu0 0
    %2243 = vmatmul.mubr.bf16.gmra.mrb[0].mxu0 %v2208
    %v2244 = vpop.f32.mrb[0].mxu0
    %v2245 = vadd.f32 0.0, %v2244
    %v2246 = vpop.f32.mrb[0].mxu0
    %v2247 = vpop.f32.mrb[0].mxu0
    %v2248 = vpop.f32.mrb[0].mxu0
    %2249 = vdwg.mxu0
    %v2250 = vadd.f32 %v1817, %v2245
    %v2251 = vxor.u32 %v2202, 2147483648
    %v2252 = vmul.f32 %v2251, 1.442695
    %v2253 = vpow.pop %v2252
    %v2254 = vadd.f32 %v2253, 1.0
    %v2255 = vrcp.pop %v2254
    %v2256 = vmul.f32 1.0, %v2255
    %v2257 = vtanh.pop %v2202
    %v2258 = vmul.f32 %v2256, %v2114
    %2260 = vrot.lane.b32.xlu0 %v2257, 64
    %v2261 = vpop.permute.xlu0 %2260
    %v2263 = vmul.f32 %v2256, %v2261
    %2265 = vrot.lane.b32.xlu0 %v2263, 32
    %v2266 = vpop.permute.xlu0 %2265
    %v2268 = vadd.f32 %v2258, %v2266
    %v2269 = vtanh.pop %v2268
    %2271 = vrot.lane.b32.xlu0 %v2269, 64
    %v2272 = vpop.permute.xlu0 %2271
    %v2274 = vmul.f32 %v2256, %v2272
    %v2275 = vxor.u32 %v2250, 2147483648
    %v2276 = vmul.f32 %v2275, 1.442695
    %v2277 = vpow.pop %v2276
    %v2278 = vadd.f32 %v2277, 1.0
    %v2279 = vrcp.pop %v2278
    %v2280 = vmul.f32 1.0, %v2279
    %v2281 = vtanh.pop %v2250
    %v2282 = vmul.f32 %v2280, %v2138
    %2284 = vrot.lane.b32.xlu0 %v2281, 64
    %v2285 = vpop.permute.xlu0 %2284
    %v2287 = vmul.f32 %v2280, %v2285
    %2289 = vrot.lane.b32.xlu0 %v2287, 32
    %v2290 = vpop.permute.xlu0 %2289
    %v2292 = vadd.f32 %v2282, %v2290
    %v2293 = vtanh.pop %v2292
    %2295 = vrot.lane.b32.xlu0 %v2293, 64
    %v2296 = vpop.permute.xlu0 %2295
    %v2298 = vmul.f32 %v2280, %v2296
    %2300 = vrot.lane.b32.xlu0 %v2274, 32
    %v2301 = vpop.permute.xlu0 %2300
    %2303 = vst.msk [vmem:[#allocation2 + $0x10] sm:$0xff] %vm170, %v2301
    %2305 = vrot.lane.b32.xlu0 %v2298, 64
    %v2306 = vpop.permute.xlu0 %2305
    %2308 = vst.msk [vmem:[#allocation2 + $0x28] sm:$0xff] %vm513, %v2306
    %v2309 = vpack.c.bf16 %v2274, %v2274
    %2311 = vrot.lane.b32.xlu0 %v2309, 32
    %v2312 = vpop.permute.xlu0 %2311
    %v2314 = vsel %vm170, %v2312, 0
    %2316 = vmatprep.subr.bf16.mxu0 0
    %2317 = vmatpush1.bf16.msra.mxu0 %v1845
    %2318 = vmatprep.subr.bf16.mxu0 0
    %2319 = vmatpush1.bf16.msra.mxu0 %v1846
    %2320 = vmatprep.subr.bf16.mxu0 0
    %2321 = vmatpush1.bf16.msra.mxu0 0
    %2322 = vmatprep.subr.bf16.mxu0 0
    %2323 = vmatpush1.bf16.msra.mxu0 0
    %2324 = vmatprep.subr.bf16.mxu0 0
    %2325 = vmatpush1.bf16.msra.mxu0 0
    %2326 = vmatprep.subr.bf16.mxu0 0
    %2327 = vmatpush1.bf16.msra.mxu0 0
    %2328 = vmatprep.subr.bf16.mxu0 0
    %2329 = vmatpush1.bf16.msra.mxu0 0
    %2330 = vmatprep.subr.bf16.mxu0 0
    %2331 = vmatpush1.bf16.msra.mxu0 0
    %2332 = vmatprep.subr.bf16.mxu0 0
    %2333 = vmatpush1.bf16.msra.mxu0 0
    %2334 = vmatprep.subr.bf16.mxu0 0
    %2335 = vmatpush1.bf16.msra.mxu0 0
    %2336 = vmatprep.subr.bf16.mxu0 0
    %2337 = vmatpush1.bf16.msra.mxu0 0
    %2338 = vmatprep.subr.bf16.mxu0 0
    %2339 = vmatpush1.bf16.msra.mxu0 0
    %2340 = vmatprep.subr.bf16.mxu0 0
    %2341 = vmatpush1.bf16.msra.mxu0 0
    %2342 = vmatprep.subr.bf16.mxu0 0
    %2343 = vmatpush1.bf16.msra.mxu0 0
    %2344 = vmatprep.subr.bf16.mxu0 0
    %2345 = vmatpush1.bf16.msra.mxu0 0
    %2346 = vmatprep.subr.bf16.mxu0 0
    %2347 = vmatpush1.bf16.msra.mxu0 0
    %2348 = vmatprep.mubr.bf16.mxu0 0
    %2349 = vmatmul.mubr.bf16.gmra.mrb[0].mxu0 %v2314
    %v2350 = vpop.f32.mrb[0].mxu0
    %v2351 = vadd.f32 0.0, %v2350
    %v2352 = vpop.f32.mrb[0].mxu0
    %v2353 = vpop.f32.mrb[0].mxu0
    %v2354 = vpop.f32.mrb[0].mxu0
    %2355 = vdwg.mxu0
    %v2356 = vadd.f32 %v1703, %v2351
    %v2357 = vpack.c.bf16 %v2298, %v2298
    %2359 = vrot.lane.b32.xlu0 %v2357, 32
    %v2360 = vpop.permute.xlu0 %2359
    %v2362 = vsel %vm170, %v2360, 0
    %2364 = vmatprep.subr.bf16.mxu0 0
    %2365 = vmatpush1.bf16.msra.mxu0 %v1898
    %2366 = vmatprep.subr.bf16.mxu0 0
    %2367 = vmatpush1.bf16.msra.mxu0 %v1899
    %2368 = vmatprep.subr.bf16.mxu0 0
    %2369 = vmatpush1.bf16.msra.mxu0 0
    %2370 = vmatprep.subr.bf16.mxu0 0
    %2371 = vmatpush1.bf16.msra.mxu0 0
    %2372 = vmatprep.subr.bf16.mxu0 0
    %2373 = vmatpush1.bf16.msra.mxu0 0
    %2374 = vmatprep.subr.bf16.mxu0 0
    %2375 = vmatpush1.bf16.msra.mxu0 0
    %2376 = vmatprep.subr.bf16.mxu0 0
    %2377 = vmatpush1.bf16.msra.mxu0 0
    %2378 = vmatprep.subr.bf16.mxu0 0
    %2379 = vmatpush1.bf16.msra.mxu0 0
    %2380 = vmatprep.subr.bf16.mxu0 0
    %2381 = vmatpush1.bf16.msra.mxu0 0
    %2382 = vmatprep.subr.bf16.mxu0 0
    %2383 = vmatpush1.bf16.msra.mxu0 0
    %2384 = vmatprep.subr.bf16.mxu0 0
    %2385 = vmatpush1.bf16.msra.mxu0 0
    %2386 = vmatprep.subr.bf16.mxu0 0
    %2387 = vmatpush1.bf16.msra.mxu0 0
    %2388 = vmatprep.subr.bf16.mxu0 0
    %2389 = vmatpush1.bf16.msra.mxu0 0
    %2390 = vmatprep.subr.bf16.mxu0 0
    %2391 = vmatpush1.bf16.msra.mxu0 0
    %2392 = vmatprep.subr.bf16.mxu0 0
    %2393 = vmatpush1.bf16.msra.mxu0 0
    %2394 = vmatprep.subr.bf16.mxu0 0
    %2395 = vmatpush1.bf16.msra.mxu0 0
    %2396 = vmatprep.mubr.bf16.mxu0 0
    %2397 = vmatmul.mubr.bf16.gmra.mrb[0].mxu0 %v2362
    %v2398 = vpop.f32.mrb[0].mxu0
    %v2399 = vadd.f32 0.0, %v2398
    %v2400 = vpop.f32.mrb[0].mxu0
    %v2401 = vpop.f32.mrb[0].mxu0
    %v2402 = vpop.f32.mrb[0].mxu0
    %2403 = vdwg.mxu0
    %v2404 = vadd.f32 %v1814, %v2399
    %v2405 = vxor.u32 %v2356, 2147483648
    %v2406 = vmul.f32 %v2405, 1.442695
    %v2407 = vpow.pop %v2406
    %v2408 = vadd.f32 %v2407, 1.0
    %v2409 = vrcp.pop %v2408
    %v2410 = vmul.f32 1.0, %v2409
    %v2411 = vtanh.pop %v2356
    %v2412 = vmul.f32 %v2410, %v2268
    %2414 = vrot.lane.b32.xlu0 %v2411, 64
    %v2415 = vpop.permute.xlu0 %2414
    %v2417 = vmul.f32 %v2410, %v2415
    %2419 = vrot.lane.b32.xlu0 %v2417, 32
    %v2420 = vpop.permute.xlu0 %2419
    %v2422 = vadd.f32 %v2412, %v2420
    %v2423 = vtanh.pop %v2422
    %2425 = vrot.lane.b32.xlu0 %v2423, 64
    %v2426 = vpop.permute.xlu0 %2425
    %v2428 = vmul.f32 %v2410, %v2426
    %v2429 = vxor.u32 %v2404, 2147483648
    %v2430 = vmul.f32 %v2429, 1.442695
    %v2431 = vpow.pop %v2430
    %v2432 = vadd.f32 %v2431, 1.0
    %v2433 = vrcp.pop %v2432
    %v2434 = vmul.f32 1.0, %v2433
    %v2435 = vtanh.pop %v2404
    %v2436 = vmul.f32 %v2434, %v2292
    %2438 = vrot.lane.b32.xlu0 %v2435, 64
    %v2439 = vpop.permute.xlu0 %2438
    %v2441 = vmul.f32 %v2434, %v2439
    %2443 = vrot.lane.b32.xlu0 %v2441, 32
    %v2444 = vpop.permute.xlu0 %2443
    %v2446 = vadd.f32 %v2436, %v2444
    %v2447 = vtanh.pop %v2446
    %2449 = vrot.lane.b32.xlu0 %v2447, 64
    %v2450 = vpop.permute.xlu0 %2449
    %v2452 = vmul.f32 %v2434, %v2450
    %2454 = vrot.lane.b32.xlu0 %v2428, 32
    %v2455 = vpop.permute.xlu0 %2454
    %2457 = vst.msk [vmem:[#allocation2 + $0x18] sm:$0xff] %vm170, %v2455
    %2459 = vrot.lane.b32.xlu0 %v2452, 64
    %v2460 = vpop.permute.xlu0 %2459
    %2462 = vst.msk [vmem:[#allocation2 + $0x20] sm:$0xff] %vm513, %v2460
    %v2463 = vpack.c.bf16 %v2428, %v2428
    %2465 = vrot.lane.b32.xlu0 %v2463, 32
    %v2466 = vpop.permute.xlu0 %2465
    %v2468 = vsel %vm170, %v2466, 0
    %2470 = vmatprep.subr.bf16.mxu0 0
    %2471 = vmatpush1.bf16.msra.mxu0 %v1845
    %2472 = vmatprep.subr.bf16.mxu0 0
    %2473 = vmatpush1.bf16.msra.mxu0 %v1846
    %2474 = vmatprep.subr.bf16.mxu0 0
    %2475 = vmatpush1.bf16.msra.mxu0 0
    %2476 = vmatprep.subr.bf16.mxu0 0
    %2477 = vmatpush1.bf16.msra.mxu0 0
    %2478 = vmatprep.subr.bf16.mxu0 0
    %2479 = vmatpush1.bf16.msra.mxu0 0
    %2480 = vmatprep.subr.bf16.mxu0 0
    %2481 = vmatpush1.bf16.msra.mxu0 0
    %2482 = vmatprep.subr.bf16.mxu0 0
    %2483 = vmatpush1.bf16.msra.mxu0 0
    %2484 = vmatprep.subr.bf16.mxu0 0
    %2485 = vmatpush1.bf16.msra.mxu0 0
    %2486 = vmatprep.subr.bf16.mxu0 0
    %2487 = vmatpush1.bf16.msra.mxu0 0
    %2488 = vmatprep.subr.bf16.mxu0 0
    %2489 = vmatpush1.bf16.msra.mxu0 0
    %2490 = vmatprep.subr.bf16.mxu0 0
    %2491 = vmatpush1.bf16.msra.mxu0 0
    %2492 = vmatprep.subr.bf16.mxu0 0
    %2493 = vmatpush1.bf16.msra.mxu0 0
    %2494 = vmatprep.subr.bf16.mxu0 0
    %2495 = vmatpush1.bf16.msra.mxu0 0
    %2496 = vmatprep.subr.bf16.mxu0 0
    %2497 = vmatpush1.bf16.msra.mxu0 0
    %2498 = vmatprep.subr.bf16.mxu0 0
    %2499 = vmatpush1.bf16.msra.mxu0 0
    %2500 = vmatprep.subr.bf16.mxu0 0
    %2501 = vmatpush1.bf16.msra.mxu0 0
    %2502 = vmatprep.mubr.bf16.mxu0 0
    %2503 = vmatmul.mubr.bf16.gmra.mrb[0].mxu0 %v2468
    %v2504 = vpop.f32.mrb[0].mxu0
    %v2505 = vadd.f32 0.0, %v2504
    %v2506 = vpop.f32.mrb[0].mxu0
    %v2507 = vpop.f32.mrb[0].mxu0
    %v2508 = vpop.f32.mrb[0].mxu0
    %2509 = vdwg.mxu0
    %v2510 = vadd.f32 %v1708, %v2505
    %v2511 = vpack.c.bf16 %v2452, %v2452
    %2513 = vrot.lane.b32.xlu0 %v2511, 32
    %v2514 = vpop.permute.xlu0 %2513
    %v2516 = vsel %vm170, %v2514, 0
    %2518 = vmatprep.subr.bf16.mxu0 0
    %2519 = vmatpush1.bf16.msra.mxu0 %v1898
    %2520 = vmatprep.subr.bf16.mxu0 0
    %2521 = vmatpush1.bf16.msra.mxu0 %v1899
    %2522 = vmatprep.subr.bf16.mxu0 0
    %2523 = vmatpush1.bf16.msra.mxu0 0
    %2524 = vmatprep.subr.bf16.mxu0 0
    %2525 = vmatpush1.bf16.msra.mxu0 0
    %2526 = vmatprep.subr.bf16.mxu0 0
    %2527 = vmatpush1.bf16.msra.mxu0 0
    %2528 = vmatprep.subr.bf16.mxu0 0
    %2529 = vmatpush1.bf16.msra.mxu0 0
    %2530 = vmatprep.subr.bf16.mxu0 0
    %2531 = vmatpush1.bf16.msra.mxu0 0
    %2532 = vmatprep.subr.bf16.mxu0 0
    %2533 = vmatpush1.bf16.msra.mxu0 0
    %2534 = vmatprep.subr.bf16.mxu0 0
    %2535 = vmatpush1.bf16.msra.mxu0 0
    %2536 = vmatprep.subr.bf16.mxu0 0
    %2537 = vmatpush1.bf16.msra.mxu0 0
    %2538 = vmatprep.subr.bf16.mxu0 0
    %2539 = vmatpush1.bf16.msra.mxu0 0
    %2540 = vmatprep.subr.bf16.mxu0 0
    %2541 = vmatpush1.bf16.msra.mxu0 0
    %2542 = vmatprep.subr.bf16.mxu0 0
    %2543 = vmatpush1.bf16.msra.mxu0 0
    %2544 = vmatprep.subr.bf16.mxu0 0
    %2545 = vmatpush1.bf16.msra.mxu0 0
    %2546 = vmatprep.subr.bf16.mxu0 0
    %2547 = vmatpush1.bf16.msra.mxu0 0
    %2548 = vmatprep.subr.bf16.mxu0 0
    %2549 = vmatpush1.bf16.msra.mxu0 0
    %2550 = vmatprep.mubr.bf16.mxu0 0
    %2551 = vmatmul.mubr.bf16.gmra.mrb[0].mxu0 %v2516
    %v2552 = vpop.f32.mrb[0].mxu0
    %v2553 = vadd.f32 0.0, %v2552
    %v2554 = vpop.f32.mrb[0].mxu0
    %v2555 = vpop.f32.mrb[0].mxu0
    %v2556 = vpop.f32.mrb[0].mxu0
    %2557 = vdwg.mxu0
    %v2558 = vadd.f32 %v1809, %v2553
    %v2559 = vxor.u32 %v2510, 2147483648
    %v2560 = vmul.f32 %v2559, 1.442695
    %v2561 = vpow.pop %v2560
    %v2562 = vadd.f32 %v2561, 1.0
    %v2563 = vrcp.pop %v2562
    %v2564 = vmul.f32 1.0, %v2563
    %v2565 = vtanh.pop %v2510
    %v2566 = vmul.f32 %v2564, %v2422
    %2568 = vrot.lane.b32.xlu0 %v2565, 64
    %v2569 = vpop.permute.xlu0 %2568
    %v2571 = vmul.f32 %v2564, %v2569
    %2573 = vrot.lane.b32.xlu0 %v2571, 32
    %v2574 = vpop.permute.xlu0 %2573
    %v2576 = vadd.f32 %v2566, %v2574
    %v2577 = vtanh.pop %v2576
    %2579 = vrot.lane.b32.xlu0 %v2577, 64
    %v2580 = vpop.permute.xlu0 %2579
    %v2582 = vmul.f32 %v2564, %v2580
    %v2583 = vxor.u32 %v2558, 2147483648
    %v2584 = vmul.f32 %v2583, 1.442695
    %v2585 = vpow.pop %v2584
    %v2586 = vadd.f32 %v2585, 1.0
    %v2587 = vrcp.pop %v2586
    %v2588 = vmul.f32 1.0, %v2587
    %v2589 = vtanh.pop %v2558
    %v2590 = vmul.f32 %v2588, %v2446
    %2592 = vrot.lane.b32.xlu0 %v2589, 64
    %v2593 = vpop.permute.xlu0 %2592
    %v2595 = vmul.f32 %v2588, %v2593
    %2597 = vrot.lane.b32.xlu0 %v2595, 32
    %v2598 = vpop.permute.xlu0 %2597
    %v2600 = vadd.f32 %v2590, %v2598
    %v2601 = vtanh.pop %v2600
    %2603 = vrot.lane.b32.xlu0 %v2601, 64
    %v2604 = vpop.permute.xlu0 %2603
    %v2606 = vmul.f32 %v2588, %v2604
    %2608 = vrot.lane.b32.xlu0 %v2582, 32
    %v2609 = vpop.permute.xlu0 %2608
    %2611 = vst.msk [vmem:[#allocation2 + $0x20] sm:$0xff] %vm170, %v2609
    %2613 = vrot.lane.b32.xlu0 %v2606, 64
    %v2614 = vpop.permute.xlu0 %2613
    %2616 = vst.msk [vmem:[#allocation2 + $0x18] sm:$0xff] %vm513, %v2614
    %v2617 = vpack.c.bf16 %v2582, %v2582
    %2619 = vrot.lane.b32.xlu0 %v2617, 32
    %v2620 = vpop.permute.xlu0 %2619
    %v2622 = vsel %vm170, %v2620, 0
    %2624 = vmatprep.subr.bf16.mxu0 0
    %2625 = vmatpush1.bf16.msra.mxu0 %v1845
    %2626 = vmatprep.subr.bf16.mxu0 0
    %2627 = vmatpush1.bf16.msra.mxu0 %v1846
    %2628 = vmatprep.subr.bf16.mxu0 0
    %2629 = vmatpush1.bf16.msra.mxu0 0
    %2630 = vmatprep.subr.bf16.mxu0 0
    %2631 = vmatpush1.bf16.msra.mxu0 0
    %2632 = vmatprep.subr.bf16.mxu0 0
    %2633 = vmatpush1.bf16.msra.mxu0 0
    %2634 = vmatprep.subr.bf16.mxu0 0
    %2635 = vmatpush1.bf16.msra.mxu0 0
    %2636 = vmatprep.subr.bf16.mxu0 0
    %2637 = vmatpush1.bf16.msra.mxu0 0
    %2638 = vmatprep.subr.bf16.mxu0 0
    %2639 = vmatpush1.bf16.msra.mxu0 0
    %2640 = vmatprep.subr.bf16.mxu0 0
    %2641 = vmatpush1.bf16.msra.mxu0 0
    %2642 = vmatprep.subr.bf16.mxu0 0
    %2643 = vmatpush1.bf16.msra.mxu0 0
    %2644 = vmatprep.subr.bf16.mxu0 0
    %2645 = vmatpush1.bf16.msra.mxu0 0
    %2646 = vmatprep.subr.bf16.mxu0 0
    %2647 = vmatpush1.bf16.msra.mxu0 0
    %2648 = vmatprep.subr.bf16.mxu0 0
    %2649 = vmatpush1.bf16.msra.mxu0 0
    %2650 = vmatprep.subr.bf16.mxu0 0
    %2651 = vmatpush1.bf16.msra.mxu0 0
    %2652 = vmatprep.subr.bf16.mxu0 0
    %2653 = vmatpush1.bf16.msra.mxu0 0
    %2654 = vmatprep.subr.bf16.mxu0 0
    %2655 = vmatpush1.bf16.msra.mxu0 0
    %2656 = vmatprep.mubr.bf16.mxu0 0
    %2657 = vmatmul.mubr.bf16.gmra.mrb[0].mxu0 %v2622
    %v2658 = vpop.f32.mrb[0].mxu0
    %v2659 = vadd.f32 0.0, %v2658
    %v2660 = vpop.f32.mrb[0].mxu0
    %v2661 = vpop.f32.mrb[0].mxu0
    %v2662 = vpop.f32.mrb[0].mxu0
    %2663 = vdwg.mxu0
    %v2664 = vadd.f32 %v1711, %v2659
    %v2665 = vpack.c.bf16 %v2606, %v2606
    %2667 = vrot.lane.b32.xlu0 %v2665, 32
    %v2668 = vpop.permute.xlu0 %2667
    %v2670 = vsel %vm170, %v2668, 0
    %2672 = vmatprep.subr.bf16.mxu0 0
    %2673 = vmatpush1.bf16.msra.mxu0 %v1898
    %2674 = vmatprep.subr.bf16.mxu0 0
    %2675 = vmatpush1.bf16.msra.mxu0 %v1899
    %2676 = vmatprep.subr.bf16.mxu0 0
    %2677 = vmatpush1.bf16.msra.mxu0 0
    %2678 = vmatprep.subr.bf16.mxu0 0
    %2679 = vmatpush1.bf16.msra.mxu0 0
    %2680 = vmatprep.subr.bf16.mxu0 0
    %2681 = vmatpush1.bf16.msra.mxu0 0
    %2682 = vmatprep.subr.bf16.mxu0 0
    %2683 = vmatpush1.bf16.msra.mxu0 0
    %2684 = vmatprep.subr.bf16.mxu0 0
    %2685 = vmatpush1.bf16.msra.mxu0 0
    %2686 = vmatprep.subr.bf16.mxu0 0
    %2687 = vmatpush1.bf16.msra.mxu0 0
    %2688 = vmatprep.subr.bf16.mxu0 0
    %2689 = vmatpush1.bf16.msra.mxu0 0
    %2690 = vmatprep.subr.bf16.mxu0 0
    %2691 = vmatpush1.bf16.msra.mxu0 0
    %2692 = vmatprep.subr.bf16.mxu0 0
    %2693 = vmatpush1.bf16.msra.mxu0 0
    %2694 = vmatprep.subr.bf16.mxu0 0
    %2695 = vmatpush1.bf16.msra.mxu0 0
    %2696 = vmatprep.subr.bf16.mxu0 0
    %2697 = vmatpush1.bf16.msra.mxu0 0
    %2698 = vmatprep.subr.bf16.mxu0 0
    %2699 = vmatpush1.bf16.msra.mxu0 0
    %2700 = vmatprep.subr.bf16.mxu0 0
    %2701 = vmatpush1.bf16.msra.mxu0 0
    %2702 = vmatprep.subr.bf16.mxu0 0
    %2703 = vmatpush1.bf16.msra.mxu0 0
    %2704 = vmatprep.mubr.bf16.mxu0 0
    %2705 = vmatmul.mubr.bf16.gmra.mrb[0].mxu0 %v2670
    %v2706 = vpop.f32.mrb[0].mxu0
    %v2707 = vadd.f32 0.0, %v2706
    %v2708 = vpop.f32.mrb[0].mxu0
    %v2709 = vpop.f32.mrb[0].mxu0
    %v2710 = vpop.f32.mrb[0].mxu0
    %2711 = vdwg.mxu0
    %v2712 = vadd.f32 %v1806, %v2707
    %v2713 = vxor.u32 %v2664, 2147483648
    %v2714 = vmul.f32 %v2713, 1.442695
    %v2715 = vpow.pop %v2714
    %v2716 = vadd.f32 %v2715, 1.0
    %v2717 = vrcp.pop %v2716
    %v2718 = vmul.f32 1.0, %v2717
    %v2719 = vtanh.pop %v2664
    %v2720 = vmul.f32 %v2718, %v2576
    %2722 = vrot.lane.b32.xlu0 %v2719, 64
    %v2723 = vpop.permute.xlu0 %2722
    %v2725 = vmul.f32 %v2718, %v2723
    %2727 = vrot.lane.b32.xlu0 %v2725, 32
    %v2728 = vpop.permute.xlu0 %2727
    %v2730 = vadd.f32 %v2720, %v2728
    %v2731 = vtanh.pop %v2730
    %2733 = vrot.lane.b32.xlu0 %v2731, 64
    %v2734 = vpop.permute.xlu0 %2733
    %v2736 = vmul.f32 %v2718, %v2734
    %v2737 = vxor.u32 %v2712, 2147483648
    %v2738 = vmul.f32 %v2737, 1.442695
    %v2739 = vpow.pop %v2738
    %v2740 = vadd.f32 %v2739, 1.0
    %v2741 = vrcp.pop %v2740
    %v2742 = vmul.f32 1.0, %v2741
    %v2743 = vtanh.pop %v2712
    %v2744 = vmul.f32 %v2742, %v2600
    %2746 = vrot.lane.b32.xlu0 %v2743, 64
    %v2747 = vpop.permute.xlu0 %2746
    %v2749 = vmul.f32 %v2742, %v2747
    %2751 = vrot.lane.b32.xlu0 %v2749, 32
    %v2752 = vpop.permute.xlu0 %2751
    %v2754 = vadd.f32 %v2744, %v2752
    %v2755 = vtanh.pop %v2754
    %2757 = vrot.lane.b32.xlu0 %v2755, 64
    %v2758 = vpop.permute.xlu0 %2757
    %v2760 = vmul.f32 %v2742, %v2758
    %2762 = vrot.lane.b32.xlu0 %v2736, 32
    %v2763 = vpop.permute.xlu0 %2762
    %2765 = vst.msk [vmem:[#allocation2 + $0x28] sm:$0xff] %vm170, %v2763
    %2767 = vrot.lane.b32.xlu0 %v2760, 64
    %v2768 = vpop.permute.xlu0 %2767
    %2770 = vst.msk [vmem:[#allocation2 + $0x10] sm:$0xff] %vm513, %v2768
    %v2771 = vpack.c.bf16 %v2736, %v2736
    %2773 = vrot.lane.b32.xlu0 %v2771, 32
    %v2774 = vpop.permute.xlu0 %2773
    %v2776 = vsel %vm170, %v2774, 0
    %2778 = vmatprep.subr.bf16.mxu0 0
    %2779 = vmatpush1.bf16.msra.mxu0 %v1845
    %2780 = vmatprep.subr.bf16.mxu0 0
    %2781 = vmatpush1.bf16.msra.mxu0 %v1846
    %2782 = vmatprep.subr.bf16.mxu0 0
    %2783 = vmatpush1.bf16.msra.mxu0 0
    %2784 = vmatprep.subr.bf16.mxu0 0
    %2785 = vmatpush1.bf16.msra.mxu0 0
    %2786 = vmatprep.subr.bf16.mxu0 0
    %2787 = vmatpush1.bf16.msra.mxu0 0
    %2788 = vmatprep.subr.bf16.mxu0 0
    %2789 = vmatpush1.bf16.msra.mxu0 0
    %2790 = vmatprep.subr.bf16.mxu0 0
    %2791 = vmatpush1.bf16.msra.mxu0 0
    %2792 = vmatprep.subr.bf16.mxu0 0
    %2793 = vmatpush1.bf16.msra.mxu0 0
    %2794 = vmatprep.subr.bf16.mxu0 0
    %2795 = vmatpush1.bf16.msra.mxu0 0
    %2796 = vmatprep.subr.bf16.mxu0 0
    %2797 = vmatpush1.bf16.msra.mxu0 0
    %2798 = vmatprep.subr.bf16.mxu0 0
    %2799 = vmatpush1.bf16.msra.mxu0 0
    %2800 = vmatprep.subr.bf16.mxu0 0
    %2801 = vmatpush1.bf16.msra.mxu0 0
    %2802 = vmatprep.subr.bf16.mxu0 0
    %2803 = vmatpush1.bf16.msra.mxu0 0
    %2804 = vmatprep.subr.bf16.mxu0 0
    %2805 = vmatpush1.bf16.msra.mxu0 0
    %2806 = vmatprep.subr.bf16.mxu0 0
    %2807 = vmatpush1.bf16.msra.mxu0 0
    %2808 = vmatprep.subr.bf16.mxu0 0
    %2809 = vmatpush1.bf16.msra.mxu0 0
    %2810 = vmatprep.mubr.bf16.mxu0 0
    %2811 = vmatmul.mubr.bf16.gmra.mrb[0].mxu0 %v2776
    %v2812 = vpop.f32.mrb[0].mxu0
    %v2813 = vadd.f32 0.0, %v2812
    %v2814 = vpop.f32.mrb[0].mxu0
    %v2815 = vpop.f32.mrb[0].mxu0
    %v2816 = vpop.f32.mrb[0].mxu0
    %2817 = vdwg.mxu0
    %v2818 = vadd.f32 %v1716, %v2813
    %v2819 = vpack.c.bf16 %v2760, %v2760
    %2821 = vrot.lane.b32.xlu0 %v2819, 32
    %v2822 = vpop.permute.xlu0 %2821
    %v2824 = vsel %vm170, %v2822, 0
    %2826 = vmatprep.subr.bf16.mxu0 0
    %2827 = vmatpush1.bf16.msra.mxu0 %v1898
    %2828 = vmatprep.subr.bf16.mxu0 0
    %2829 = vmatpush1.bf16.msra.mxu0 %v1899
    %2830 = vmatprep.subr.bf16.mxu0 0
    %2831 = vmatpush1.bf16.msra.mxu0 0
    %2832 = vmatprep.subr.bf16.mxu0 0
    %2833 = vmatpush1.bf16.msra.mxu0 0
    %2834 = vmatprep.subr.bf16.mxu0 0
    %2835 = vmatpush1.bf16.msra.mxu0 0
    %2836 = vmatprep.subr.bf16.mxu0 0
    %2837 = vmatpush1.bf16.msra.mxu0 0
    %2838 = vmatprep.subr.bf16.mxu0 0
    %2839 = vmatpush1.bf16.msra.mxu0 0
    %2840 = vmatprep.subr.bf16.mxu0 0
    %2841 = vmatpush1.bf16.msra.mxu0 0
    %2842 = vmatprep.subr.bf16.mxu0 0
    %2843 = vmatpush1.bf16.msra.mxu0 0
    %2844 = vmatprep.subr.bf16.mxu0 0
    %2845 = vmatpush1.bf16.msra.mxu0 0
    %2846 = vmatprep.subr.bf16.mxu0 0
    %2847 = vmatpush1.bf16.msra.mxu0 0
    %2848 = vmatprep.subr.bf16.mxu0 0
    %2849 = vmatpush1.bf16.msra.mxu0 0
    %2850 = vmatprep.subr.bf16.mxu0 0
    %2851 = vmatpush1.bf16.msra.mxu0 0
    %2852 = vmatprep.subr.bf16.mxu0 0
    %2853 = vmatpush1.bf16.msra.mxu0 0
    %2854 = vmatprep.subr.bf16.mxu0 0
    %2855 = vmatpush1.bf16.msra.mxu0 0
    %2856 = vmatprep.subr.bf16.mxu0 0
    %2857 = vmatpush1.bf16.msra.mxu0 0
    %2858 = vmatprep.mubr.bf16.mxu0 0
    %2859 = vmatmul.mubr.bf16.gmra.mrb[0].mxu0 %v2824
    %v2860 = vpop.f32.mrb[0].mxu0
    %v2861 = vadd.f32 0.0, %v2860
    %v2862 = vpop.f32.mrb[0].mxu0
    %v2863 = vpop.f32.mrb[0].mxu0
    %v2864 = vpop.f32.mrb[0].mxu0
    %2865 = vdwg.mxu0
    %v2866 = vadd.f32 %v1801, %v2861
    %v2867 = vxor.u32 %v2818, 2147483648
    %v2868 = vmul.f32 %v2867, 1.442695
    %v2869 = vpow.pop %v2868
    %v2870 = vadd.f32 %v2869, 1.0
    %v2871 = vrcp.pop %v2870
    %v2872 = vmul.f32 1.0, %v2871
    %v2873 = vtanh.pop %v2818
    %v2874 = vmul.f32 %v2872, %v2730
    %2876 = vrot.lane.b32.xlu0 %v2873, 64
    %v2877 = vpop.permute.xlu0 %2876
    %v2879 = vmul.f32 %v2872, %v2877
    %2881 = vrot.lane.b32.xlu0 %v2879, 32
    %v2882 = vpop.permute.xlu0 %2881
    %v2884 = vadd.f32 %v2874, %v2882
    %v2885 = vtanh.pop %v2884
    %2887 = vrot.lane.b32.xlu0 %v2885, 64
    %v2888 = vpop.permute.xlu0 %2887
    %v2890 = vmul.f32 %v2872, %v2888
    %v2891 = vxor.u32 %v2866, 2147483648
    %v2892 = vmul.f32 %v2891, 1.442695
    %v2893 = vpow.pop %v2892
    %v2894 = vadd.f32 %v2893, 1.0
    %v2895 = vrcp.pop %v2894
    %v2896 = vmul.f32 1.0, %v2895
    %v2897 = vtanh.pop %v2866
    %v2898 = vmul.f32 %v2896, %v2754
    %2900 = vrot.lane.b32.xlu0 %v2897, 64
    %v2901 = vpop.permute.xlu0 %2900
    %v2903 = vmul.f32 %v2896, %v2901
    %2905 = vrot.lane.b32.xlu0 %v2903, 32
    %v2906 = vpop.permute.xlu0 %2905
    %v2908 = vadd.f32 %v2898, %v2906
    %v2909 = vtanh.pop %v2908
    %2911 = vrot.lane.b32.xlu0 %v2909, 64
    %v2912 = vpop.permute.xlu0 %2911
    %v2914 = vmul.f32 %v2896, %v2912
    %2916 = vrot.lane.b32.xlu0 %v2890, 32
    %v2917 = vpop.permute.xlu0 %2916
    %2919 = vst.msk [vmem:[#allocation2 + $0x30] sm:$0xff] %vm170, %v2917
    %2921 = vrot.lane.b32.xlu0 %v2914, 64
    %v2922 = vpop.permute.xlu0 %2921
    %2924 = vst.msk [vmem:[#allocation2 + $0x8] sm:$0xff] %vm513, %v2922
    %v2925 = vpack.c.bf16 %v2890, %v2890
    %2927 = vrot.lane.b32.xlu0 %v2925, 32
    %v2928 = vpop.permute.xlu0 %2927
    %v2930 = vsel %vm170, %v2928, 0
    %2932 = vmatprep.subr.bf16.mxu0 0
    %2933 = vmatpush1.bf16.msra.mxu0 %v1845
    %2934 = vmatprep.subr.bf16.mxu0 0
    %2935 = vmatpush1.bf16.msra.mxu0 %v1846
    %2936 = vmatprep.subr.bf16.mxu0 0
    %2937 = vmatpush1.bf16.msra.mxu0 0
    %2938 = vmatprep.subr.bf16.mxu0 0
    %2939 = vmatpush1.bf16.msra.mxu0 0
    %2940 = vmatprep.subr.bf16.mxu0 0
    %2941 = vmatpush1.bf16.msra.mxu0 0
    %2942 = vmatprep.subr.bf16.mxu0 0
    %2943 = vmatpush1.bf16.msra.mxu0 0
    %2944 = vmatprep.subr.bf16.mxu0 0
    %2945 = vmatpush1.bf16.msra.mxu0 0
    %2946 = vmatprep.subr.bf16.mxu0 0
    %2947 = vmatpush1.bf16.msra.mxu0 0
    %2948 = vmatprep.subr.bf16.mxu0 0
    %2949 = vmatpush1.bf16.msra.mxu0 0
    %2950 = vmatprep.subr.bf16.mxu0 0
    %2951 = vmatpush1.bf16.msra.mxu0 0
    %2952 = vmatprep.subr.bf16.mxu0 0
    %2953 = vmatpush1.bf16.msra.mxu0 0
    %2954 = vmatprep.subr.bf16.mxu0 0
    %2955 = vmatpush1.bf16.msra.mxu0 0
    %2956 = vmatprep.subr.bf16.mxu0 0
    %2957 = vmatpush1.bf16.msra.mxu0 0
    %2958 = vmatprep.subr.bf16.mxu0 0
    %2959 = vmatpush1.bf16.msra.mxu0 0
    %2960 = vmatprep.subr.bf16.mxu0 0
    %2961 = vmatpush1.bf16.msra.mxu0 0
    %2962 = vmatprep.subr.bf16.mxu0 0
    %2963 = vmatpush1.bf16.msra.mxu0 0
    %2964 = vmatprep.mubr.bf16.mxu0 0
    %2965 = vmatmul.mubr.bf16.gmra.mrb[0].mxu0 %v2930
    %v2966 = vpop.f32.mrb[0].mxu0
    %v2967 = vadd.f32 0.0, %v2966
    %v2968 = vpop.f32.mrb[0].mxu0
    %v2969 = vpop.f32.mrb[0].mxu0
    %v2970 = vpop.f32.mrb[0].mxu0
    %2971 = vdwg.mxu0
    %v2972 = vadd.f32 %v1719, %v2967
    %v2973 = vpack.c.bf16 %v2914, %v2914
    %2975 = vrot.lane.b32.xlu0 %v2973, 32
    %v2976 = vpop.permute.xlu0 %2975
    %v2978 = vsel %vm170, %v2976, 0
    %2980 = vmatprep.subr.bf16.mxu0 0
    %2981 = vmatpush1.bf16.msra.mxu0 %v1898
    %2982 = vmatprep.subr.bf16.mxu0 0
    %2983 = vmatpush1.bf16.msra.mxu0 %v1899
    %2984 = vmatprep.subr.bf16.mxu0 0
    %2985 = vmatpush1.bf16.msra.mxu0 0
    %2986 = vmatprep.subr.bf16.mxu0 0
    %2987 = vmatpush1.bf16.msra.mxu0 0
    %2988 = vmatprep.subr.bf16.mxu0 0
    %2989 = vmatpush1.bf16.msra.mxu0 0
    %2990 = vmatprep.subr.bf16.mxu0 0
    %2991 = vmatpush1.bf16.msra.mxu0 0
    %2992 = vmatprep.subr.bf16.mxu0 0
    %2993 = vmatpush1.bf16.msra.mxu0 0
    %2994 = vmatprep.subr.bf16.mxu0 0
    %2995 = vmatpush1.bf16.msra.mxu0 0
    %2996 = vmatprep.subr.bf16.mxu0 0
    %2997 = vmatpush1.bf16.msra.mxu0 0
    %2998 = vmatprep.subr.bf16.mxu0 0
    %2999 = vmatpush1.bf16.msra.mxu0 0
    %3000 = vmatprep.subr.bf16.mxu0 0
    %3001 = vmatpush1.bf16.msra.mxu0 0
    %3002 = vmatprep.subr.bf16.mxu0 0
    %3003 = vmatpush1.bf16.msra.mxu0 0
    %3004 = vmatprep.subr.bf16.mxu0 0
    %3005 = vmatpush1.bf16.msra.mxu0 0
    %3006 = vmatprep.subr.bf16.mxu0 0
    %3007 = vmatpush1.bf16.msra.mxu0 0
    %3008 = vmatprep.subr.bf16.mxu0 0
    %3009 = vmatpush1.bf16.msra.mxu0 0
    %3010 = vmatprep.subr.bf16.mxu0 0
    %3011 = vmatpush1.bf16.msra.mxu0 0
    %3012 = vmatprep.mubr.bf16.mxu0 0
    %3013 = vmatmul.mubr.bf16.gmra.mrb[0].mxu0 %v2978
    %v3014 = vpop.f32.mrb[0].mxu0
    %v3015 = vadd.f32 0.0, %v3014
    %v3016 = vpop.f32.mrb[0].mxu0
    %v3017 = vpop.f32.mrb[0].mxu0
    %v3018 = vpop.f32.mrb[0].mxu0
    %3019 = vdwg.mxu0
    %v3020 = vadd.f32 %v1798, %v3015
    %v3021 = vxor.u32 %v2972, 2147483648
    %v3022 = vmul.f32 %v3021, 1.442695
    %v3023 = vpow.pop %v3022
    %v3024 = vadd.f32 %v3023, 1.0
    %v3025 = vrcp.pop %v3024
    %v3026 = vmul.f32 1.0, %v3025
    %v3027 = vtanh.pop %v2972
    %v3028 = vmul.f32 %v3026, %v2884
    %3030 = vrot.lane.b32.xlu0 %v3027, 64
    %v3031 = vpop.permute.xlu0 %3030
    %v3033 = vmul.f32 %v3026, %v3031
    %3035 = vrot.lane.b32.xlu0 %v3033, 32
    %v3036 = vpop.permute.xlu0 %3035
    %v3038 = vadd.f32 %v3028, %v3036
    %v3039 = vtanh.pop %v3038
    %3041 = vrot.lane.b32.xlu0 %v3039, 64
    %v3042 = vpop.permute.xlu0 %3041
    %v3044 = vmul.f32 %v3026, %v3042
    %v3045 = vxor.u32 %v3020, 2147483648
    %v3046 = vmul.f32 %v3045, 1.442695
    %v3047 = vpow.pop %v3046
    %v3048 = vadd.f32 %v3047, 1.0
    %v3049 = vrcp.pop %v3048
    %v3050 = vmul.f32 1.0, %v3049
    %v3051 = vtanh.pop %v3020
    %v3052 = vmul.f32 %v3050, %v2908
    %3054 = vrot.lane.b32.xlu0 %v3051, 64
    %v3055 = vpop.permute.xlu0 %3054
    %v3057 = vmul.f32 %v3050, %v3055
    %3059 = vrot.lane.b32.xlu0 %v3057, 32
    %v3060 = vpop.permute.xlu0 %3059
    %v3062 = vadd.f32 %v3052, %v3060
    %v3063 = vtanh.pop %v3062
    %3065 = vrot.lane.b32.xlu0 %v3063, 64
    %v3066 = vpop.permute.xlu0 %3065
    %v3068 = vmul.f32 %v3050, %v3066
    %3070 = vrot.lane.b32.xlu0 %v3044, 32
    %v3071 = vpop.permute.xlu0 %3070
    %3073 = vst.msk [vmem:[#allocation2 + $0x38] sm:$0xff] %vm170, %v3071
    %3075 = vrot.lane.b32.xlu0 %v3068, 64
    %v3076 = vpop.permute.xlu0 %3075
    %3078 = vst.msk [vmem:[#allocation2] sm:$0xff] %vm513, %v3076
    %v3079 = vld [vmem:[#allocation2] sm:$0xff]
    %v3080 = vld [vmem:[#allocation2 + $0x8] sm:$0xff]
    %v3081 = vld [vmem:[#allocation2 + $0x10] sm:$0xff]
    %v3082 = vld [vmem:[#allocation2 + $0x18] sm:$0xff]
    %v3083 = vld [vmem:[#allocation2 + $0x20] sm:$0xff]
    %v3084 = vld [vmem:[#allocation2 + $0x28] sm:$0xff]
    %v3085 = vld [vmem:[#allocation2 + $0x30] sm:$0xff]
    %v3086 = vld [vmem:[#allocation2 + $0x38] sm:$0xff]
    %v3087 = vpack.c.bf16 %v3080, %v3079
    %v3088 = vpack.c.bf16 %v3082, %v3081
    %v3089 = vpack.c.bf16 %v3084, %v3083
    %v3090 = vpack.c.bf16 %v3086, %v3085
    %v3091 = vld [vmem:[%s7] sm:$0xf]
    %v3092 = vld [vmem:[%s7 + $0x4] sm:$0xf]
    %v3093 = vld [vmem:[%s7 + $0x8] sm:$0xf]
    %v3094 = vld [vmem:[%s7 + $0xc] sm:$0xf]
    %v3095 = vld [vmem:[%s7 + $0x10] sm:$0xf]
    %v3096 = vld [vmem:[%s7 + $0x14] sm:$0xf]
    %v3097 = vld [vmem:[%s7 + $0x18] sm:$0xf]
    %v3098 = vld [vmem:[%s7 + $0x1c] sm:$0xf]
    %v3099 = vld [vmem:[#allocation10] sm:$0x1]
    %v3101 = vlaneseq
    %v3102 = vshrl.u32 %v3101, 7
    %v3103 = vsub.s32 0, %v3102
    %v3104 = vrot.slane %v3099, %v3103
    %v3114 = vunpack.c.l.b16 %v3091
    %v3115 = vunpack.c.l.b16 %v3092
    %v3116 = vunpack.c.l.b16 %v3093
    %v3117 = vunpack.c.l.b16 %v3094
    %v3118 = vunpack.c.l.b16 %v3095
    %v3119 = vunpack.c.l.b16 %v3096
    %v3120 = vunpack.c.l.b16 %v3097
    %v3121 = vunpack.c.l.b16 %v3098
    %v3122 = vpack.c.b16 %v3115, %v3114
    %v3123 = vpack.c.b16 %v3117, %v3116
    %v3124 = vpack.c.b16 %v3119, %v3118
    %v3125 = vpack.c.b16 %v3121, %v3120
    %v3131 = vsel %vm1644, %v3087, 0
    %v3134 = vsel %vm1644, %v3088, 0
    %v3137 = vsel %vm1644, %v3089, 0
    %v3140 = vsel %vm1644, %v3090, 0
    %3142 = vmatprep.subr.bf16.mxu0 0
    %3143 = vmatpush1.bf16.msra.mxu0 %v3122
    %3144 = vmatprep.subr.bf16.mxu0 0
    %3145 = vmatpush1.bf16.msra.mxu0 %v3123
    %3146 = vmatprep.subr.bf16.mxu0 0
    %3147 = vmatpush1.bf16.msra.mxu0 %v3124
    %3148 = vmatprep.subr.bf16.mxu0 0
    %3149 = vmatpush1.bf16.msra.mxu0 %v3125
    %3150 = vmatprep.subr.bf16.mxu0 0
    %3151 = vmatpush1.bf16.msra.mxu0 0
    %3152 = vmatprep.subr.bf16.mxu0 0
    %3153 = vmatpush1.bf16.msra.mxu0 0
    %3154 = vmatprep.subr.bf16.mxu0 0
    %3155 = vmatpush1.bf16.msra.mxu0 0
    %3156 = vmatprep.subr.bf16.mxu0 0
    %3157 = vmatpush1.bf16.msra.mxu0 0
    %3158 = vmatprep.subr.bf16.mxu0 0
    %3159 = vmatpush1.bf16.msra.mxu0 0
    %3160 = vmatprep.subr.bf16.mxu0 0
    %3161 = vmatpush1.bf16.msra.mxu0 0
    %3162 = vmatprep.subr.bf16.mxu0 0
    %3163 = vmatpush1.bf16.msra.mxu0 0
    %3164 = vmatprep.subr.bf16.mxu0 0
    %3165 = vmatpush1.bf16.msra.mxu0 0
    %3166 = vmatprep.subr.bf16.mxu0 0
    %3167 = vmatpush1.bf16.msra.mxu0 0
    %3168 = vmatprep.subr.bf16.mxu0 0
    %3169 = vmatpush1.bf16.msra.mxu0 0
    %3170 = vmatprep.subr.bf16.mxu0 0
    %3171 = vmatpush1.bf16.msra.mxu0 0
    %3172 = vmatprep.subr.bf16.mxu0 0
    %3173 = vmatpush1.bf16.msra.mxu0 0
    %3174 = vmatprep.mubr.bf16.mxu0 0
    %3175 = vmatmul.mubr.bf16.gmra.mrb[0].mxu0 %v3131
    %v3176 = vpop.f32.mrb[0].mxu0
    %v3177 = vadd.f32 %v3104, %v3176
    %v3178 = vpop.f32.mrb[0].mxu0
    %v3179 = vpop.f32.mrb[0].mxu0
    %v3180 = vadd.f32 %v3104, %v3179
    %v3181 = vpop.f32.mrb[0].mxu0
    %3182 = vmatprep.mubr.bf16.mxu0 0
    %3183 = vmatmul.mubr.bf16.gmra.mrb[0].mxu0 %v3134
    %v3184 = vpop.f32.mrb[0].mxu0
    %v3185 = vadd.f32 %v3104, %v3184
    %v3186 = vpop.f32.mrb[0].mxu0
    %v3187 = vpop.f32.mrb[0].mxu0
    %v3188 = vadd.f32 %v3104, %v3187
    %v3189 = vpop.f32.mrb[0].mxu0
    %3190 = vmatprep.mubr.bf16.mxu0 0
    %3191 = vmatmul.mubr.bf16.gmra.mrb[0].mxu0 %v3137
    %v3192 = vpop.f32.mrb[0].mxu0
    %v3193 = vadd.f32 %v3104, %v3192
    %v3194 = vpop.f32.mrb[0].mxu0
    %v3195 = vpop.f32.mrb[0].mxu0
    %v3196 = vadd.f32 %v3104, %v3195
    %v3197 = vpop.f32.mrb[0].mxu0
    %3198 = vmatprep.mubr.bf16.mxu0 0
    %3199 = vmatmul.mubr.bf16.gmra.mrb[0].mxu0 %v3140
    %v3200 = vpop.f32.mrb[0].mxu0
    %v3201 = vadd.f32 %v3104, %v3200
    %v3202 = vpop.f32.mrb[0].mxu0
    %v3203 = vpop.f32.mrb[0].mxu0
    %v3204 = vadd.f32 %v3104, %v3203
    %v3205 = vpop.f32.mrb[0].mxu0
    %3206 = vdwg.mxu0
    %v3207 = vmax.f32 %v3177, 0.0
    %v3208 = vmax.f32 %v3180, 0.0
    %v3209 = vmax.f32 %v3185, 0.0
    %v3210 = vmax.f32 %v3188, 0.0
    %v3211 = vmax.f32 %v3193, 0.0
    %v3212 = vmax.f32 %v3196, 0.0
    %v3213 = vmax.f32 %v3201, 0.0
    %v3214 = vmax.f32 %v3204, 0.0
    %v3215 = vpack.c.bf16 %v3208, %v3207
    %v3216 = vpack.c.bf16 %v3210, %v3209
    %v3217 = vpack.c.bf16 %v3212, %v3211
    %v3218 = vpack.c.bf16 %v3214, %v3213
    %v3219 = vld [vmem:[#allocation11] sm:$0xf]
    %v3220 = vld [vmem:[#allocation11 + $0x4] sm:$0xf]
    %v3221 = vld [vmem:[#allocation11 + $0x8] sm:$0xf]
    %v3222 = vld [vmem:[#allocation11 + $0xc] sm:$0xf]
    %v3223 = vld [vmem:[%s10] sm:$0x1]
    %v3225 = vlaneseq
    %v3226 = vshrl.u32 %v3225, 7
    %v3227 = vsub.s32 0, %v3226
    %v3228 = vrot.slane %v3223, %v3227
    %v3234 = vunpack.c.l.b16 %v3219
    %v3235 = vunpack.c.l.b16 %v3220
    %v3236 = vunpack.c.l.b16 %v3221
    %v3237 = vunpack.c.l.b16 %v3222
    %v3238 = vpack.c.b16 %v3235, %v3234
    %v3239 = vpack.c.b16 %v3237, %v3236
    %v3243 = vsel %vm170, %v3215, 0
    %v3246 = vsel %vm170, %v3216, 0
    %v3249 = vsel %vm170, %v3217, 0
    %v3252 = vsel %vm170, %v3218, 0
    %3254 = vmatprep.subr.bf16.mxu0 0
    %3255 = vmatpush1.bf16.msra.mxu0 %v3238
    %3256 = vmatprep.subr.bf16.mxu0 0
    %3257 = vmatpush1.bf16.msra.mxu0 %v3239
    %3258 = vmatprep.subr.bf16.mxu0 0
    %3259 = vmatpush1.bf16.msra.mxu0 0
    %3260 = vmatprep.subr.bf16.mxu0 0
    %3261 = vmatpush1.bf16.msra.mxu0 0
    %3262 = vmatprep.subr.bf16.mxu0 0
    %3263 = vmatpush1.bf16.msra.mxu0 0
    %3264 = vmatprep.subr.bf16.mxu0 0
    %3265 = vmatpush1.bf16.msra.mxu0 0
    %3266 = vmatprep.subr.bf16.mxu0 0
    %3267 = vmatpush1.bf16.msra.mxu0 0
    %3268 = vmatprep.subr.bf16.mxu0 0
    %3269 = vmatpush1.bf16.msra.mxu0 0
    %3270 = vmatprep.subr.bf16.mxu0 0
    %3271 = vmatpush1.bf16.msra.mxu0 0
    %3272 = vmatprep.subr.bf16.mxu0 0
    %3273 = vmatpush1.bf16.msra.mxu0 0
    %3274 = vmatprep.subr.bf16.mxu0 0
    %3275 = vmatpush1.bf16.msra.mxu0 0
    %3276 = vmatprep.subr.bf16.mxu0 0
    %3277 = vmatpush1.bf16.msra.mxu0 0
    %3278 = vmatprep.subr.bf16.mxu0 0
    %3279 = vmatpush1.bf16.msra.mxu0 0
    %3280 = vmatprep.subr.bf16.mxu0 0
    %3281 = vmatpush1.bf16.msra.mxu0 0
    %3282 = vmatprep.subr.bf16.mxu0 0
    %3283 = vmatpush1.bf16.msra.mxu0 0
    %3284 = vmatprep.subr.bf16.mxu0 0
    %3285 = vmatpush1.bf16.msra.mxu0 0
    %3286 = vmatprep.mubr.bf16.mxu0 0
    %3287 = vmatmul.mubr.bf16.gmra.mrb[0].mxu0 %v3243
    %v3288 = vpop.f32.mrb[0].mxu0
    %v3289 = vadd.f32 %v3228, %v3288
    %v3290 = vpop.f32.mrb[0].mxu0
    %v3291 = vpop.f32.mrb[0].mxu0
    %v3292 = vadd.f32 %v3228, %v3291
    %v3293 = vpop.f32.mrb[0].mxu0
    %3294 = vmatprep.mubr.bf16.mxu0 0
    %3295 = vmatmul.mubr.bf16.gmra.mrb[0].mxu0 %v3246
    %v3296 = vpop.f32.mrb[0].mxu0
    %v3297 = vadd.f32 %v3228, %v3296
    %v3298 = vpop.f32.mrb[0].mxu0
    %v3299 = vpop.f32.mrb[0].mxu0
    %v3300 = vadd.f32 %v3228, %v3299
    %v3301 = vpop.f32.mrb[0].mxu0
    %3302 = vmatprep.mubr.bf16.mxu0 0
    %3303 = vmatmul.mubr.bf16.gmra.mrb[0].mxu0 %v3249
    %v3304 = vpop.f32.mrb[0].mxu0
    %v3305 = vadd.f32 %v3228, %v3304
    %v3306 = vpop.f32.mrb[0].mxu0
    %v3307 = vpop.f32.mrb[0].mxu0
    %v3308 = vadd.f32 %v3228, %v3307
    %v3309 = vpop.f32.mrb[0].mxu0
    %3310 = vmatprep.mubr.bf16.mxu0 0
    %3311 = vmatmul.mubr.bf16.gmra.mrb[0].mxu0 %v3252
    %v3312 = vpop.f32.mrb[0].mxu0
    %v3313 = vadd.f32 %v3228, %v3312
    %v3314 = vpop.f32.mrb[0].mxu0
    %v3315 = vpop.f32.mrb[0].mxu0
    %v3316 = vadd.f32 %v3228, %v3315
    %v3317 = vpop.f32.mrb[0].mxu0
    %3318 = vdwg.mxu0
    %vm3319 = vcmask 130048
    %3320 = vst.msk [vmem:[%s11] sm:$0xff] %vm3319, %v3289
    %3321 = vst.msk [vmem:[%s11 + $0x8] sm:$0xff] %vm3319, %v3292
    %3322 = vst.msk [vmem:[%s11 + $0x10] sm:$0xff] %vm3319, %v3297
    %3323 = vst.msk [vmem:[%s11 + $0x18] sm:$0xff] %vm3319, %v3300
    %3324 = vst.msk [vmem:[%s11 + $0x20] sm:$0xff] %vm3319, %v3305
    %3325 = vst.msk [vmem:[%s11 + $0x28] sm:$0xff] %vm3319, %v3308
    %3326 = vst.msk [vmem:[%s11 + $0x30] sm:$0xff] %vm3319, %v3313
    %3327 = vst.msk [vmem:[%s11 + $0x38] sm:$0xff] %vm3319, %v3316
    // Predicated region
    $region70: #{twi_tts_forward.1} parent=1 // pred_check
      _
    $region71: #{twi_tts_forward.1} parent=1 // pred_check_branch
      %3329 = sbr.rel (0) target = $region73
    $region72: #{twi_tts_forward.1} parent=1 // pred_region
      _
    $region73: #{twi_tts_forward.1} parent=1 // pred_fallthru
      _
    // Predicated region
    $region74: #{twi_tts_forward.1} parent=1 // pred_check
      _
    $region75: #{twi_tts_forward.1} parent=1 // pred_check_branch
      %3331 = sbr.rel (0) target = $region77
    $region76: #{twi_tts_forward.1} parent=1 // pred_region
      _
    $region77: #{twi_tts_forward.1} parent=1 // pred_fallthru
      _
    %3332 = vsyncpa [#allocation4], 1
    %3333 = vsyncpa [#allocation6], 1
    %3334 = vsyncpa [#allocation9], 1
    %3335 = vsyncpa [#allocation12], 1

</llo_original>
